<compile_context>
chip_gen: v6e
topology: v6e:2x2x1
jax: 0.10.0
libtpu: 0.0.40
codegen_flags: <defaults>
</compile_context>

<pallas_src>
import math

import jax
import jax.numpy as jnp
from jax.experimental import pallas as pl
from jax.experimental.pallas import tpu as pltpu

LANE = 128
EPS = 1e-5
VMEM_LIMIT = 32 * 1024 * 1024


def _round_up(x, m=LANE):
    return (x + m - 1) // m * m


def _pick_tile(total, cap, step):
    """Largest multiple-of-`step` divisor of `total` that is <= cap."""
    assert total % step == 0, (total, step)
    best = step
    cand = step
    lim = min(total, max(cap, step))
    while cand <= lim:
        if total % cand == 0:
            best = cand
        cand += step
    return best


# ----------------------------------------------------------------------------
# Kernels
# ----------------------------------------------------------------------------
def _matmul_stats_kernel(x_ref, w_ref, y_ref, psum_ref, pssq_ref):
    """Pass 1: one MXU matmul per row tile (bf16 in, f32 accumulate) plus
    per-tile channel sum / sum-of-squares partials for the BatchNorm stats."""
    y = jnp.dot(x_ref[...], w_ref[...], preferred_element_type=jnp.float32)
    y_ref[...] = y
    psum_ref[0] = jnp.sum(y, axis=0, keepdims=True)
    pssq_ref[0] = jnp.sum(y * y, axis=0, keepdims=True)


def _bn_relu_kernel(y_ref, s_ref, b_ref, act_ref):
    """Pass 2: y * scale + shift, ReLU."""
    act_ref[...] = jnp.maximum(y_ref[...] * s_ref[...] + b_ref[...], 0.0)


def _bn_relu_pool_kernel(y_ref, s_ref, b_ref, act_ref, pool_ref):
    """Pass 2 with fused MaxPool2d(2, 2): writes the full-resolution activation
    and the pooled activation for the next level in one tiled sweep."""
    s = s_ref[...]
    b = b_ref[...]
    act_ref[...] = jnp.maximum(y_ref[...] * s + b, 0.0)

    TB, W, C = y_ref.shape
    # W pairs: strided sublane reads (even / odd columns).
    y_even = y_ref[:, pl.ds(0, W // 2, stride=2), :]
    y_odd = y_ref[:, pl.ds(1, W // 2, stride=2), :]
    p_even = jnp.maximum(y_even * s + b, 0.0)
    p_odd = jnp.maximum(y_odd * s + b, 0.0)
    wmax = jnp.maximum(p_even, p_odd)                       # (TB, W//2, C)
    # H pairs: rows live on the leading (un-tiled) axis -> free reshape + max.
    pool_ref[...] = jnp.max(wmax.reshape(TB // 2, 2, W // 2, C), axis=1)


# ----------------------------------------------------------------------------
# One ConvBlock (conv + train-mode BN + ReLU), optional fused 2x2 max-pool
# ----------------------------------------------------------------------------
def conv_bn_relu(x, w, gamma, beta, *, pool):
    """x: (N, H, W, Cx) f32 NHWC with Cx >= Cin (extra channels are zeros).
    w: (3, 3, Cin, Cout); gamma/beta: (Cout,).
    Returns (act, pooled): act (N, H, W, Cout_p), pooled (N, H//2, W//2, Cout_p)
    or None, with Cout_p = round_up(Cout, 128) (channel padding kept)."""
    N, H, W, _ = x.shape
    Cin, Cout = int(w.shape[2]), int(w.shape[3])
    Cop = _round_up(Cout)
    K = 9 * Cin
    Kp = _round_up(K)
    assert H % 2 == 0 and W % 2 == 0, "MaxPool2d(2,2) path assumes even H, W"

    # im2col in XLA: shifted-slice concat (taps kh-major, kw-minor), pad the
    # contraction dim once to a lane multiple, cast to bf16 for the MXU.
    xs = x[..., :Cin]
    xp = jnp.pad(xs, ((0, 0), (1, 1), (1, 1), (0, 0)))
    patches = jnp.concatenate(
        [xp[:, kh:kh + H, kw:kw + W, :] for kh in range(3) for kw in range(3)],
        axis=-1)                                            # (N, H, W, 9*Cin)
    patches = jnp.pad(patches, ((0, 0), (0, 0), (0, 0), (0, Kp - K)))
    patches = patches.reshape(N * H * W, Kp).astype(jnp.bfloat16)

    wk = jnp.pad(w.reshape(K, Cout), ((0, Kp - K), (0, Cop - Cout)))
    wk = wk.astype(jnp.bfloat16)                            # (Kp, Cop)

    cparams = pltpu.CompilerParams(
        dimension_semantics=("parallel",),                  # megacore-shardable
        vmem_limit_bytes=VMEM_LIMIT)

    # ----------------- pass 1: conv matmul + BN partial stats ---------------
    R = N * H * W
    TR = _pick_tile(R, cap=max(8, min(1024, R // 2)), step=8)
    G1 = R // TR
    y, psum, pssq = pl.pallas_call(
        _matmul_stats_kernel,
        grid=(G1,),
        in_specs=[
            pl.BlockSpec((TR, Kp), lambda i: (i, 0)),
            pl.BlockSpec((Kp, Cop), lambda i: (0, 0)),      # resident weights
        ],
        out_specs=(
            pl.BlockSpec((TR, Cop), lambda i: (i, 0)),
            pl.BlockSpec((1, 1, Cop), lambda i: (i, 0, 0)),
            pl.BlockSpec((1, 1, Cop), lambda i: (i, 0, 0)),
        ),
        out_shape=(
            jax.ShapeDtypeStruct((R, Cop), jnp.float32),
            jax.ShapeDtypeStruct((G1, 1, Cop), jnp.float32),
            jax.ShapeDtypeStruct((G1, 1, Cop), jnp.float32),
        ),
        compiler_params=cparams,
    )(patches, wk)

    # Fold batch statistics + gamma/beta into one per-channel scale/shift
    # (tiny (Cout_p,) math, done once in XLA).  Biased variance = E[x^2]-mean^2.
    cnt = float(R)
    mean = jnp.sum(psum, axis=(0, 1)) / cnt
    var = jnp.maximum(jnp.sum(pssq, axis=(0, 1)) / cnt - mean * mean, 0.0)
    g = jnp.pad(gamma, (0, Cop - Cout))
    b = jnp.pad(beta, (0, Cop - Cout))
    inv = jax.lax.rsqrt(var + EPS)
    scale = (g * inv).reshape(1, 1, Cop)
    shift = (b - mean * g * inv).reshape(1, 1, Cop)

    # ----------------- pass 2: affine + ReLU (+ fused 2x2 max-pool) ---------
    TB = _pick_tile(H, cap=256, step=2)                     # even, divides H
    G2 = (N * H) // TB
    y3 = y.reshape(N * H, W, Cop)
    in_specs = [
        pl.BlockSpec((TB, W, Cop), lambda i: (i, 0, 0)),
        pl.BlockSpec((1, 1, Cop), lambda i: (0, 0, 0)),
        pl.BlockSpec((1, 1, Cop), lambda i: (0, 0, 0)),
    ]
    if pool:
        act, pooled = pl.pallas_call(
            _bn_relu_pool_kernel,
            grid=(G2,),
            in_specs=in_specs,
            out_specs=(
                pl.BlockSpec((TB, W, Cop), lambda i: (i, 0, 0)),
                pl.BlockSpec((TB // 2, W // 2, Cop), lambda i: (i, 0, 0)),
            ),
            out_shape=(
                jax.ShapeDtypeStruct((N * H, W, Cop), jnp.float32),
                jax.ShapeDtypeStruct((N * H // 2, W // 2, Cop), jnp.float32),
            ),
            compiler_params=cparams,
        )(y3, scale, shift)
        return (act.reshape(N, H, W, Cop),
                pooled.reshape(N, H // 2, W // 2, Cop))

    act = pl.pallas_call(
        _bn_relu_kernel,
        grid=(G2,),
        in_specs=in_specs,
        out_specs=pl.BlockSpec((TB, W, Cop), lambda i: (i, 0, 0)),
        out_shape=jax.ShapeDtypeStruct((N * H, W, Cop), jnp.float32),
        compiler_params=cparams,
    )(y3, scale, shift)
    return act.reshape(N, H, W, Cop), None


def contract_block(x_nchw, params):
    """ContractBlock.forward: list of per-level pre-pool activations (NCHW)."""
    x = jnp.transpose(x_nchw, (0, 2, 3, 1))                 # NCHW -> NHWC
    outputs = []
    for p in params:
        a1, _ = conv_bn_relu(x, p["w1"], p["g1"], p["b1"], pool=False)
        a2, pooled = conv_bn_relu(a1, p["w2"], p["g2"], p["b2"], pool=True)
        cout = p["w2"].shape[-1]
        outputs.append(jnp.transpose(a2[..., :cout], (0, 3, 1, 2)))
        x = pooled                                          # stays channel-padded
    return outputs


# ----------------------------------------------------------------------------
# Deterministic parameter init (matches nn.Conv2d default bounds, bias=False,
# BN weight=1 / bias=0).
# TODO(synk): BatchNorm running_mean/running_var tracking (a training-time side
# effect) is not reproduced; the forward uses batch statistics as in train().
# ----------------------------------------------------------------------------
def init_params(key, input_dim, embed_dims):
    dims = [input_dim] + list(embed_dims)
    params = []
    for cin, cout in zip(dims[:-1], dims[1:]):
        key, k1, k2 = jax.random.split(key, 3)
        bnd1 = 1.0 / math.sqrt(cin * 9)
        bnd2 = 1.0 / math.sqrt(cout * 9)
        params.append(dict(
            w1=jax.random.uniform(k1, (3, 3, cin, cout), jnp.float32, -bnd1, bnd1),
            g1=jnp.ones((cout,), jnp.float32),
            b1=jnp.zeros((cout,), jnp.float32),
            w2=jax.random.uniform(k2, (3, 3, cout, cout), jnp.float32, -bnd2, bnd2),
            g2=jnp.ones((cout,), jnp.float32),
            b2=jnp.zeros((cout,), jnp.float32),
        ))
    return params


# ----------------------------------------------------------------------------
# Pure-JAX reference. round_bf16=True applies the same bf16 rounding to the
# matmul operands as the kernel's MXU path (f32 accumulation in both), giving
# an apples-to-apples tight check; round_bf16=False is the exact PyTorch f32
# semantics, checked with a looser tolerance (difference is only bf16 operand
# rounding).
# ----------------------------------------------------------------------------
def _ref_conv_bn_relu(x, w, g, b, round_bf16):
    if round_bf16:
        x = x.astype(jnp.bfloat16).astype(jnp.float32)
        w = w.astype(jnp.bfloat16).astype(jnp.float32)
    y = jax.lax.conv_general_dilated(
        x, w, window_strides=(1, 1), padding=((1, 1), (1, 1)),
        dimension_numbers=("NHWC", "HWIO", "NHWC"),
        precision=jax.lax.Precision.HIGHEST)
    mean = y.mean(axis=(0, 1, 2), keepdims=True)
    var = ((y - mean) ** 2).mean(axis=(0, 1, 2), keepdims=True)
    return jnp.maximum((y - mean) * jax.lax.rsqrt(var + EPS) * g + b, 0.0)


def _ref_maxpool(x):
    N, H, W, C = x.shape
    return x.reshape(N, H // 2, 2, W // 2, 2, C).max(axis=(2, 4))


def ref_contract_block(x_nchw, params, round_bf16):
    x = jnp.transpose(x_nchw, (0, 2, 3, 1))
    outs = []
    for p in params:
        x = _ref_conv_bn_relu(x, p["w1"], p["g1"], p["b1"], round_bf16)
        x = _ref_conv_bn_relu(x, p["w2"], p["g2"], p["b2"], round_bf16)
        outs.append(jnp.transpose(x, (0, 3, 1, 2)))
        x = _ref_maxpool(x)
    return outs


if __name__ == "__main__":
    input_dim = 4
    embed_dims = [8, 16]
    N, H, W = 2, 16, 16

    key = jax.random.PRNGKey(0)
    key, kx = jax.random.split(key)
    x = jax.random.normal(kx, (N, input_dim, H, W), jnp.float32)
    params = init_params(key, input_dim, embed_dims)

    outs = jax.jit(contract_block)(x, params)
    outs = [jax.block_until_ready(o) for o in outs]

    refs_bf16 = ref_contract_block(x, params, round_bf16=True)
    refs_f32 = ref_contract_block(x, params, round_bf16=False)
    for o, rb, rf in zip(outs, refs_bf16, refs_f32):
        assert o.shape == rb.shape, (o.shape, rb.shape)
        err_b = float(jnp.max(jnp.abs(o - rb)))
        err_f = float(jnp.max(jnp.abs(o - rf)))
        assert bool(jnp.allclose(o, rb, atol=1e-2, rtol=1e-2)), err_b
        assert bool(jnp.allclose(o, rf, atol=5e-2, rtol=5e-2)), err_f

    print("KERNEL_OK")
</pallas_src>

<mosaic_0001>
module attributes {stable_mosaic.version = 11 : i64} {
  func.func @_matmul_stats_kernel(%arg0: i32, %arg1: memref<256x128xbf16, #tpu.memory_space<vmem>>, %arg2: memref<128x128xbf16, #tpu.memory_space<vmem>>, %arg3: memref<256x128xf32, #tpu.memory_space<vmem>>, %arg4: memref<1x1x128xf32, #tpu.memory_space<vmem>>, %arg5: memref<1x1x128xf32, #tpu.memory_space<vmem>>) attributes {dimension_semantics = [#tpu.dimension_semantics<parallel>], iteration_bounds = array<i64: 2>, scalar_prefetch = 0 : i64, scratch_operands = 0 : i64, tpu.core_type = #tpu.core_type<tc>, window_params = [{transform_indices = @transform_0, window_bounds = array<i64: 256, 128>}, {pipeline_mode = #tpu.pipeline_mode<synchronous>, transform_indices = @transform_1, window_bounds = array<i64: 128, 128>}, {transform_indices = @transform_2, window_bounds = array<i64: 256, 128>}, {transform_indices = @transform_3, window_bounds = array<i64: 1, 1, 128>}, {transform_indices = @transform_4, window_bounds = array<i64: 1, 1, 128>}]} {
    %c0 = arith.constant 0 : index
    %c0_0 = arith.constant 0 : index
    %0 = vector.load %arg1[%c0, %c0_0] : memref<256x128xbf16, #tpu.memory_space<vmem>>, vector<256x128xbf16>
    %c0_1 = arith.constant 0 : index
    %c0_2 = arith.constant 0 : index
    %1 = vector.load %arg2[%c0_1, %c0_2] : memref<128x128xbf16, #tpu.memory_space<vmem>>, vector<128x128xbf16>
    %cst = arith.constant dense<0.000000e+00> : vector<256x128xf32>
    %2 = tpu.matmul %0, %1, %cst {dimension_numbers = #tpu.dot_dimension_numbers<[1], [0], [0], [1], [0, 0, 1, 1], [], []>} : vector<256x128xbf16>, vector<128x128xbf16>, vector<256x128xf32> -> vector<256x128xf32>
    %c0_3 = arith.constant 0 : index
    %c0_4 = arith.constant 0 : index
    %3 = vector.load %arg3[%c0_3, %c0_4] : memref<256x128xf32, #tpu.memory_space<vmem>>, vector<256x128xf32>
    tpu.vector_store %arg3[%c0_3, %c0_4], %2 {strides = array<i32>} : memref<256x128xf32, #tpu.memory_space<vmem>>, vector<256x128xf32>,
    %cst_5 = arith.constant dense<0.000000e+00> : vector<128xf32>
    %4 = vector.multi_reduction <add>, %2, %cst_5 [0] : vector<256x128xf32> to vector<128xf32>
    %5 = vector.shape_cast %4 : vector<128xf32> to vector<1x128xf32>
    %c0_6 = arith.constant 0 : index
    %c0_7 = arith.constant 0 : index
    %c0_8 = arith.constant 0 : index
    %6 = vector.load %arg4[%c0_6, %c0_7, %c0_8] : memref<1x1x128xf32, #tpu.memory_space<vmem>>, vector<1x1x128xf32>
    %7 = vector.shape_cast %6 : vector<1x1x128xf32> to vector<1x128xf32>
    %8 = vector.shape_cast %5 : vector<1x128xf32> to vector<1x1x128xf32>
    tpu.vector_store %arg4[%c0_6, %c0_7, %c0_8], %8 {strides = array<i32>} : memref<1x1x128xf32, #tpu.memory_space<vmem>>, vector<1x1x128xf32>,
    %9 = arith.mulf %2, %2 : vector<256x128xf32>
    %cst_9 = arith.constant dense<0.000000e+00> : vector<128xf32>
    %10 = vector.multi_reduction <add>, %9, %cst_9 [0] : vector<256x128xf32> to vector<128xf32>
    %11 = vector.shape_cast %10 : vector<128xf32> to vector<1x128xf32>
    %c0_10 = arith.constant 0 : index
    %c0_11 = arith.constant 0 : index
    %c0_12 = arith.constant 0 : index
    %12 = vector.load %arg5[%c0_10, %c0_11, %c0_12] : memref<1x1x128xf32, #tpu.memory_space<vmem>>, vector<1x1x128xf32>
    %13 = vector.shape_cast %12 : vector<1x1x128xf32> to vector<1x128xf32>
    %14 = vector.shape_cast %11 : vector<1x128xf32> to vector<1x1x128xf32>
    tpu.vector_store %arg5[%c0_10, %c0_11, %c0_12], %14 {strides = array<i32>} : memref<1x1x128xf32, #tpu.memory_space<vmem>>, vector<1x1x128xf32>,
    return
  }
  func.func @transform_0(%arg0: i32) -> (i32, i32) {
    %c0_i32 = arith.constant 0 : i32
    %c0_i32_0 = arith.constant 0 : i32
    return %arg0, %c0_i32 : i32, i32
  }
  func.func @transform_1(%arg0: i32) -> (i32, i32) {
    %c0_i32 = arith.constant 0 : i32
    %c0_i32_0 = arith.constant 0 : i32
    %c0_i32_1 = arith.constant 0 : i32
    return %c0_i32, %c0_i32_0 : i32, i32
  }
  func.func @transform_2(%arg0: i32) -> (i32, i32) {
    %c0_i32 = arith.constant 0 : i32
    %c0_i32_0 = arith.constant 0 : i32
    return %arg0, %c0_i32 : i32, i32
  }
  func.func @transform_3(%arg0: i32) -> (i32, i32, i32) {
    %c0_i32 = arith.constant 0 : i32
    %c0_i32_0 = arith.constant 0 : i32
    %c0_i32_1 = arith.constant 0 : i32
    return %arg0, %c0_i32, %c0_i32_0 : i32, i32, i32
  }
  func.func @transform_4(%arg0: i32) -> (i32, i32, i32) {
    %c0_i32 = arith.constant 0 : i32
    %c0_i32_0 = arith.constant 0 : i32
    %c0_i32_1 = arith.constant 0 : i32
    return %arg0, %c0_i32, %c0_i32_0 : i32, i32, i32
  }
}

module attributes {stable_mosaic.version = 11 : i64} {
  func.func @_bn_relu_kernel(%arg0: i32, %arg1: memref<16x16x128xf32, #tpu.memory_space<vmem>>, %arg2: memref<1x1x128xf32, #tpu.memory_space<vmem>>, %arg3: memref<1x1x128xf32, #tpu.memory_space<vmem>>, %arg4: memref<16x16x128xf32, #tpu.memory_space<vmem>>) attributes {dimension_semantics = [#tpu.dimension_semantics<parallel>], iteration_bounds = array<i64: 2>, scalar_prefetch = 0 : i64, scratch_operands = 0 : i64, tpu.core_type = #tpu.core_type<tc>, window_params = [{transform_indices = @transform_0, window_bounds = array<i64: 16, 16, 128>}, {pipeline_mode = #tpu.pipeline_mode<synchronous>, transform_indices = @transform_1, window_bounds = array<i64: 1, 1, 128>}, {pipeline_mode = #tpu.pipeline_mode<synchronous>, transform_indices = @transform_2, window_bounds = array<i64: 1, 1, 128>}, {transform_indices = @transform_3, window_bounds = array<i64: 16, 16, 128>}]} {
    %c0 = arith.constant 0 : index
    %c0_0 = arith.constant 0 : index
    %c0_1 = arith.constant 0 : index
    %0 = vector.load %arg1[%c0, %c0_0, %c0_1] : memref<16x16x128xf32, #tpu.memory_space<vmem>>, vector<16x16x128xf32>
    %c0_2 = arith.constant 0 : index
    %c0_3 = arith.constant 0 : index
    %c0_4 = arith.constant 0 : index
    %1 = vector.load %arg2[%c0_2, %c0_3, %c0_4] : memref<1x1x128xf32, #tpu.memory_space<vmem>>, vector<1x1x128xf32>
    %2 = vector.broadcast %1 : vector<1x1x128xf32> to vector<16x16x128xf32>
    %3 = arith.mulf %0, %2 : vector<16x16x128xf32>
    %c0_5 = arith.constant 0 : index
    %c0_6 = arith.constant 0 : index
    %c0_7 = arith.constant 0 : index
    %4 = vector.load %arg3[%c0_5, %c0_6, %c0_7] : memref<1x1x128xf32, #tpu.memory_space<vmem>>, vector<1x1x128xf32>
    %5 = vector.broadcast %4 : vector<1x1x128xf32> to vector<16x16x128xf32>
    %6 = arith.addf %3, %5 : vector<16x16x128xf32>
    %cst = arith.constant 0.000000e+00 : f32
    %7 = vector.broadcast %cst : f32 to vector<16x16x128xf32>
    %8 = arith.maximumf %6, %7 : vector<16x16x128xf32>
    %c0_8 = arith.constant 0 : index
    %c0_9 = arith.constant 0 : index
    %c0_10 = arith.constant 0 : index
    %9 = vector.load %arg4[%c0_8, %c0_9, %c0_10] : memref<16x16x128xf32, #tpu.memory_space<vmem>>, vector<16x16x128xf32>
    tpu.vector_store %arg4[%c0_8, %c0_9, %c0_10], %8 {strides = array<i32>} : memref<16x16x128xf32, #tpu.memory_space<vmem>>, vector<16x16x128xf32>,
    return
  }
  func.func @transform_0(%arg0: i32) -> (i32, i32, i32) {
    %c0_i32 = arith.constant 0 : i32
    %c0_i32_0 = arith.constant 0 : i32
    %c0_i32_1 = arith.constant 0 : i32
    return %arg0, %c0_i32, %c0_i32_0 : i32, i32, i32
  }
  func.func @transform_1(%arg0: i32) -> (i32, i32, i32) {
    %c0_i32 = arith.constant 0 : i32
    %c0_i32_0 = arith.constant 0 : i32
    %c0_i32_1 = arith.constant 0 : i32
    %c0_i32_2 = arith.constant 0 : i32
    return %c0_i32, %c0_i32_0, %c0_i32_1 : i32, i32, i32
  }
  func.func @transform_2(%arg0: i32) -> (i32, i32, i32) {
    %c0_i32 = arith.constant 0 : i32
    %c0_i32_0 = arith.constant 0 : i32
    %c0_i32_1 = arith.constant 0 : i32
    %c0_i32_2 = arith.constant 0 : i32
    return %c0_i32, %c0_i32_0, %c0_i32_1 : i32, i32, i32
  }
  func.func @transform_3(%arg0: i32) -> (i32, i32, i32) {
    %c0_i32 = arith.constant 0 : i32
    %c0_i32_0 = arith.constant 0 : i32
    %c0_i32_1 = arith.constant 0 : i32
    return %arg0, %c0_i32, %c0_i32_0 : i32, i32, i32
  }
}

module attributes {stable_mosaic.version = 11 : i64} {
  func.func @_bn_relu_pool_kernel(%arg0: i32, %arg1: memref<16x16x128xf32, #tpu.memory_space<vmem>>, %arg2: memref<1x1x128xf32, #tpu.memory_space<vmem>>, %arg3: memref<1x1x128xf32, #tpu.memory_space<vmem>>, %arg4: memref<16x16x128xf32, #tpu.memory_space<vmem>>, %arg5: memref<8x8x128xf32, #tpu.memory_space<vmem>>) attributes {dimension_semantics = [#tpu.dimension_semantics<parallel>], iteration_bounds = array<i64: 2>, scalar_prefetch = 0 : i64, scratch_operands = 0 : i64, tpu.core_type = #tpu.core_type<tc>, window_params = [{transform_indices = @transform_0, window_bounds = array<i64: 16, 16, 128>}, {pipeline_mode = #tpu.pipeline_mode<synchronous>, transform_indices = @transform_1, window_bounds = array<i64: 1, 1, 128>}, {pipeline_mode = #tpu.pipeline_mode<synchronous>, transform_indices = @transform_2, window_bounds = array<i64: 1, 1, 128>}, {transform_indices = @transform_3, window_bounds = array<i64: 16, 16, 128>}, {transform_indices = @transform_4, window_bounds = array<i64: 8, 8, 128>}]} {
    %c0 = arith.constant 0 : index
    %c0_0 = arith.constant 0 : index
    %c0_1 = arith.constant 0 : index
    %0 = vector.load %arg2[%c0, %c0_0, %c0_1] : memref<1x1x128xf32, #tpu.memory_space<vmem>>, vector<1x1x128xf32>
    %c0_2 = arith.constant 0 : index
    %c0_3 = arith.constant 0 : index
    %c0_4 = arith.constant 0 : index
    %1 = vector.load %arg3[%c0_2, %c0_3, %c0_4] : memref<1x1x128xf32, #tpu.memory_space<vmem>>, vector<1x1x128xf32>
    %c0_5 = arith.constant 0 : index
    %c0_6 = arith.constant 0 : index
    %c0_7 = arith.constant 0 : index
    %2 = vector.load %arg1[%c0_5, %c0_6, %c0_7] : memref<16x16x128xf32, #tpu.memory_space<vmem>>, vector<16x16x128xf32>
    %3 = vector.broadcast %0 : vector<1x1x128xf32> to vector<16x16x128xf32>
    %4 = arith.mulf %2, %3 : vector<16x16x128xf32>
    %5 = vector.broadcast %1 : vector<1x1x128xf32> to vector<16x16x128xf32>
    %6 = arith.addf %4, %5 : vector<16x16x128xf32>
    %cst = arith.constant 0.000000e+00 : f32
    %7 = vector.broadcast %cst : f32 to vector<16x16x128xf32>
    %8 = arith.maximumf %6, %7 : vector<16x16x128xf32>
    %c0_8 = arith.constant 0 : index
    %c0_9 = arith.constant 0 : index
    %c0_10 = arith.constant 0 : index
    %9 = vector.load %arg4[%c0_8, %c0_9, %c0_10] : memref<16x16x128xf32, #tpu.memory_space<vmem>>, vector<16x16x128xf32>
    tpu.vector_store %arg4[%c0_8, %c0_9, %c0_10], %8 {strides = array<i32>} : memref<16x16x128xf32, #tpu.memory_space<vmem>>, vector<16x16x128xf32>,
    %c0_11 = arith.constant 0 : index
    %c0_12 = arith.constant 0 : index
    %c0_13 = arith.constant 0 : index
    %10 = tpu.strided_load %arg1[%c0_11, %c0_12, %c0_13] {strides = array<i32: 1, 2, 1>} : memref<16x16x128xf32, #tpu.memory_space<vmem>>, vector<16x8x128xf32>
    %c0_14 = arith.constant 0 : index
    %c1 = arith.constant 1 : index
    %c0_15 = arith.constant 0 : index
    %11 = tpu.strided_load %arg1[%c0_14, %c1, %c0_15] {strides = array<i32: 1, 2, 1>} : memref<16x16x128xf32, #tpu.memory_space<vmem>>, vector<16x8x128xf32>
    %12 = vector.broadcast %0 : vector<1x1x128xf32> to vector<16x8x128xf32>
    %13 = arith.mulf %10, %12 : vector<16x8x128xf32>
    %14 = vector.broadcast %1 : vector<1x1x128xf32> to vector<16x8x128xf32>
    %15 = arith.addf %13, %14 : vector<16x8x128xf32>
    %cst_16 = arith.constant 0.000000e+00 : f32
    %16 = vector.broadcast %cst_16 : f32 to vector<16x8x128xf32>
    %17 = arith.maximumf %15, %16 : vector<16x8x128xf32>
    %18 = vector.broadcast %0 : vector<1x1x128xf32> to vector<16x8x128xf32>
    %19 = arith.mulf %11, %18 : vector<16x8x128xf32>
    %20 = vector.broadcast %1 : vector<1x1x128xf32> to vector<16x8x128xf32>
    %21 = arith.addf %19, %20 : vector<16x8x128xf32>
    %cst_17 = arith.constant 0.000000e+00 : f32
    %22 = vector.broadcast %cst_17 : f32 to vector<16x8x128xf32>
    %23 = arith.maximumf %21, %22 : vector<16x8x128xf32>
    %24 = arith.maximumf %17, %23 : vector<16x8x128xf32>
    %25 = vector.shape_cast %24 : vector<16x8x128xf32> to vector<8x2x8x128xf32>
    %cst_18 = arith.constant dense<0xFF800000> : vector<8x8x128xf32>
    %26 = vector.multi_reduction <maximumf>, %25, %cst_18 [1] : vector<8x2x8x128xf32> to vector<8x8x128xf32>
    %c0_19 = arith.constant 0 : index
    %c0_20 = arith.constant 0 : index
    %c0_21 = arith.constant 0 : index
    %27 = vector.load %arg5[%c0_19, %c0_20, %c0_21] : memref<8x8x128xf32, #tpu.memory_space<vmem>>, vector<8x8x128xf32>
    tpu.vector_store %arg5[%c0_19, %c0_20, %c0_21], %26 {strides = array<i32>} : memref<8x8x128xf32, #tpu.memory_space<vmem>>, vector<8x8x128xf32>,
    return
  }
  func.func @transform_0(%arg0: i32) -> (i32, i32, i32) {
    %c0_i32 = arith.constant 0 : i32
    %c0_i32_0 = arith.constant 0 : i32
    %c0_i32_1 = arith.constant 0 : i32
    return %arg0, %c0_i32, %c0_i32_0 : i32, i32, i32
  }
  func.func @transform_1(%arg0: i32) -> (i32, i32, i32) {
    %c0_i32 = arith.constant 0 : i32
    %c0_i32_0 = arith.constant 0 : i32
    %c0_i32_1 = arith.constant 0 : i32
    %c0_i32_2 = arith.constant 0 : i32
    return %c0_i32, %c0_i32_0, %c0_i32_1 : i32, i32, i32
  }
  func.func @transform_2(%arg0: i32) -> (i32, i32, i32) {
    %c0_i32 = arith.constant 0 : i32
    %c0_i32_0 = arith.constant 0 : i32
    %c0_i32_1 = arith.constant 0 : i32
    %c0_i32_2 = arith.constant 0 : i32
    return %c0_i32, %c0_i32_0, %c0_i32_1 : i32, i32, i32
  }
  func.func @transform_3(%arg0: i32) -> (i32, i32, i32) {
    %c0_i32 = arith.constant 0 : i32
    %c0_i32_0 = arith.constant 0 : i32
    %c0_i32_1 = arith.constant 0 : i32
    return %arg0, %c0_i32, %c0_i32_0 : i32, i32, i32
  }
  func.func @transform_4(%arg0: i32) -> (i32, i32, i32) {
    %c0_i32 = arith.constant 0 : i32
    %c0_i32_0 = arith.constant 0 : i32
    %c0_i32_1 = arith.constant 0 : i32
    return %arg0, %c0_i32, %c0_i32_0 : i32, i32, i32
  }
}

module attributes {stable_mosaic.version = 11 : i64} {
  func.func @_matmul_stats_kernel(%arg0: i32, %arg1: memref<64x128xbf16, #tpu.memory_space<vmem>>, %arg2: memref<128x128xbf16, #tpu.memory_space<vmem>>, %arg3: memref<64x128xf32, #tpu.memory_space<vmem>>, %arg4: memref<1x1x128xf32, #tpu.memory_space<vmem>>, %arg5: memref<1x1x128xf32, #tpu.memory_space<vmem>>) attributes {dimension_semantics = [#tpu.dimension_semantics<parallel>], iteration_bounds = array<i64: 2>, scalar_prefetch = 0 : i64, scratch_operands = 0 : i64, tpu.core_type = #tpu.core_type<tc>, window_params = [{transform_indices = @transform_0, window_bounds = array<i64: 64, 128>}, {pipeline_mode = #tpu.pipeline_mode<synchronous>, transform_indices = @transform_1, window_bounds = array<i64: 128, 128>}, {transform_indices = @transform_2, window_bounds = array<i64: 64, 128>}, {transform_indices = @transform_3, window_bounds = array<i64: 1, 1, 128>}, {transform_indices = @transform_4, window_bounds = array<i64: 1, 1, 128>}]} {
    %c0 = arith.constant 0 : index
    %c0_0 = arith.constant 0 : index
    %0 = vector.load %arg1[%c0, %c0_0] : memref<64x128xbf16, #tpu.memory_space<vmem>>, vector<64x128xbf16>
    %c0_1 = arith.constant 0 : index
    %c0_2 = arith.constant 0 : index
    %1 = vector.load %arg2[%c0_1, %c0_2] : memref<128x128xbf16, #tpu.memory_space<vmem>>, vector<128x128xbf16>
    %cst = arith.constant dense<0.000000e+00> : vector<64x128xf32>
    %2 = tpu.matmul %0, %1, %cst {dimension_numbers = #tpu.dot_dimension_numbers<[1], [0], [0], [1], [0, 0, 1, 1], [], []>} : vector<64x128xbf16>, vector<128x128xbf16>, vector<64x128xf32> -> vector<64x128xf32>
    %c0_3 = arith.constant 0 : index
    %c0_4 = arith.constant 0 : index
    %3 = vector.load %arg3[%c0_3, %c0_4] : memref<64x128xf32, #tpu.memory_space<vmem>>, vector<64x128xf32>
    tpu.vector_store %arg3[%c0_3, %c0_4], %2 {strides = array<i32>} : memref<64x128xf32, #tpu.memory_space<vmem>>, vector<64x128xf32>,
    %cst_5 = arith.constant dense<0.000000e+00> : vector<128xf32>
    %4 = vector.multi_reduction <add>, %2, %cst_5 [0] : vector<64x128xf32> to vector<128xf32>
    %5 = vector.shape_cast %4 : vector<128xf32> to vector<1x128xf32>
    %c0_6 = arith.constant 0 : index
    %c0_7 = arith.constant 0 : index
    %c0_8 = arith.constant 0 : index
    %6 = vector.load %arg4[%c0_6, %c0_7, %c0_8] : memref<1x1x128xf32, #tpu.memory_space<vmem>>, vector<1x1x128xf32>
    %7 = vector.shape_cast %6 : vector<1x1x128xf32> to vector<1x128xf32>
    %8 = vector.shape_cast %5 : vector<1x128xf32> to vector<1x1x128xf32>
    tpu.vector_store %arg4[%c0_6, %c0_7, %c0_8], %8 {strides = array<i32>} : memref<1x1x128xf32, #tpu.memory_space<vmem>>, vector<1x1x128xf32>,
    %9 = arith.mulf %2, %2 : vector<64x128xf32>
    %cst_9 = arith.constant dense<0.000000e+00> : vector<128xf32>
    %10 = vector.multi_reduction <add>, %9, %cst_9 [0] : vector<64x128xf32> to vector<128xf32>
    %11 = vector.shape_cast %10 : vector<128xf32> to vector<1x128xf32>
    %c0_10 = arith.constant 0 : index
    %c0_11 = arith.constant 0 : index
    %c0_12 = arith.constant 0 : index
    %12 = vector.load %arg5[%c0_10, %c0_11, %c0_12] : memref<1x1x128xf32, #tpu.memory_space<vmem>>, vector<1x1x128xf32>
    %13 = vector.shape_cast %12 : vector<1x1x128xf32> to vector<1x128xf32>
    %14 = vector.shape_cast %11 : vector<1x128xf32> to vector<1x1x128xf32>
    tpu.vector_store %arg5[%c0_10, %c0_11, %c0_12], %14 {strides = array<i32>} : memref<1x1x128xf32, #tpu.memory_space<vmem>>, vector<1x1x128xf32>,
    return
  }
  func.func @transform_0(%arg0: i32) -> (i32, i32) {
    %c0_i32 = arith.constant 0 : i32
    %c0_i32_0 = arith.constant 0 : i32
    return %arg0, %c0_i32 : i32, i32
  }
  func.func @transform_1(%arg0: i32) -> (i32, i32) {
    %c0_i32 = arith.constant 0 : i32
    %c0_i32_0 = arith.constant 0 : i32
    %c0_i32_1 = arith.constant 0 : i32
    return %c0_i32, %c0_i32_0 : i32, i32
  }
  func.func @transform_2(%arg0: i32) -> (i32, i32) {
    %c0_i32 = arith.constant 0 : i32
    %c0_i32_0 = arith.constant 0 : i32
    return %arg0, %c0_i32 : i32, i32
  }
  func.func @transform_3(%arg0: i32) -> (i32, i32, i32) {
    %c0_i32 = arith.constant 0 : i32
    %c0_i32_0 = arith.constant 0 : i32
    %c0_i32_1 = arith.constant 0 : i32
    return %arg0, %c0_i32, %c0_i32_0 : i32, i32, i32
  }
  func.func @transform_4(%arg0: i32) -> (i32, i32, i32) {
    %c0_i32 = arith.constant 0 : i32
    %c0_i32_0 = arith.constant 0 : i32
    %c0_i32_1 = arith.constant 0 : i32
    return %arg0, %c0_i32, %c0_i32_0 : i32, i32, i32
  }
}

module attributes {stable_mosaic.version = 11 : i64} {
  func.func @_bn_relu_kernel(%arg0: i32, %arg1: memref<8x8x128xf32, #tpu.memory_space<vmem>>, %arg2: memref<1x1x128xf32, #tpu.memory_space<vmem>>, %arg3: memref<1x1x128xf32, #tpu.memory_space<vmem>>, %arg4: memref<8x8x128xf32, #tpu.memory_space<vmem>>) attributes {dimension_semantics = [#tpu.dimension_semantics<parallel>], iteration_bounds = array<i64: 2>, scalar_prefetch = 0 : i64, scratch_operands = 0 : i64, tpu.core_type = #tpu.core_type<tc>, window_params = [{transform_indices = @transform_0, window_bounds = array<i64: 8, 8, 128>}, {pipeline_mode = #tpu.pipeline_mode<synchronous>, transform_indices = @transform_1, window_bounds = array<i64: 1, 1, 128>}, {pipeline_mode = #tpu.pipeline_mode<synchronous>, transform_indices = @transform_2, window_bounds = array<i64: 1, 1, 128>}, {transform_indices = @transform_3, window_bounds = array<i64: 8, 8, 128>}]} {
    %c0 = arith.constant 0 : index
    %c0_0 = arith.constant 0 : index
    %c0_1 = arith.constant 0 : index
    %0 = vector.load %arg1[%c0, %c0_0, %c0_1] : memref<8x8x128xf32, #tpu.memory_space<vmem>>, vector<8x8x128xf32>
    %c0_2 = arith.constant 0 : index
    %c0_3 = arith.constant 0 : index
    %c0_4 = arith.constant 0 : index
    %1 = vector.load %arg2[%c0_2, %c0_3, %c0_4] : memref<1x1x128xf32, #tpu.memory_space<vmem>>, vector<1x1x128xf32>
    %2 = vector.broadcast %1 : vector<1x1x128xf32> to vector<8x8x128xf32>
    %3 = arith.mulf %0, %2 : vector<8x8x128xf32>
    %c0_5 = arith.constant 0 : index
    %c0_6 = arith.constant 0 : index
    %c0_7 = arith.constant 0 : index
    %4 = vector.load %arg3[%c0_5, %c0_6, %c0_7] : memref<1x1x128xf32, #tpu.memory_space<vmem>>, vector<1x1x128xf32>
    %5 = vector.broadcast %4 : vector<1x1x128xf32> to vector<8x8x128xf32>
    %6 = arith.addf %3, %5 : vector<8x8x128xf32>
    %cst = arith.constant 0.000000e+00 : f32
    %7 = vector.broadcast %cst : f32 to vector<8x8x128xf32>
    %8 = arith.maximumf %6, %7 : vector<8x8x128xf32>
    %c0_8 = arith.constant 0 : index
    %c0_9 = arith.constant 0 : index
    %c0_10 = arith.constant 0 : index
    %9 = vector.load %arg4[%c0_8, %c0_9, %c0_10] : memref<8x8x128xf32, #tpu.memory_space<vmem>>, vector<8x8x128xf32>
    tpu.vector_store %arg4[%c0_8, %c0_9, %c0_10], %8 {strides = array<i32>} : memref<8x8x128xf32, #tpu.memory_space<vmem>>, vector<8x8x128xf32>,
    return
  }
  func.func @transform_0(%arg0: i32) -> (i32, i32, i32) {
    %c0_i32 = arith.constant 0 : i32
    %c0_i32_0 = arith.constant 0 : i32
    %c0_i32_1 = arith.constant 0 : i32
    return %arg0, %c0_i32, %c0_i32_0 : i32, i32, i32
  }
  func.func @transform_1(%arg0: i32) -> (i32, i32, i32) {
    %c0_i32 = arith.constant 0 : i32
    %c0_i32_0 = arith.constant 0 : i32
    %c0_i32_1 = arith.constant 0 : i32
    %c0_i32_2 = arith.constant 0 : i32
    return %c0_i32, %c0_i32_0, %c0_i32_1 : i32, i32, i32
  }
  func.func @transform_2(%arg0: i32) -> (i32, i32, i32) {
    %c0_i32 = arith.constant 0 : i32
    %c0_i32_0 = arith.constant 0 : i32
    %c0_i32_1 = arith.constant 0 : i32
    %c0_i32_2 = arith.constant 0 : i32
    return %c0_i32, %c0_i32_0, %c0_i32_1 : i32, i32, i32
  }
  func.func @transform_3(%arg0: i32) -> (i32, i32, i32) {
    %c0_i32 = arith.constant 0 : i32
    %c0_i32_0 = arith.constant 0 : i32
    %c0_i32_1 = arith.constant 0 : i32
    return %arg0, %c0_i32, %c0_i32_0 : i32, i32, i32
  }
}

module attributes {stable_mosaic.version = 11 : i64} {
  func.func @_matmul_stats_kernel(%arg0: i32, %arg1: memref<64x256xbf16, #tpu.memory_space<vmem>>, %arg2: memref<256x128xbf16, #tpu.memory_space<vmem>>, %arg3: memref<64x128xf32, #tpu.memory_space<vmem>>, %arg4: memref<1x1x128xf32, #tpu.memory_space<vmem>>, %arg5: memref<1x1x128xf32, #tpu.memory_space<vmem>>) attributes {dimension_semantics = [#tpu.dimension_semantics<parallel>], iteration_bounds = array<i64: 2>, scalar_prefetch = 0 : i64, scratch_operands = 0 : i64, tpu.core_type = #tpu.core_type<tc>, window_params = [{transform_indices = @transform_0, window_bounds = array<i64: 64, 256>}, {pipeline_mode = #tpu.pipeline_mode<synchronous>, transform_indices = @transform_1, window_bounds = array<i64: 256, 128>}, {transform_indices = @transform_2, window_bounds = array<i64: 64, 128>}, {transform_indices = @transform_3, window_bounds = array<i64: 1, 1, 128>}, {transform_indices = @transform_4, window_bounds = array<i64: 1, 1, 128>}]} {
    %c0 = arith.constant 0 : index
    %c0_0 = arith.constant 0 : index
    %0 = vector.load %arg1[%c0, %c0_0] : memref<64x256xbf16, #tpu.memory_space<vmem>>, vector<64x256xbf16>
    %c0_1 = arith.constant 0 : index
    %c0_2 = arith.constant 0 : index
    %1 = vector.load %arg2[%c0_1, %c0_2] : memref<256x128xbf16, #tpu.memory_space<vmem>>, vector<256x128xbf16>
    %cst = arith.constant dense<0.000000e+00> : vector<64x128xf32>
    %2 = tpu.matmul %0, %1, %cst {dimension_numbers = #tpu.dot_dimension_numbers<[1], [0], [0], [1], [0, 0, 1, 1], [], []>} : vector<64x256xbf16>, vector<256x128xbf16>, vector<64x128xf32> -> vector<64x128xf32>
    %c0_3 = arith.constant 0 : index
    %c0_4 = arith.constant 0 : index
    %3 = vector.load %arg3[%c0_3, %c0_4] : memref<64x128xf32, #tpu.memory_space<vmem>>, vector<64x128xf32>
    tpu.vector_store %arg3[%c0_3, %c0_4], %2 {strides = array<i32>} : memref<64x128xf32, #tpu.memory_space<vmem>>, vector<64x128xf32>,
    %cst_5 = arith.constant dense<0.000000e+00> : vector<128xf32>
    %4 = vector.multi_reduction <add>, %2, %cst_5 [0] : vector<64x128xf32> to vector<128xf32>
    %5 = vector.shape_cast %4 : vector<128xf32> to vector<1x128xf32>
    %c0_6 = arith.constant 0 : index
    %c0_7 = arith.constant 0 : index
    %c0_8 = arith.constant 0 : index
    %6 = vector.load %arg4[%c0_6, %c0_7, %c0_8] : memref<1x1x128xf32, #tpu.memory_space<vmem>>, vector<1x1x128xf32>
    %7 = vector.shape_cast %6 : vector<1x1x128xf32> to vector<1x128xf32>
    %8 = vector.shape_cast %5 : vector<1x128xf32> to vector<1x1x128xf32>
    tpu.vector_store %arg4[%c0_6, %c0_7, %c0_8], %8 {strides = array<i32>} : memref<1x1x128xf32, #tpu.memory_space<vmem>>, vector<1x1x128xf32>,
    %9 = arith.mulf %2, %2 : vector<64x128xf32>
    %cst_9 = arith.constant dense<0.000000e+00> : vector<128xf32>
    %10 = vector.multi_reduction <add>, %9, %cst_9 [0] : vector<64x128xf32> to vector<128xf32>
    %11 = vector.shape_cast %10 : vector<128xf32> to vector<1x128xf32>
    %c0_10 = arith.constant 0 : index
    %c0_11 = arith.constant 0 : index
    %c0_12 = arith.constant 0 : index
    %12 = vector.load %arg5[%c0_10, %c0_11, %c0_12] : memref<1x1x128xf32, #tpu.memory_space<vmem>>, vector<1x1x128xf32>
    %13 = vector.shape_cast %12 : vector<1x1x128xf32> to vector<1x128xf32>
    %14 = vector.shape_cast %11 : vector<1x128xf32> to vector<1x1x128xf32>
    tpu.vector_store %arg5[%c0_10, %c0_11, %c0_12], %14 {strides = array<i32>} : memref<1x1x128xf32, #tpu.memory_space<vmem>>, vector<1x1x128xf32>,
    return
  }
  func.func @transform_0(%arg0: i32) -> (i32, i32) {
    %c0_i32 = arith.constant 0 : i32
    %c0_i32_0 = arith.constant 0 : i32
    return %arg0, %c0_i32 : i32, i32
  }
  func.func @transform_1(%arg0: i32) -> (i32, i32) {
    %c0_i32 = arith.constant 0 : i32
    %c0_i32_0 = arith.constant 0 : i32
    %c0_i32_1 = arith.constant 0 : i32
    return %c0_i32, %c0_i32_0 : i32, i32
  }
  func.func @transform_2(%arg0: i32) -> (i32, i32) {
    %c0_i32 = arith.constant 0 : i32
    %c0_i32_0 = arith.constant 0 : i32
    return %arg0, %c0_i32 : i32, i32
  }
  func.func @transform_3(%arg0: i32) -> (i32, i32, i32) {
    %c0_i32 = arith.constant 0 : i32
    %c0_i32_0 = arith.constant 0 : i32
    %c0_i32_1 = arith.constant 0 : i32
    return %arg0, %c0_i32, %c0_i32_0 : i32, i32, i32
  }
  func.func @transform_4(%arg0: i32) -> (i32, i32, i32) {
    %c0_i32 = arith.constant 0 : i32
    %c0_i32_0 = arith.constant 0 : i32
    %c0_i32_1 = arith.constant 0 : i32
    return %arg0, %c0_i32, %c0_i32_0 : i32, i32, i32
  }
}

module attributes {stable_mosaic.version = 11 : i64} {
  func.func @_bn_relu_pool_kernel(%arg0: i32, %arg1: memref<8x8x128xf32, #tpu.memory_space<vmem>>, %arg2: memref<1x1x128xf32, #tpu.memory_space<vmem>>, %arg3: memref<1x1x128xf32, #tpu.memory_space<vmem>>, %arg4: memref<8x8x128xf32, #tpu.memory_space<vmem>>, %arg5: memref<4x4x128xf32, #tpu.memory_space<vmem>>) attributes {dimension_semantics = [#tpu.dimension_semantics<parallel>], iteration_bounds = array<i64: 2>, scalar_prefetch = 0 : i64, scratch_operands = 0 : i64, tpu.core_type = #tpu.core_type<tc>, window_params = [{transform_indices = @transform_0, window_bounds = array<i64: 8, 8, 128>}, {pipeline_mode = #tpu.pipeline_mode<synchronous>, transform_indices = @transform_1, window_bounds = array<i64: 1, 1, 128>}, {pipeline_mode = #tpu.pipeline_mode<synchronous>, transform_indices = @transform_2, window_bounds = array<i64: 1, 1, 128>}, {transform_indices = @transform_3, window_bounds = array<i64: 8, 8, 128>}, {transform_indices = @transform_4, window_bounds = array<i64: 4, 4, 128>}]} {
    %c0 = arith.constant 0 : index
    %c0_0 = arith.constant 0 : index
    %c0_1 = arith.constant 0 : index
    %0 = vector.load %arg2[%c0, %c0_0, %c0_1] : memref<1x1x128xf32, #tpu.memory_space<vmem>>, vector<1x1x128xf32>
    %c0_2 = arith.constant 0 : index
    %c0_3 = arith.constant 0 : index
    %c0_4 = arith.constant 0 : index
    %1 = vector.load %arg3[%c0_2, %c0_3, %c0_4] : memref<1x1x128xf32, #tpu.memory_space<vmem>>, vector<1x1x128xf32>
    %c0_5 = arith.constant 0 : index
    %c0_6 = arith.constant 0 : index
    %c0_7 = arith.constant 0 : index
    %2 = vector.load %arg1[%c0_5, %c0_6, %c0_7] : memref<8x8x128xf32, #tpu.memory_space<vmem>>, vector<8x8x128xf32>
    %3 = vector.broadcast %0 : vector<1x1x128xf32> to vector<8x8x128xf32>
    %4 = arith.mulf %2, %3 : vector<8x8x128xf32>
    %5 = vector.broadcast %1 : vector<1x1x128xf32> to vector<8x8x128xf32>
    %6 = arith.addf %4, %5 : vector<8x8x128xf32>
    %cst = arith.constant 0.000000e+00 : f32
    %7 = vector.broadcast %cst : f32 to vector<8x8x128xf32>
    %8 = arith.maximumf %6, %7 : vector<8x8x128xf32>
    %c0_8 = arith.constant 0 : index
    %c0_9 = arith.constant 0 : index
    %c0_10 = arith.constant 0 : index
    %9 = vector.load %arg4[%c0_8, %c0_9, %c0_10] : memref<8x8x128xf32, #tpu.memory_space<vmem>>, vector<8x8x128xf32>
    tpu.vector_store %arg4[%c0_8, %c0_9, %c0_10], %8 {strides = array<i32>} : memref<8x8x128xf32, #tpu.memory_space<vmem>>, vector<8x8x128xf32>,
    %c0_11 = arith.constant 0 : index
    %c0_12 = arith.constant 0 : index
    %c0_13 = arith.constant 0 : index
    %10 = tpu.strided_load %arg1[%c0_11, %c0_12, %c0_13] {strides = array<i32: 1, 2, 1>} : memref<8x8x128xf32, #tpu.memory_space<vmem>>, vector<8x4x128xf32>
    %c0_14 = arith.constant 0 : index
    %c1 = arith.constant 1 : index
    %c0_15 = arith.constant 0 : index
    %11 = tpu.strided_load %arg1[%c0_14, %c1, %c0_15] {strides = array<i32: 1, 2, 1>} : memref<8x8x128xf32, #tpu.memory_space<vmem>>, vector<8x4x128xf32>
    %12 = vector.broadcast %0 : vector<1x1x128xf32> to vector<8x4x128xf32>
    %13 = arith.mulf %10, %12 : vector<8x4x128xf32>
    %14 = vector.broadcast %1 : vector<1x1x128xf32> to vector<8x4x128xf32>
    %15 = arith.addf %13, %14 : vector<8x4x128xf32>
    %cst_16 = arith.constant 0.000000e+00 : f32
    %16 = vector.broadcast %cst_16 : f32 to vector<8x4x128xf32>
    %17 = arith.maximumf %15, %16 : vector<8x4x128xf32>
    %18 = vector.broadcast %0 : vector<1x1x128xf32> to vector<8x4x128xf32>
    %19 = arith.mulf %11, %18 : vector<8x4x128xf32>
    %20 = vector.broadcast %1 : vector<1x1x128xf32> to vector<8x4x128xf32>
    %21 = arith.addf %19, %20 : vector<8x4x128xf32>
    %cst_17 = arith.constant 0.000000e+00 : f32
    %22 = vector.broadcast %cst_17 : f32 to vector<8x4x128xf32>
    %23 = arith.maximumf %21, %22 : vector<8x4x128xf32>
    %24 = arith.maximumf %17, %23 : vector<8x4x128xf32>
    %25 = vector.shape_cast %24 : vector<8x4x128xf32> to vector<4x2x4x128xf32>
    %cst_18 = arith.constant dense<0xFF800000> : vector<4x4x128xf32>
    %26 = vector.multi_reduction <maximumf>, %25, %cst_18 [1] : vector<4x2x4x128xf32> to vector<4x4x128xf32>
    %c0_19 = arith.constant 0 : index
    %c0_20 = arith.constant 0 : index
    %c0_21 = arith.constant 0 : index
    %27 = vector.load %arg5[%c0_19, %c0_20, %c0_21] : memref<4x4x128xf32, #tpu.memory_space<vmem>>, vector<4x4x128xf32>
    tpu.vector_store %arg5[%c0_19, %c0_20, %c0_21], %26 {strides = array<i32>} : memref<4x4x128xf32, #tpu.memory_space<vmem>>, vector<4x4x128xf32>,
    return
  }
  func.func @transform_0(%arg0: i32) -> (i32, i32, i32) {
    %c0_i32 = arith.constant 0 : i32
    %c0_i32_0 = arith.constant 0 : i32
    %c0_i32_1 = arith.constant 0 : i32
    return %arg0, %c0_i32, %c0_i32_0 : i32, i32, i32
  }
  func.func @transform_1(%arg0: i32) -> (i32, i32, i32) {
    %c0_i32 = arith.constant 0 : i32
    %c0_i32_0 = arith.constant 0 : i32
    %c0_i32_1 = arith.constant 0 : i32
    %c0_i32_2 = arith.constant 0 : i32
    return %c0_i32, %c0_i32_0, %c0_i32_1 : i32, i32, i32
  }
  func.func @transform_2(%arg0: i32) -> (i32, i32, i32) {
    %c0_i32 = arith.constant 0 : i32
    %c0_i32_0 = arith.constant 0 : i32
    %c0_i32_1 = arith.constant 0 : i32
    %c0_i32_2 = arith.constant 0 : i32
    return %c0_i32, %c0_i32_0, %c0_i32_1 : i32, i32, i32
  }
  func.func @transform_3(%arg0: i32) -> (i32, i32, i32) {
    %c0_i32 = arith.constant 0 : i32
    %c0_i32_0 = arith.constant 0 : i32
    %c0_i32_1 = arith.constant 0 : i32
    return %arg0, %c0_i32, %c0_i32_0 : i32, i32, i32
  }
  func.func @transform_4(%arg0: i32) -> (i32, i32, i32) {
    %c0_i32 = arith.constant 0 : i32
    %c0_i32_0 = arith.constant 0 : i32
    %c0_i32_1 = arith.constant 0 : i32
    return %arg0, %c0_i32, %c0_i32_0 : i32, i32, i32
  }
}

</mosaic_0001>

<llo_original>
// kernel: contract_block.9
$region0: #{contract_block.9}
  #allocation0 [shape = 'u32[]', space=smem, size = 0x4, offset = 0x4, fixed_abs, tag = 'smem constant byte address 0x4 - core index']
  #allocation1 [shape = 'u32[144,128]{1,0:T(1,128)}', space=vmem, size = 0x12000, scoped, tag = 'internal scratch']
  %s0 = inlined_call_operand.vmem [shape: f32[32,16,128], index: 0, kind: input, shape index: {}]
  %s1 = inlined_call_operand.vmem [shape: f32[1,1,128], index: 1, kind: input, shape index: {}]
  %s2 = inlined_call_operand.vmem [shape: f32[1,1,128], index: 2, kind: input, shape index: {}]
  %s3 = inlined_call_operand.vmem [shape: f32[32,16,128], index: 3, kind: output, shape index: {}]
  %s4 = sld [smem:[#allocation0]]
  $region45: #{contract_block.9} parent=0
    _
  %s6 = ssub.s32 1, %s4
  %s7 = scalar_select 0, %s6, %s4
  loop: start=0, step=1, limit=4
  $region2: #{contract_block.9} parent=0 // loop_pre_header
    _
  $region3: #{contract_block.9} parent=0 // loop_header
    %s9 = sphi 0, %s13
    %p10 = scmp.ge.s32.totalorder %s9, 4
    %s19 = sphi 0, %s21
    %s22 = sphi 0, %s19
    %s23 = sphi 0, %s22
    %s39 = sphi 0, %s23
    %s43 = sphi 0, %s43
    %s45 = sphi 0, %s43
    %s46 = sphi 0, %s45
    %s60 = sphi 0, %s46
    %s64 = sphi 0, %s64
    %s66 = sphi 0, %s64
    %s67 = sphi 0, %s66
    %s81 = sphi 0, %s67
    %s87 = sphi 0, %s89
    %s90 = sphi 0, %s87
    %s91 = sphi 0, %s90
    %s107 = sphi 0, %s91
  $region4: #{contract_block.9} parent=0 // loop_header_branch
    %12 = sbr.rel (%p10) target = $region8
  $region5: #{contract_block.9} parent=0 // loop_body
    %s14 = ssub.s32 %s9, 1
    %s15 = ssub.s32 %s9, 2
    %s16 = sadd.s32 %s9, 1
    %s17 = ssub.s32 %s9, %s16
    %p18 = scmp.eq.s32.totalorder %s17, 0
    %s20 = sadd.s32 %s19, 1
    %s21 = scalar_select %p18, %s19, %s20
    %p24 = pneg %p18
    %p25 = scmp.eq.s32.totalorder %s9, 1
    %p26 = por %p24, %p25
    %p27 = scmp.ne.s32.totalorder %s19, %s22
    %p28 = scmp.eq.s32.totalorder %s9, 0
    %p29 = por %p27, %p28
    %p30 = scmp.ne.s32.totalorder %s19, %s22
    %p31 = scmp.eq.s32.totalorder %s14, 1
    %p32 = por %p30, %p31
    %p33 = scmp.ne.s32.totalorder %s22, %s23
    %p34 = scmp.eq.s32.totalorder %s14, 0
    %p35 = por %p33, %p34
    %p36 = scmp.ne.s32.totalorder %s22, %s23
    %p37 = scmp.eq.s32.totalorder %s15, 1
    %p38 = por %p36, %p37
    %p40 = scmp.ne.s32.totalorder %s23, %s39
    %p41 = scmp.eq.s32.totalorder %s15, 0
    %p42 = por %p40, %p41
    %s44 = sadd.s32 %s43, 1
    %p47 = scmp.eq.s32.totalorder %s9, 1
    %p48 = scmp.ne.s32.totalorder %s43, %s45
    %p49 = scmp.eq.s32.totalorder %s9, 0
    %p50 = por %p48, %p49
    %p51 = scmp.ne.s32.totalorder %s43, %s45
    %p52 = scmp.eq.s32.totalorder %s14, 1
    %p53 = por %p51, %p52
    %p54 = scmp.ne.s32.totalorder %s45, %s46
    %p55 = scmp.eq.s32.totalorder %s14, 0
    %p56 = por %p54, %p55
    %p57 = scmp.ne.s32.totalorder %s45, %s46
    %p58 = scmp.eq.s32.totalorder %s15, 1
    %p59 = por %p57, %p58
    %p61 = scmp.ne.s32.totalorder %s46, %s60
    %p62 = scmp.eq.s32.totalorder %s15, 0
    %p63 = por %p61, %p62
    %s65 = sadd.s32 %s64, 1
    %p68 = scmp.eq.s32.totalorder %s9, 1
    %p69 = scmp.ne.s32.totalorder %s64, %s66
    %p70 = scmp.eq.s32.totalorder %s9, 0
    %p71 = por %p69, %p70
    %p72 = scmp.ne.s32.totalorder %s64, %s66
    %p73 = scmp.eq.s32.totalorder %s14, 1
    %p74 = por %p72, %p73
    %p75 = scmp.ne.s32.totalorder %s66, %s67
    %p76 = scmp.eq.s32.totalorder %s14, 0
    %p77 = por %p75, %p76
    %p78 = scmp.ne.s32.totalorder %s66, %s67
    %p79 = scmp.eq.s32.totalorder %s15, 1
    %p80 = por %p78, %p79
    %p82 = scmp.ne.s32.totalorder %s67, %s81
    %p83 = scmp.eq.s32.totalorder %s15, 0
    %p84 = por %p82, %p83
    %s85 = ssub.s32 %s9, %s16
    %p86 = scmp.eq.s32.totalorder %s85, 0
    %s88 = sadd.s32 %s87, 1
    %s89 = scalar_select %p86, %s87, %s88
    %p92 = pneg %p86
    %p93 = scmp.eq.s32.totalorder %s9, 1
    %p94 = por %p92, %p93
    %p95 = scmp.ne.s32.totalorder %s87, %s90
    %p96 = scmp.eq.s32.totalorder %s9, 0
    %p97 = por %p95, %p96
    %p98 = scmp.ne.s32.totalorder %s87, %s90
    %p99 = scmp.eq.s32.totalorder %s14, 1
    %p100 = por %p98, %p99
    %p101 = scmp.ne.s32.totalorder %s90, %s91
    %p102 = scmp.eq.s32.totalorder %s14, 0
    %p103 = por %p101, %p102
    %p104 = scmp.ne.s32.totalorder %s90, %s91
    %p105 = scmp.eq.s32.totalorder %s15, 1
    %p106 = por %p104, %p105
    %p108 = scmp.ne.s32.totalorder %s91, %s107
    %p109 = scmp.eq.s32.totalorder %s15, 0
    %p110 = por %p108, %p109
    %p111 = scmp.le.s32.totalorder 1, %s9
    %p112 = scmp.lt.s32.totalorder %s9, 3
    %p113 = pnand %p111, %p112
    %p114 = pneg %p113
    // Predicated region
    $region9: #{contract_block.9} parent=5 // pred_check
      _
    $region10: #{contract_block.9} parent=5 // pred_check_branch
      %116 = sbr.rel (%p113) target = $region12
    $region11: #{contract_block.9} parent=5 // pred_region
      %s117 = ssub.s32 %s9, 1
      // Predicated region
      $region13: #{contract_block.9} parent=11 // pred_check
        %p118 = pneg %p56
      $region14: #{contract_block.9} parent=11 // pred_check_branch
        %120 = sbr.rel (%p118) target = $region16
      $region15: #{contract_block.9} parent=11 // pred_region
        _
      $region16: #{contract_block.9} parent=11 // pred_fallthru
        _
      // Predicated region
      $region17: #{contract_block.9} parent=11 // pred_check
        %p121 = pneg %p77
      $region18: #{contract_block.9} parent=11 // pred_check_branch
        %123 = sbr.rel (%p121) target = $region20
      $region19: #{contract_block.9} parent=11 // pred_region
        _
      $region20: #{contract_block.9} parent=11 // pred_fallthru
        _
    $region12: #{contract_block.9} parent=5 // pred_fallthru
      _
    %p124 = scmp.lt.s32.totalorder %s9, 2
    // Predicated region
    $region21: #{contract_block.9} parent=5 // pred_check
      %p125 = pneg %p124
    $region22: #{contract_block.9} parent=5 // pred_check_branch
      %127 = sbr.rel (%p125) target = $region24
    $region23: #{contract_block.9} parent=5 // pred_region
      // Predicated region
      $region25: #{contract_block.9} parent=23 // pred_check
        %p128 = pneg %p29
      $region26: #{contract_block.9} parent=23 // pred_check_branch
        %130 = sbr.rel (%p128) target = $region28
      $region27: #{contract_block.9} parent=23 // pred_region
        %s131 = smul.u32 16, %s9
        %p132 = scmp.lt.s32.totalorder %s131, 31
        %s133 = scalar_select %p132, %s131, 31
        %s134 = smul.addr %s133, 2
        %s135 = smul.addr %s134, 8
        %s136 = scalar_lea.vmem %s0, %s135
        %s137 = smul.u32 16, %s9
      $region28: #{contract_block.9} parent=23 // pred_fallthru
        _
    $region24: #{contract_block.9} parent=5 // pred_fallthru
      _
    %p138 = scmp.le.s32.totalorder 1, %s9
    %p139 = scmp.lt.s32.totalorder %s9, 3
    %p140 = pnand %p138, %p139
    %p141 = pneg %p140
    // Predicated region
    $region29: #{contract_block.9} parent=5 // pred_check
      _
    $region30: #{contract_block.9} parent=5 // pred_check_branch
      %143 = sbr.rel (%p140) target = $region32
    $region31: #{contract_block.9} parent=5 // pred_region
      %s144 = ssub.s32 %s9, 1
      %s145 = smul.u32 16, %s14
      %p146 = scmp.lt.s32.totalorder %s145, 31
      %s147 = scalar_select %p146, %s145, 31
      %s148 = smul.addr %s147, 2
      %s149 = smul.addr %s148, 8
      %s150 = scalar_lea.vmem %s0, %s149
      %p151 = pneg %p35
      %p152 = pneg %p32
      %p153 = pneg %p56
      %p154 = pneg %p53
      %p155 = pneg %p77
      %p156 = pneg %p74
      %p157 = pneg %p103
      %p158 = pneg %p100
      %s159 = smul.u32 16, %s14
      %p160 = scmp.lt.s32.totalorder %s159, 31
      %s161 = scalar_select %p160, %s159, 31
      %s162 = smul.addr %s161, 2
      %s163 = smul.addr %s162, 8
      %s164 = scalar_lea.vmem %s3, %s163
      %s165 = smul.u32 16, %s14
      %p166 = scmp.lt.s32.totalorder %s165, 31
      %s167 = scalar_select %p166, %s165, 31
      %s168 = smul.addr %s167, 2
      %s169 = smul.addr %s168, 8
      %s170 = scalar_lea.vmem %s0, %s169
      %s171 = smul.u32 16, %s14
      %s172 = smul.u32 16, %s14
      %p173 = scmp.lt.s32.totalorder %s172, 31
      %s174 = scalar_select %p173, %s172, 31
      %s175 = smul.addr %s174, 2
      %s176 = smul.addr %s175, 8
      %s177 = scalar_lea.vmem %s3, %s176
      %s178 = smul.u32 16, %s14
      %v179 = vld [vmem:[%s170] sm:$0xff]
      %v180 = vld [vmem:[%s170 + $0x8] sm:$0xff]
      %v181 = vld [vmem:[%s170 + $0x10] sm:$0xff]
      %v182 = vld [vmem:[%s170 + $0x18] sm:$0xff]
      %v183 = vld [vmem:[%s170 + $0x20] sm:$0xff]
      %v184 = vld [vmem:[%s170 + $0x28] sm:$0xff]
      %v185 = vld [vmem:[%s170 + $0x30] sm:$0xff]
      %v186 = vld [vmem:[%s170 + $0x38] sm:$0xff]
      %v187 = vld [vmem:[%s170 + $0x40] sm:$0xff]
      %v188 = vld [vmem:[%s170 + $0x48] sm:$0xff]
      %v189 = vld [vmem:[%s170 + $0x50] sm:$0xff]
      %v190 = vld [vmem:[%s170 + $0x58] sm:$0xff]
      %v191 = vld [vmem:[%s170 + $0x60] sm:$0xff]
      %v192 = vld [vmem:[%s170 + $0x68] sm:$0xff]
      %v193 = vld [vmem:[%s170 + $0x70] sm:$0xff]
      %v194 = vld [vmem:[%s170 + $0x78] sm:$0xff]
      %v195 = vld [vmem:[%s170 + $0x80] sm:$0xff]
      %v196 = vld [vmem:[%s170 + $0x88] sm:$0xff]
      %v197 = vld [vmem:[%s170 + $0x90] sm:$0xff]
      %v198 = vld [vmem:[%s170 + $0x98] sm:$0xff]
      %v199 = vld [vmem:[%s170 + $0xa0] sm:$0xff]
      %v200 = vld [vmem:[%s170 + $0xa8] sm:$0xff]
      %v201 = vld [vmem:[%s170 + $0xb0] sm:$0xff]
      %v202 = vld [vmem:[%s170 + $0xb8] sm:$0xff]
      %v203 = vld [vmem:[%s170 + $0xc0] sm:$0xff]
      %v204 = vld [vmem:[%s170 + $0xc8] sm:$0xff]
      %v205 = vld [vmem:[%s170 + $0xd0] sm:$0xff]
      %v206 = vld [vmem:[%s170 + $0xd8] sm:$0xff]
      %v207 = vld [vmem:[%s170 + $0xe0] sm:$0xff]
      %v208 = vld [vmem:[%s170 + $0xe8] sm:$0xff]
      %v209 = vld [vmem:[%s170 + $0xf0] sm:$0xff]
      %v210 = vld [vmem:[%s170 + $0xf8] sm:$0xff]
      %v211 = vld [vmem:[%s1] sm:$0x1]
      %v213 = vlaneseq
      %v214 = vshrl.u32 %v213, 7
      %v215 = vsub.s32 0, %v214
      %v216 = vrot.slane %v211, %v215
      %v218 = vmul.f32 %v179, %v216
      %v219 = vmul.f32 %v180, %v216
      %v220 = vmul.f32 %v181, %v216
      %v221 = vmul.f32 %v182, %v216
      %v222 = vmul.f32 %v183, %v216
      %v223 = vmul.f32 %v184, %v216
      %v224 = vmul.f32 %v185, %v216
      %v225 = vmul.f32 %v186, %v216
      %v226 = vmul.f32 %v187, %v216
      %v227 = vmul.f32 %v188, %v216
      %v228 = vmul.f32 %v189, %v216
      %v229 = vmul.f32 %v190, %v216
      %v230 = vmul.f32 %v191, %v216
      %v231 = vmul.f32 %v192, %v216
      %v232 = vmul.f32 %v193, %v216
      %v233 = vmul.f32 %v194, %v216
      %v234 = vmul.f32 %v195, %v216
      %v235 = vmul.f32 %v196, %v216
      %v236 = vmul.f32 %v197, %v216
      %v237 = vmul.f32 %v198, %v216
      %v238 = vmul.f32 %v199, %v216
      %v239 = vmul.f32 %v200, %v216
      %v240 = vmul.f32 %v201, %v216
      %v241 = vmul.f32 %v202, %v216
      %v242 = vmul.f32 %v203, %v216
      %v243 = vmul.f32 %v204, %v216
      %v244 = vmul.f32 %v205, %v216
      %v245 = vmul.f32 %v206, %v216
      %v246 = vmul.f32 %v207, %v216
      %v247 = vmul.f32 %v208, %v216
      %v248 = vmul.f32 %v209, %v216
      %v249 = vmul.f32 %v210, %v216
      %v250 = vld [vmem:[%s2] sm:$0x1]
      %v252 = vlaneseq
      %v253 = vshrl.u32 %v252, 7
      %v254 = vsub.s32 0, %v253
      %v255 = vrot.slane %v250, %v254
      %v257 = vadd.f32 %v218, %v255
      %v258 = vadd.f32 %v219, %v255
      %v259 = vadd.f32 %v220, %v255
      %v260 = vadd.f32 %v221, %v255
      %v261 = vadd.f32 %v222, %v255
      %v262 = vadd.f32 %v223, %v255
      %v263 = vadd.f32 %v224, %v255
      %v264 = vadd.f32 %v225, %v255
      %v265 = vadd.f32 %v226, %v255
      %v266 = vadd.f32 %v227, %v255
      %v267 = vadd.f32 %v228, %v255
      %v268 = vadd.f32 %v229, %v255
      %v269 = vadd.f32 %v230, %v255
      %v270 = vadd.f32 %v231, %v255
      %v271 = vadd.f32 %v232, %v255
      %v272 = vadd.f32 %v233, %v255
      %v273 = vadd.f32 %v234, %v255
      %v274 = vadd.f32 %v235, %v255
      %v275 = vadd.f32 %v236, %v255
      %v276 = vadd.f32 %v237, %v255
      %v277 = vadd.f32 %v238, %v255
      %v278 = vadd.f32 %v239, %v255
      %v279 = vadd.f32 %v240, %v255
      %v280 = vadd.f32 %v241, %v255
      %v281 = vadd.f32 %v242, %v255
      %v282 = vadd.f32 %v243, %v255
      %v283 = vadd.f32 %v244, %v255
      %v284 = vadd.f32 %v245, %v255
      %v285 = vadd.f32 %v246, %v255
      %v286 = vadd.f32 %v247, %v255
      %v287 = vadd.f32 %v248, %v255
      %v288 = vadd.f32 %v249, %v255
      %v289 = vmax.f32 %v257, 0.0
      %v290 = vmax.f32 %v258, 0.0
      %v291 = vmax.f32 %v259, 0.0
      %v292 = vmax.f32 %v260, 0.0
      %v293 = vmax.f32 %v261, 0.0
      %v294 = vmax.f32 %v262, 0.0
      %v295 = vmax.f32 %v263, 0.0
      %v296 = vmax.f32 %v264, 0.0
      %v297 = vmax.f32 %v265, 0.0
      %v298 = vmax.f32 %v266, 0.0
      %v299 = vmax.f32 %v267, 0.0
      %v300 = vmax.f32 %v268, 0.0
      %v301 = vmax.f32 %v269, 0.0
      %v302 = vmax.f32 %v270, 0.0
      %v303 = vmax.f32 %v271, 0.0
      %v304 = vmax.f32 %v272, 0.0
      %v305 = vmax.f32 %v273, 0.0
      %v306 = vmax.f32 %v274, 0.0
      %v307 = vmax.f32 %v275, 0.0
      %v308 = vmax.f32 %v276, 0.0
      %v309 = vmax.f32 %v277, 0.0
      %v310 = vmax.f32 %v278, 0.0
      %v311 = vmax.f32 %v279, 0.0
      %v312 = vmax.f32 %v280, 0.0
      %v313 = vmax.f32 %v281, 0.0
      %v314 = vmax.f32 %v282, 0.0
      %v315 = vmax.f32 %v283, 0.0
      %v316 = vmax.f32 %v284, 0.0
      %v317 = vmax.f32 %v285, 0.0
      %v318 = vmax.f32 %v286, 0.0
      %v319 = vmax.f32 %v287, 0.0
      %v320 = vmax.f32 %v288, 0.0
      %321 = vst [vmem:[%s177] sm:$0xff] %v289
      %322 = vst [vmem:[%s177 + $0x8] sm:$0xff] %v290
      %323 = vst [vmem:[%s177 + $0x10] sm:$0xff] %v291
      %324 = vst [vmem:[%s177 + $0x18] sm:$0xff] %v292
      %325 = vst [vmem:[%s177 + $0x20] sm:$0xff] %v293
      %326 = vst [vmem:[%s177 + $0x28] sm:$0xff] %v294
      %327 = vst [vmem:[%s177 + $0x30] sm:$0xff] %v295
      %328 = vst [vmem:[%s177 + $0x38] sm:$0xff] %v296
      %329 = vst [vmem:[%s177 + $0x40] sm:$0xff] %v297
      %330 = vst [vmem:[%s177 + $0x48] sm:$0xff] %v298
      %331 = vst [vmem:[%s177 + $0x50] sm:$0xff] %v299
      %332 = vst [vmem:[%s177 + $0x58] sm:$0xff] %v300
      %333 = vst [vmem:[%s177 + $0x60] sm:$0xff] %v301
      %334 = vst [vmem:[%s177 + $0x68] sm:$0xff] %v302
      %335 = vst [vmem:[%s177 + $0x70] sm:$0xff] %v303
      %336 = vst [vmem:[%s177 + $0x78] sm:$0xff] %v304
      %337 = vst [vmem:[%s177 + $0x80] sm:$0xff] %v305
      %338 = vst [vmem:[%s177 + $0x88] sm:$0xff] %v306
      %339 = vst [vmem:[%s177 + $0x90] sm:$0xff] %v307
      %340 = vst [vmem:[%s177 + $0x98] sm:$0xff] %v308
      %341 = vst [vmem:[%s177 + $0xa0] sm:$0xff] %v309
      %342 = vst [vmem:[%s177 + $0xa8] sm:$0xff] %v310
      %343 = vst [vmem:[%s177 + $0xb0] sm:$0xff] %v311
      %344 = vst [vmem:[%s177 + $0xb8] sm:$0xff] %v312
      %345 = vst [vmem:[%s177 + $0xc0] sm:$0xff] %v313
      %346 = vst [vmem:[%s177 + $0xc8] sm:$0xff] %v314
      %347 = vst [vmem:[%s177 + $0xd0] sm:$0xff] %v315
      %348 = vst [vmem:[%s177 + $0xd8] sm:$0xff] %v316
      %349 = vst [vmem:[%s177 + $0xe0] sm:$0xff] %v317
      %350 = vst [vmem:[%s177 + $0xe8] sm:$0xff] %v318
      %351 = vst [vmem:[%s177 + $0xf0] sm:$0xff] %v319
      %352 = vst [vmem:[%s177 + $0xf8] sm:$0xff] %v320
      %s353 = smul.u32 16, %s14
      %p354 = scmp.lt.s32.totalorder %s353, 31
      %s355 = scalar_select %p354, %s353, 31
      %s356 = smul.addr %s355, 2
      %s357 = smul.addr %s356, 8
      %s358 = scalar_lea.vmem %s3, %s357
      // Predicated region
      $region33: #{contract_block.9} parent=31 // pred_check
        %p359 = pneg %p100
      $region34: #{contract_block.9} parent=31 // pred_check_branch
        %361 = sbr.rel (%p359) target = $region36
      $region35: #{contract_block.9} parent=31 // pred_region
        %s362 = smul.u32 16, %s14
      $region36: #{contract_block.9} parent=31 // pred_fallthru
        _
    $region32: #{contract_block.9} parent=5 // pred_fallthru
      _
    %p363 = scmp.le.s32.totalorder 2, %s9
    // Predicated region
    $region37: #{contract_block.9} parent=5 // pred_check
      %p364 = pneg %p363
    $region38: #{contract_block.9} parent=5 // pred_check_branch
      %366 = sbr.rel (%p364) target = $region40
    $region39: #{contract_block.9} parent=5 // pred_region
      %s367 = ssub.s32 %s9, 2
      // Predicated region
      $region41: #{contract_block.9} parent=39 // pred_check
        %p368 = pneg %p106
      $region42: #{contract_block.9} parent=39 // pred_check_branch
        %370 = sbr.rel (%p368) target = $region44
      $region43: #{contract_block.9} parent=39 // pred_region
        %s371 = smul.u32 16, %s15
        %p372 = scmp.lt.s32.totalorder %s371, 31
        %s373 = scalar_select %p372, %s371, 31
        %s374 = smul.addr %s373, 2
        %s375 = smul.addr %s374, 8
        %s376 = scalar_lea.vmem %s3, %s375
      $region44: #{contract_block.9} parent=39 // pred_fallthru
        _
    $region40: #{contract_block.9} parent=5 // pred_fallthru
      _
  $region6: #{contract_block.9} parent=0 // loop_footer
    %s13 = sadd.s32 1, %s9
  $region7: #{contract_block.9} parent=0 // loop_footer_branch
    %8 = sbr.rel target = $region3
  $region8: #{contract_block.9} parent=0 // loop_exit
    _

// kernel: contract_block.8
$region0: #{contract_block.8}
  #allocation0 [shape = 'u32[]', space=smem, size = 0x4, offset = 0x4, fixed_abs, tag = 'smem constant byte address 0x4 - core index']
  #allocation1 [shape = 'u32[144,128]{1,0:T(1,128)}', space=vmem, size = 0x12000, scoped, tag = 'internal scratch']
  %s0 = inlined_call_operand.vmem [shape: bf16[512,128], index: 0, kind: input, shape index: {}]
  %s1 = inlined_call_operand.vmem [shape: bf16[128,128], index: 1, kind: input, shape index: {}]
  %s2 = inlined_call_operand.vmem [shape: f32[512,128], index: 2, kind: output, shape index: {0}]
  %s3 = inlined_call_operand.vmem [shape: f32[2,1,128], index: 3, kind: output, shape index: {1}]
  %s4 = inlined_call_operand.vmem [shape: f32[2,1,128], index: 4, kind: output, shape index: {2}]
  %5 = xla_tuple %s2, %s3, %s4
  %s6 = sld [smem:[#allocation0]]
  $region57: #{contract_block.8} parent=0
    _
  %s8 = ssub.s32 1, %s6
  %s9 = scalar_select 0, %s8, %s6
  loop: start=0, step=1, limit=4
  $region2: #{contract_block.8} parent=0 // loop_pre_header
    _
  $region3: #{contract_block.8} parent=0 // loop_header
    %s11 = sphi 0, %s15
    %p12 = scmp.ge.s32.totalorder %s11, 4
    %s21 = sphi 0, %s23
    %s24 = sphi 0, %s21
    %s25 = sphi 0, %s24
    %s41 = sphi 0, %s25
    %s45 = sphi 0, %s45
    %s47 = sphi 0, %s45
    %s48 = sphi 0, %s47
    %s62 = sphi 0, %s48
    %s68 = sphi 0, %s70
    %s71 = sphi 0, %s68
    %s72 = sphi 0, %s71
    %s88 = sphi 0, %s72
    %s94 = sphi 0, %s96
    %s97 = sphi 0, %s94
    %s98 = sphi 0, %s97
    %s114 = sphi 0, %s98
    %s120 = sphi 0, %s122
    %s123 = sphi 0, %s120
    %s124 = sphi 0, %s123
    %s140 = sphi 0, %s124
  $region4: #{contract_block.8} parent=0 // loop_header_branch
    %14 = sbr.rel (%p12) target = $region8
  $region5: #{contract_block.8} parent=0 // loop_body
    %s16 = ssub.s32 %s11, 1
    %s17 = ssub.s32 %s11, 2
    %s18 = sadd.s32 %s11, 1
    %s19 = ssub.s32 %s11, %s18
    %p20 = scmp.eq.s32.totalorder %s19, 0
    %s22 = sadd.s32 %s21, 1
    %s23 = scalar_select %p20, %s21, %s22
    %p26 = pneg %p20
    %p27 = scmp.eq.s32.totalorder %s11, 1
    %p28 = por %p26, %p27
    %p29 = scmp.ne.s32.totalorder %s21, %s24
    %p30 = scmp.eq.s32.totalorder %s11, 0
    %p31 = por %p29, %p30
    %p32 = scmp.ne.s32.totalorder %s21, %s24
    %p33 = scmp.eq.s32.totalorder %s16, 1
    %p34 = por %p32, %p33
    %p35 = scmp.ne.s32.totalorder %s24, %s25
    %p36 = scmp.eq.s32.totalorder %s16, 0
    %p37 = por %p35, %p36
    %p38 = scmp.ne.s32.totalorder %s24, %s25
    %p39 = scmp.eq.s32.totalorder %s17, 1
    %p40 = por %p38, %p39
    %p42 = scmp.ne.s32.totalorder %s25, %s41
    %p43 = scmp.eq.s32.totalorder %s17, 0
    %p44 = por %p42, %p43
    %s46 = sadd.s32 %s45, 1
    %p49 = scmp.eq.s32.totalorder %s11, 1
    %p50 = scmp.ne.s32.totalorder %s45, %s47
    %p51 = scmp.eq.s32.totalorder %s11, 0
    %p52 = por %p50, %p51
    %p53 = scmp.ne.s32.totalorder %s45, %s47
    %p54 = scmp.eq.s32.totalorder %s16, 1
    %p55 = por %p53, %p54
    %p56 = scmp.ne.s32.totalorder %s47, %s48
    %p57 = scmp.eq.s32.totalorder %s16, 0
    %p58 = por %p56, %p57
    %p59 = scmp.ne.s32.totalorder %s47, %s48
    %p60 = scmp.eq.s32.totalorder %s17, 1
    %p61 = por %p59, %p60
    %p63 = scmp.ne.s32.totalorder %s48, %s62
    %p64 = scmp.eq.s32.totalorder %s17, 0
    %p65 = por %p63, %p64
    %s66 = ssub.s32 %s11, %s18
    %p67 = scmp.eq.s32.totalorder %s66, 0
    %s69 = sadd.s32 %s68, 1
    %s70 = scalar_select %p67, %s68, %s69
    %p73 = pneg %p67
    %p74 = scmp.eq.s32.totalorder %s11, 1
    %p75 = por %p73, %p74
    %p76 = scmp.ne.s32.totalorder %s68, %s71
    %p77 = scmp.eq.s32.totalorder %s11, 0
    %p78 = por %p76, %p77
    %p79 = scmp.ne.s32.totalorder %s68, %s71
    %p80 = scmp.eq.s32.totalorder %s16, 1
    %p81 = por %p79, %p80
    %p82 = scmp.ne.s32.totalorder %s71, %s72
    %p83 = scmp.eq.s32.totalorder %s16, 0
    %p84 = por %p82, %p83
    %p85 = scmp.ne.s32.totalorder %s71, %s72
    %p86 = scmp.eq.s32.totalorder %s17, 1
    %p87 = por %p85, %p86
    %p89 = scmp.ne.s32.totalorder %s72, %s88
    %p90 = scmp.eq.s32.totalorder %s17, 0
    %p91 = por %p89, %p90
    %s92 = ssub.s32 %s11, %s18
    %p93 = scmp.eq.s32.totalorder %s92, 0
    %s95 = sadd.s32 %s94, 1
    %s96 = scalar_select %p93, %s94, %s95
    %p99 = pneg %p93
    %p100 = scmp.eq.s32.totalorder %s11, 1
    %p101 = por %p99, %p100
    %p102 = scmp.ne.s32.totalorder %s94, %s97
    %p103 = scmp.eq.s32.totalorder %s11, 0
    %p104 = por %p102, %p103
    %p105 = scmp.ne.s32.totalorder %s94, %s97
    %p106 = scmp.eq.s32.totalorder %s16, 1
    %p107 = por %p105, %p106
    %p108 = scmp.ne.s32.totalorder %s97, %s98
    %p109 = scmp.eq.s32.totalorder %s16, 0
    %p110 = por %p108, %p109
    %p111 = scmp.ne.s32.totalorder %s97, %s98
    %p112 = scmp.eq.s32.totalorder %s17, 1
    %p113 = por %p111, %p112
    %p115 = scmp.ne.s32.totalorder %s98, %s114
    %p116 = scmp.eq.s32.totalorder %s17, 0
    %p117 = por %p115, %p116
    %s118 = ssub.s32 %s11, %s18
    %p119 = scmp.eq.s32.totalorder %s118, 0
    %s121 = sadd.s32 %s120, 1
    %s122 = scalar_select %p119, %s120, %s121
    %p125 = pneg %p119
    %p126 = scmp.eq.s32.totalorder %s11, 1
    %p127 = por %p125, %p126
    %p128 = scmp.ne.s32.totalorder %s120, %s123
    %p129 = scmp.eq.s32.totalorder %s11, 0
    %p130 = por %p128, %p129
    %p131 = scmp.ne.s32.totalorder %s120, %s123
    %p132 = scmp.eq.s32.totalorder %s16, 1
    %p133 = por %p131, %p132
    %p134 = scmp.ne.s32.totalorder %s123, %s124
    %p135 = scmp.eq.s32.totalorder %s16, 0
    %p136 = por %p134, %p135
    %p137 = scmp.ne.s32.totalorder %s123, %s124
    %p138 = scmp.eq.s32.totalorder %s17, 1
    %p139 = por %p137, %p138
    %p141 = scmp.ne.s32.totalorder %s124, %s140
    %p142 = scmp.eq.s32.totalorder %s17, 0
    %p143 = por %p141, %p142
    %p144 = scmp.le.s32.totalorder 1, %s11
    %p145 = scmp.lt.s32.totalorder %s11, 3
    %p146 = pnand %p144, %p145
    %p147 = pneg %p146
    // Predicated region
    $region9: #{contract_block.8} parent=5 // pred_check
      _
    $region10: #{contract_block.8} parent=5 // pred_check_branch
      %149 = sbr.rel (%p146) target = $region12
    $region11: #{contract_block.8} parent=5 // pred_region
      %s150 = ssub.s32 %s11, 1
      // Predicated region
      $region13: #{contract_block.8} parent=11 // pred_check
        %p151 = pneg %p58
      $region14: #{contract_block.8} parent=11 // pred_check_branch
        %153 = sbr.rel (%p151) target = $region16
      $region15: #{contract_block.8} parent=11 // pred_region
        _
      $region16: #{contract_block.8} parent=11 // pred_fallthru
        _
    $region12: #{contract_block.8} parent=5 // pred_fallthru
      _
    %p154 = scmp.lt.s32.totalorder %s11, 2
    // Predicated region
    $region17: #{contract_block.8} parent=5 // pred_check
      %p155 = pneg %p154
    $region18: #{contract_block.8} parent=5 // pred_check_branch
      %157 = sbr.rel (%p155) target = $region20
    $region19: #{contract_block.8} parent=5 // pred_region
      // Predicated region
      $region21: #{contract_block.8} parent=19 // pred_check
        %p158 = pneg %p31
      $region22: #{contract_block.8} parent=19 // pred_check_branch
        %160 = sbr.rel (%p158) target = $region24
      $region23: #{contract_block.8} parent=19 // pred_region
        %s161 = smul.u32 32, %s11
        %p162 = scmp.lt.s32.totalorder %s161, 63
        %s163 = scalar_select %p162, %s161, 63
        %s164 = smul.addr %s163, 4
        %s165 = scalar_lea.vmem %s0, %s164
        %s166 = smul.u32 32, %s11
      $region24: #{contract_block.8} parent=19 // pred_fallthru
        _
    $region20: #{contract_block.8} parent=5 // pred_fallthru
      _
    %p167 = scmp.le.s32.totalorder 1, %s11
    %p168 = scmp.lt.s32.totalorder %s11, 3
    %p169 = pnand %p167, %p168
    %p170 = pneg %p169
    // Predicated region
    $region25: #{contract_block.8} parent=5 // pred_check
      _
    $region26: #{contract_block.8} parent=5 // pred_check_branch
      %172 = sbr.rel (%p169) target = $region28
    $region27: #{contract_block.8} parent=5 // pred_region
      %s173 = ssub.s32 %s11, 1
      %s174 = smul.u32 32, %s16
      %p175 = scmp.lt.s32.totalorder %s174, 63
      %s176 = scalar_select %p175, %s174, 63
      %s177 = smul.addr %s176, 4
      %s178 = scalar_lea.vmem %s0, %s177
      %p179 = pneg %p37
      %p180 = pneg %p34
      %p181 = pneg %p58
      %p182 = pneg %p55
      %p183 = pneg %p84
      %p184 = pneg %p81
      %s185 = smul.u32 32, %s16
      %p186 = scmp.lt.s32.totalorder %s185, 63
      %s187 = scalar_select %p186, %s185, 63
      %s188 = smul.addr %s187, 8
      %s189 = scalar_lea.vmem %s2, %s188
      %p190 = pneg %p110
      %p191 = pneg %p107
      %p192 = scmp.lt.s32.totalorder %s16, 1
      %s193 = scalar_select %p192, %s16, 1
      %s194 = scalar_lea.vmem %s3, %s193
      %p195 = pneg %p136
      %p196 = pneg %p133
      %p197 = scmp.lt.s32.totalorder %s16, 1
      %s198 = scalar_select %p197, %s16, 1
      %s199 = scalar_lea.vmem %s4, %s198
      %s200 = smul.u32 32, %s16
      %p201 = scmp.lt.s32.totalorder %s200, 63
      %s202 = scalar_select %p201, %s200, 63
      %s203 = smul.addr %s202, 4
      %s204 = scalar_lea.vmem %s0, %s203
      %s205 = smul.u32 32, %s16
      %s206 = smul.u32 32, %s16
      %p207 = scmp.lt.s32.totalorder %s206, 63
      %s208 = scalar_select %p207, %s206, 63
      %s209 = smul.addr %s208, 8
      %s210 = scalar_lea.vmem %s2, %s209
      %s211 = smul.u32 32, %s16
      %p212 = scmp.lt.s32.totalorder %s16, 1
      %s213 = scalar_select %p212, %s16, 1
      %s214 = scalar_lea.vmem %s3, %s213
      %p215 = scmp.lt.s32.totalorder %s16, 1
      %s216 = scalar_select %p215, %s16, 1
      %s217 = scalar_lea.vmem %s4, %s216
      %v219 = vld [vmem:[%s204] sm:$0xf]
      %v220 = vld [vmem:[%s204 + $0x4] sm:$0xf]
      %v221 = vld [vmem:[%s204 + $0x8] sm:$0xf]
      %v222 = vld [vmem:[%s204 + $0xc] sm:$0xf]
      %v223 = vld [vmem:[%s204 + $0x10] sm:$0xf]
      %v224 = vld [vmem:[%s204 + $0x14] sm:$0xf]
      %v225 = vld [vmem:[%s204 + $0x18] sm:$0xf]
      %v226 = vld [vmem:[%s204 + $0x1c] sm:$0xf]
      %v227 = vld [vmem:[%s204 + $0x20] sm:$0xf]
      %v228 = vld [vmem:[%s204 + $0x24] sm:$0xf]
      %v229 = vld [vmem:[%s204 + $0x28] sm:$0xf]
      %v230 = vld [vmem:[%s204 + $0x2c] sm:$0xf]
      %v231 = vld [vmem:[%s204 + $0x30] sm:$0xf]
      %v232 = vld [vmem:[%s204 + $0x34] sm:$0xf]
      %v233 = vld [vmem:[%s204 + $0x38] sm:$0xf]
      %v234 = vld [vmem:[%s204 + $0x3c] sm:$0xf]
      %v235 = vld [vmem:[%s204 + $0x40] sm:$0xf]
      %v236 = vld [vmem:[%s204 + $0x44] sm:$0xf]
      %v237 = vld [vmem:[%s204 + $0x48] sm:$0xf]
      %v238 = vld [vmem:[%s204 + $0x4c] sm:$0xf]
      %v239 = vld [vmem:[%s204 + $0x50] sm:$0xf]
      %v240 = vld [vmem:[%s204 + $0x54] sm:$0xf]
      %v241 = vld [vmem:[%s204 + $0x58] sm:$0xf]
      %v242 = vld [vmem:[%s204 + $0x5c] sm:$0xf]
      %v243 = vld [vmem:[%s204 + $0x60] sm:$0xf]
      %v244 = vld [vmem:[%s204 + $0x64] sm:$0xf]
      %v245 = vld [vmem:[%s204 + $0x68] sm:$0xf]
      %v246 = vld [vmem:[%s204 + $0x6c] sm:$0xf]
      %v247 = vld [vmem:[%s204 + $0x70] sm:$0xf]
      %v248 = vld [vmem:[%s204 + $0x74] sm:$0xf]
      %v249 = vld [vmem:[%s204 + $0x78] sm:$0xf]
      %v250 = vld [vmem:[%s204 + $0x7c] sm:$0xf]
      %v251 = vld [vmem:[%s1] sm:$0xf]
      %v252 = vld [vmem:[%s1 + $0x4] sm:$0xf]
      %v253 = vld [vmem:[%s1 + $0x8] sm:$0xf]
      %v254 = vld [vmem:[%s1 + $0xc] sm:$0xf]
      %v255 = vld [vmem:[%s1 + $0x10] sm:$0xf]
      %v256 = vld [vmem:[%s1 + $0x14] sm:$0xf]
      %v257 = vld [vmem:[%s1 + $0x18] sm:$0xf]
      %v258 = vld [vmem:[%s1 + $0x1c] sm:$0xf]
      %v259 = vld [vmem:[%s1 + $0x20] sm:$0xf]
      %v260 = vld [vmem:[%s1 + $0x24] sm:$0xf]
      %v261 = vld [vmem:[%s1 + $0x28] sm:$0xf]
      %v262 = vld [vmem:[%s1 + $0x2c] sm:$0xf]
      %v263 = vld [vmem:[%s1 + $0x30] sm:$0xf]
      %v264 = vld [vmem:[%s1 + $0x34] sm:$0xf]
      %v265 = vld [vmem:[%s1 + $0x38] sm:$0xf]
      %v266 = vld [vmem:[%s1 + $0x3c] sm:$0xf]
      %v299 = vunpack.c.l.b16 %v219
      %v300 = vunpack.c.l.b16 %v220
      %v301 = vunpack.c.l.b16 %v221
      %v302 = vunpack.c.l.b16 %v222
      %v303 = vunpack.c.l.b16 %v223
      %v304 = vunpack.c.l.b16 %v224
      %v305 = vunpack.c.l.b16 %v225
      %v306 = vunpack.c.l.b16 %v226
      %v307 = vunpack.c.l.b16 %v227
      %v308 = vunpack.c.l.b16 %v228
      %v309 = vunpack.c.l.b16 %v229
      %v310 = vunpack.c.l.b16 %v230
      %v311 = vunpack.c.l.b16 %v231
      %v312 = vunpack.c.l.b16 %v232
      %v313 = vunpack.c.l.b16 %v233
      %v314 = vunpack.c.l.b16 %v234
      %v315 = vunpack.c.l.b16 %v235
      %v316 = vunpack.c.l.b16 %v236
      %v317 = vunpack.c.l.b16 %v237
      %v318 = vunpack.c.l.b16 %v238
      %v319 = vunpack.c.l.b16 %v239
      %v320 = vunpack.c.l.b16 %v240
      %v321 = vunpack.c.l.b16 %v241
      %v322 = vunpack.c.l.b16 %v242
      %v323 = vunpack.c.l.b16 %v243
      %v324 = vunpack.c.l.b16 %v244
      %v325 = vunpack.c.l.b16 %v245
      %v326 = vunpack.c.l.b16 %v246
      %v327 = vunpack.c.l.b16 %v247
      %v328 = vunpack.c.l.b16 %v248
      %v329 = vunpack.c.l.b16 %v249
      %v330 = vunpack.c.l.b16 %v250
      %v331 = vpack.c.b16 %v300, %v299
      %v332 = vpack.c.b16 %v302, %v301
      %v333 = vpack.c.b16 %v304, %v303
      %v334 = vpack.c.b16 %v306, %v305
      %v335 = vpack.c.b16 %v308, %v307
      %v336 = vpack.c.b16 %v310, %v309
      %v337 = vpack.c.b16 %v312, %v311
      %v338 = vpack.c.b16 %v314, %v313
      %v339 = vpack.c.b16 %v316, %v315
      %v340 = vpack.c.b16 %v318, %v317
      %v341 = vpack.c.b16 %v320, %v319
      %v342 = vpack.c.b16 %v322, %v321
      %v343 = vpack.c.b16 %v324, %v323
      %v344 = vpack.c.b16 %v326, %v325
      %v345 = vpack.c.b16 %v328, %v327
      %v346 = vpack.c.b16 %v330, %v329
      %v379 = vunpack.c.l.b16 %v251
      %v380 = vunpack.c.l.b16 %v252
      %v381 = vunpack.c.l.b16 %v253
      %v382 = vunpack.c.l.b16 %v254
      %v383 = vunpack.c.l.b16 %v255
      %v384 = vunpack.c.l.b16 %v256
      %v385 = vunpack.c.l.b16 %v257
      %v386 = vunpack.c.l.b16 %v258
      %v387 = vunpack.c.l.b16 %v259
      %v388 = vunpack.c.l.b16 %v260
      %v389 = vunpack.c.l.b16 %v261
      %v390 = vunpack.c.l.b16 %v262
      %v391 = vunpack.c.l.b16 %v263
      %v392 = vunpack.c.l.b16 %v264
      %v393 = vunpack.c.l.b16 %v265
      %v394 = vunpack.c.l.b16 %v266
      %v395 = vpack.c.b16 %v380, %v379
      %v396 = vpack.c.b16 %v382, %v381
      %v397 = vpack.c.b16 %v384, %v383
      %v398 = vpack.c.b16 %v386, %v385
      %v399 = vpack.c.b16 %v388, %v387
      %v400 = vpack.c.b16 %v390, %v389
      %v401 = vpack.c.b16 %v392, %v391
      %v402 = vpack.c.b16 %v394, %v393
      %411 = vmatprep.subr.bf16.mxu0 0
      %412 = vmatpush1.bf16.msra.mxu0 %v402
      %413 = vmatprep.subr.bf16.mxu0 0
      %414 = vmatpush1.bf16.msra.mxu0 %v401
      %415 = vmatprep.subr.bf16.mxu0 0
      %416 = vmatpush1.bf16.msra.mxu0 %v400
      %417 = vmatprep.subr.bf16.mxu0 0
      %418 = vmatpush1.bf16.msra.mxu0 %v399
      %419 = vmatprep.subr.bf16.mxu0 0
      %420 = vmatpush1.bf16.msra.mxu0 %v398
      %421 = vmatprep.subr.bf16.mxu0 0
      %422 = vmatpush1.bf16.msra.mxu0 %v397
      %423 = vmatprep.subr.bf16.mxu0 0
      %424 = vmatpush1.bf16.msra.mxu0 %v396
      %425 = vmatprep.subr.bf16.mxu0 0
      %426 = vmatpush1.bf16.msra.mxu0 %v395
      %427 = vmatprep.subr.bf16.mxu0 0
      %428 = vmatpush2.bf16.msra.mxu0 0
      %429 = vmatprep.subr.bf16.mxu0 0
      %430 = vmatpush2.bf16.msra.mxu0 0
      %431 = vmatprep.subr.bf16.mxu0 0
      %432 = vmatpush2.bf16.msra.mxu0 0
      %433 = vmatprep.subr.bf16.mxu0 0
      %434 = vmatpush2.bf16.msra.mxu0 0
      %435 = vmatprep.subr.bf16.mxu0 0
      %436 = vmatpush2.bf16.msra.mxu0 0
      %437 = vmatprep.subr.bf16.mxu0 0
      %438 = vmatpush2.bf16.msra.mxu0 0
      %439 = vmatprep.subr.bf16.mxu0 0
      %440 = vmatpush2.bf16.msra.mxu0 0
      %441 = vmatprep.subr.bf16.mxu0 0
      %442 = vmatpush2.bf16.msra.mxu0 0
      %443 = vmatprep.mubr.bf16.mxu0 0
      %444 = vmatmul.mubr.bf16.gmra.mxu0 %v331
      %v445 = vpop.f32.mrf.mxu0
      %v446 = vadd.f32 0.0, %v445
      %v447 = vpop.f32.mrf.mxu0
      %v448 = vpop.f32.mrf.mxu0
      %v449 = vadd.f32 0.0, %v448
      %v450 = vpop.f32.mrf.mxu0
      %451 = vmatprep.mubr.bf16.mxu0 0
      %452 = vmatmul.mubr.bf16.gmra.mxu0 %v332
      %v453 = vpop.f32.mrf.mxu0
      %v454 = vadd.f32 0.0, %v453
      %v455 = vpop.f32.mrf.mxu0
      %v456 = vpop.f32.mrf.mxu0
      %v457 = vadd.f32 0.0, %v456
      %v458 = vpop.f32.mrf.mxu0
      %459 = vmatprep.mubr.bf16.mxu0 0
      %460 = vmatmul.mubr.bf16.gmra.mxu0 %v333
      %v461 = vpop.f32.mrf.mxu0
      %v462 = vadd.f32 0.0, %v461
      %v463 = vpop.f32.mrf.mxu0
      %v464 = vpop.f32.mrf.mxu0
      %v465 = vadd.f32 0.0, %v464
      %v466 = vpop.f32.mrf.mxu0
      %467 = vmatprep.mubr.bf16.mxu0 0
      %468 = vmatmul.mubr.bf16.gmra.mxu0 %v334
      %v469 = vpop.f32.mrf.mxu0
      %v470 = vadd.f32 0.0, %v469
      %v471 = vpop.f32.mrf.mxu0
      %v472 = vpop.f32.mrf.mxu0
      %v473 = vadd.f32 0.0, %v472
      %v474 = vpop.f32.mrf.mxu0
      %475 = vmatprep.mubr.bf16.mxu0 0
      %476 = vmatmul.mubr.bf16.gmra.mxu0 %v335
      %v477 = vpop.f32.mrf.mxu0
      %v478 = vadd.f32 0.0, %v477
      %v479 = vpop.f32.mrf.mxu0
      %v480 = vpop.f32.mrf.mxu0
      %v481 = vadd.f32 0.0, %v480
      %v482 = vpop.f32.mrf.mxu0
      %483 = vmatprep.mubr.bf16.mxu0 0
      %484 = vmatmul.mubr.bf16.gmra.mxu0 %v336
      %v485 = vpop.f32.mrf.mxu0
      %v486 = vadd.f32 0.0, %v485
      %v487 = vpop.f32.mrf.mxu0
      %v488 = vpop.f32.mrf.mxu0
      %v489 = vadd.f32 0.0, %v488
      %v490 = vpop.f32.mrf.mxu0
      %491 = vmatprep.mubr.bf16.mxu0 0
      %492 = vmatmul.mubr.bf16.gmra.mxu0 %v337
      %v493 = vpop.f32.mrf.mxu0
      %v494 = vadd.f32 0.0, %v493
      %v495 = vpop.f32.mrf.mxu0
      %v496 = vpop.f32.mrf.mxu0
      %v497 = vadd.f32 0.0, %v496
      %v498 = vpop.f32.mrf.mxu0
      %499 = vmatprep.mubr.bf16.mxu0 0
      %500 = vmatmul.mubr.bf16.gmra.mxu0 %v338
      %v501 = vpop.f32.mrf.mxu0
      %v502 = vadd.f32 0.0, %v501
      %v503 = vpop.f32.mrf.mxu0
      %v504 = vpop.f32.mrf.mxu0
      %v505 = vadd.f32 0.0, %v504
      %v506 = vpop.f32.mrf.mxu0
      %507 = vmatprep.mubr.bf16.mxu0 0
      %508 = vmatmul.mubr.bf16.gmra.mxu0 %v339
      %v509 = vpop.f32.mrf.mxu0
      %v510 = vadd.f32 0.0, %v509
      %v511 = vpop.f32.mrf.mxu0
      %v512 = vpop.f32.mrf.mxu0
      %v513 = vadd.f32 0.0, %v512
      %v514 = vpop.f32.mrf.mxu0
      %515 = vmatprep.mubr.bf16.mxu0 0
      %516 = vmatmul.mubr.bf16.gmra.mxu0 %v340
      %v517 = vpop.f32.mrf.mxu0
      %v518 = vadd.f32 0.0, %v517
      %v519 = vpop.f32.mrf.mxu0
      %v520 = vpop.f32.mrf.mxu0
      %v521 = vadd.f32 0.0, %v520
      %v522 = vpop.f32.mrf.mxu0
      %523 = vmatprep.mubr.bf16.mxu0 0
      %524 = vmatmul.mubr.bf16.gmra.mxu0 %v341
      %v525 = vpop.f32.mrf.mxu0
      %v526 = vadd.f32 0.0, %v525
      %v527 = vpop.f32.mrf.mxu0
      %v528 = vpop.f32.mrf.mxu0
      %v529 = vadd.f32 0.0, %v528
      %v530 = vpop.f32.mrf.mxu0
      %531 = vmatprep.mubr.bf16.mxu0 0
      %532 = vmatmul.mubr.bf16.gmra.mxu0 %v342
      %v533 = vpop.f32.mrf.mxu0
      %v534 = vadd.f32 0.0, %v533
      %v535 = vpop.f32.mrf.mxu0
      %v536 = vpop.f32.mrf.mxu0
      %v537 = vadd.f32 0.0, %v536
      %v538 = vpop.f32.mrf.mxu0
      %539 = vmatprep.mubr.bf16.mxu0 0
      %540 = vmatmul.mubr.bf16.gmra.mxu0 %v343
      %v541 = vpop.f32.mrf.mxu0
      %v542 = vadd.f32 0.0, %v541
      %v543 = vpop.f32.mrf.mxu0
      %v544 = vpop.f32.mrf.mxu0
      %v545 = vadd.f32 0.0, %v544
      %v546 = vpop.f32.mrf.mxu0
      %547 = vmatprep.mubr.bf16.mxu0 0
      %548 = vmatmul.mubr.bf16.gmra.mxu0 %v344
      %v549 = vpop.f32.mrf.mxu0
      %v550 = vadd.f32 0.0, %v549
      %v551 = vpop.f32.mrf.mxu0
      %v552 = vpop.f32.mrf.mxu0
      %v553 = vadd.f32 0.0, %v552
      %v554 = vpop.f32.mrf.mxu0
      %555 = vmatprep.mubr.bf16.mxu0 0
      %556 = vmatmul.mubr.bf16.gmra.mxu0 %v345
      %v557 = vpop.f32.mrf.mxu0
      %v558 = vadd.f32 0.0, %v557
      %v559 = vpop.f32.mrf.mxu0
      %v560 = vpop.f32.mrf.mxu0
      %v561 = vadd.f32 0.0, %v560
      %v562 = vpop.f32.mrf.mxu0
      %563 = vmatprep.mubr.bf16.mxu0 0
      %564 = vmatmul.mubr.bf16.gmra.mxu0 %v346
      %v565 = vpop.f32.mrf.mxu0
      %v566 = vadd.f32 0.0, %v565
      %v567 = vpop.f32.mrf.mxu0
      %v568 = vpop.f32.mrf.mxu0
      %v569 = vadd.f32 0.0, %v568
      %v570 = vpop.f32.mrf.mxu0
      %571 = vdwg.mxu0
      %572 = vst [vmem:[%s210] sm:$0xff] %v446
      %573 = vst [vmem:[%s210 + $0x8] sm:$0xff] %v449
      %574 = vst [vmem:[%s210 + $0x10] sm:$0xff] %v454
      %575 = vst [vmem:[%s210 + $0x18] sm:$0xff] %v457
      %576 = vst [vmem:[%s210 + $0x20] sm:$0xff] %v462
      %577 = vst [vmem:[%s210 + $0x28] sm:$0xff] %v465
      %578 = vst [vmem:[%s210 + $0x30] sm:$0xff] %v470
      %579 = vst [vmem:[%s210 + $0x38] sm:$0xff] %v473
      %580 = vst [vmem:[%s210 + $0x40] sm:$0xff] %v478
      %581 = vst [vmem:[%s210 + $0x48] sm:$0xff] %v481
      %582 = vst [vmem:[%s210 + $0x50] sm:$0xff] %v486
      %583 = vst [vmem:[%s210 + $0x58] sm:$0xff] %v489
      %584 = vst [vmem:[%s210 + $0x60] sm:$0xff] %v494
      %585 = vst [vmem:[%s210 + $0x68] sm:$0xff] %v497
      %586 = vst [vmem:[%s210 + $0x70] sm:$0xff] %v502
      %587 = vst [vmem:[%s210 + $0x78] sm:$0xff] %v505
      %588 = vst [vmem:[%s210 + $0x80] sm:$0xff] %v510
      %589 = vst [vmem:[%s210 + $0x88] sm:$0xff] %v513
      %590 = vst [vmem:[%s210 + $0x90] sm:$0xff] %v518
      %591 = vst [vmem:[%s210 + $0x98] sm:$0xff] %v521
      %592 = vst [vmem:[%s210 + $0xa0] sm:$0xff] %v526
      %593 = vst [vmem:[%s210 + $0xa8] sm:$0xff] %v529
      %594 = vst [vmem:[%s210 + $0xb0] sm:$0xff] %v534
      %595 = vst [vmem:[%s210 + $0xb8] sm:$0xff] %v537
      %596 = vst [vmem:[%s210 + $0xc0] sm:$0xff] %v542
      %597 = vst [vmem:[%s210 + $0xc8] sm:$0xff] %v545
      %598 = vst [vmem:[%s210 + $0xd0] sm:$0xff] %v550
      %599 = vst [vmem:[%s210 + $0xd8] sm:$0xff] %v553
      %600 = vst [vmem:[%s210 + $0xe0] sm:$0xff] %v558
      %601 = vst [vmem:[%s210 + $0xe8] sm:$0xff] %v561
      %602 = vst [vmem:[%s210 + $0xf0] sm:$0xff] %v566
      %603 = vst [vmem:[%s210 + $0xf8] sm:$0xff] %v569
      %v604 = vadd.f32 %v446, %v449
      %v605 = vadd.f32 %v604, %v454
      %v606 = vadd.f32 %v605, %v457
      %v607 = vadd.f32 %v606, %v462
      %v608 = vadd.f32 %v607, %v465
      %v609 = vadd.f32 %v608, %v470
      %v610 = vadd.f32 %v609, %v473
      %v611 = vadd.f32 %v610, %v478
      %v612 = vadd.f32 %v611, %v481
      %v613 = vadd.f32 %v612, %v486
      %v614 = vadd.f32 %v613, %v489
      %v615 = vadd.f32 %v614, %v494
      %v616 = vadd.f32 %v615, %v497
      %v617 = vadd.f32 %v616, %v502
      %v618 = vadd.f32 %v617, %v505
      %v619 = vadd.f32 %v618, %v510
      %v620 = vadd.f32 %v619, %v513
      %v621 = vadd.f32 %v620, %v518
      %v622 = vadd.f32 %v621, %v521
      %v623 = vadd.f32 %v622, %v526
      %v624 = vadd.f32 %v623, %v529
      %v625 = vadd.f32 %v624, %v534
      %v626 = vadd.f32 %v625, %v537
      %v627 = vadd.f32 %v626, %v542
      %v628 = vadd.f32 %v627, %v545
      %v629 = vadd.f32 %v628, %v550
      %v630 = vadd.f32 %v629, %v553
      %v631 = vadd.f32 %v630, %v558
      %v632 = vadd.f32 %v631, %v561
      %v633 = vadd.f32 %v632, %v566
      %v634 = vadd.f32 %v633, %v569
      %v635 = vrot.slane %v634, 4
      %v636 = vadd.f32 %v634, %v635
      %v637 = vrot.slane %v636, 2
      %v638 = vadd.f32 %v636, %v637
      %v639 = vrot.slane %v638, 1
      %v640 = vadd.f32 %v638, %v639
      %641 = vst [vmem:[%s214] sm:$0x1] %v640
      %v642 = vmul.f32 %v446, %v446
      %v643 = vmul.f32 %v449, %v449
      %v644 = vmul.f32 %v454, %v454
      %v645 = vmul.f32 %v457, %v457
      %v646 = vmul.f32 %v462, %v462
      %v647 = vmul.f32 %v465, %v465
      %v648 = vmul.f32 %v470, %v470
      %v649 = vmul.f32 %v473, %v473
      %v650 = vmul.f32 %v478, %v478
      %v651 = vmul.f32 %v481, %v481
      %v652 = vmul.f32 %v486, %v486
      %v653 = vmul.f32 %v489, %v489
      %v654 = vmul.f32 %v494, %v494
      %v655 = vmul.f32 %v497, %v497
      %v656 = vmul.f32 %v502, %v502
      %v657 = vmul.f32 %v505, %v505
      %v658 = vmul.f32 %v510, %v510
      %v659 = vmul.f32 %v513, %v513
      %v660 = vmul.f32 %v518, %v518
      %v661 = vmul.f32 %v521, %v521
      %v662 = vmul.f32 %v526, %v526
      %v663 = vmul.f32 %v529, %v529
      %v664 = vmul.f32 %v534, %v534
      %v665 = vmul.f32 %v537, %v537
      %v666 = vmul.f32 %v542, %v542
      %v667 = vmul.f32 %v545, %v545
      %v668 = vmul.f32 %v550, %v550
      %v669 = vmul.f32 %v553, %v553
      %v670 = vmul.f32 %v558, %v558
      %v671 = vmul.f32 %v561, %v561
      %v672 = vmul.f32 %v566, %v566
      %v673 = vmul.f32 %v569, %v569
      %v674 = vadd.f32 %v642, %v643
      %v675 = vadd.f32 %v674, %v644
      %v676 = vadd.f32 %v675, %v645
      %v677 = vadd.f32 %v676, %v646
      %v678 = vadd.f32 %v677, %v647
      %v679 = vadd.f32 %v678, %v648
      %v680 = vadd.f32 %v679, %v649
      %v681 = vadd.f32 %v680, %v650
      %v682 = vadd.f32 %v681, %v651
      %v683 = vadd.f32 %v682, %v652
      %v684 = vadd.f32 %v683, %v653
      %v685 = vadd.f32 %v684, %v654
      %v686 = vadd.f32 %v685, %v655
      %v687 = vadd.f32 %v686, %v656
      %v688 = vadd.f32 %v687, %v657
      %v689 = vadd.f32 %v688, %v658
      %v690 = vadd.f32 %v689, %v659
      %v691 = vadd.f32 %v690, %v660
      %v692 = vadd.f32 %v691, %v661
      %v693 = vadd.f32 %v692, %v662
      %v694 = vadd.f32 %v693, %v663
      %v695 = vadd.f32 %v694, %v664
      %v696 = vadd.f32 %v695, %v665
      %v697 = vadd.f32 %v696, %v666
      %v698 = vadd.f32 %v697, %v667
      %v699 = vadd.f32 %v698, %v668
      %v700 = vadd.f32 %v699, %v669
      %v701 = vadd.f32 %v700, %v670
      %v702 = vadd.f32 %v701, %v671
      %v703 = vadd.f32 %v702, %v672
      %v704 = vadd.f32 %v703, %v673
      %v705 = vrot.slane %v704, 4
      %v706 = vadd.f32 %v704, %v705
      %v707 = vrot.slane %v706, 2
      %v708 = vadd.f32 %v706, %v707
      %v709 = vrot.slane %v708, 1
      %v710 = vadd.f32 %v708, %v709
      %711 = vst [vmem:[%s217] sm:$0x1] %v710
      %s712 = smul.u32 32, %s16
      %p713 = scmp.lt.s32.totalorder %s712, 63
      %s714 = scalar_select %p713, %s712, 63
      %s715 = smul.addr %s714, 8
      %s716 = scalar_lea.vmem %s2, %s715
      %p717 = scmp.lt.s32.totalorder %s16, 1
      %s718 = scalar_select %p717, %s16, 1
      %s719 = scalar_lea.vmem %s3, %s718
      %p720 = scmp.lt.s32.totalorder %s16, 1
      %s721 = scalar_select %p720, %s16, 1
      %s722 = scalar_lea.vmem %s4, %s721
      // Predicated region
      $region29: #{contract_block.8} parent=27 // pred_check
        %p723 = pneg %p81
      $region30: #{contract_block.8} parent=27 // pred_check_branch
        %725 = sbr.rel (%p723) target = $region32
      $region31: #{contract_block.8} parent=27 // pred_region
        %s726 = smul.u32 32, %s16
      $region32: #{contract_block.8} parent=27 // pred_fallthru
        _
      // Predicated region
      $region33: #{contract_block.8} parent=27 // pred_check
        %p727 = pneg %p107
      $region34: #{contract_block.8} parent=27 // pred_check_branch
        %729 = sbr.rel (%p727) target = $region36
      $region35: #{contract_block.8} parent=27 // pred_region
        _
      $region36: #{contract_block.8} parent=27 // pred_fallthru
        _
      // Predicated region
      $region37: #{contract_block.8} parent=27 // pred_check
        %p730 = pneg %p133
      $region38: #{contract_block.8} parent=27 // pred_check_branch
        %732 = sbr.rel (%p730) target = $region40
      $region39: #{contract_block.8} parent=27 // pred_region
        _
      $region40: #{contract_block.8} parent=27 // pred_fallthru
        _
    $region28: #{contract_block.8} parent=5 // pred_fallthru
      _
    %p733 = scmp.le.s32.totalorder 2, %s11
    // Predicated region
    $region41: #{contract_block.8} parent=5 // pred_check
      %p734 = pneg %p733
    $region42: #{contract_block.8} parent=5 // pred_check_branch
      %736 = sbr.rel (%p734) target = $region44
    $region43: #{contract_block.8} parent=5 // pred_region
      %s737 = ssub.s32 %s11, 2
      // Predicated region
      $region45: #{contract_block.8} parent=43 // pred_check
        %p738 = pneg %p87
      $region46: #{contract_block.8} parent=43 // pred_check_branch
        %740 = sbr.rel (%p738) target = $region48
      $region47: #{contract_block.8} parent=43 // pred_region
        %s741 = smul.u32 32, %s17
        %p742 = scmp.lt.s32.totalorder %s741, 63
        %s743 = scalar_select %p742, %s741, 63
        %s744 = smul.addr %s743, 8
        %s745 = scalar_lea.vmem %s2, %s744
      $region48: #{contract_block.8} parent=43 // pred_fallthru
        _
      // Predicated region
      $region49: #{contract_block.8} parent=43 // pred_check
        %p746 = pneg %p113
      $region50: #{contract_block.8} parent=43 // pred_check_branch
        %748 = sbr.rel (%p746) target = $region52
      $region51: #{contract_block.8} parent=43 // pred_region
        %p749 = scmp.lt.s32.totalorder %s17, 1
        %s750 = scalar_select %p749, %s17, 1
        %s751 = scalar_lea.vmem %s3, %s750
      $region52: #{contract_block.8} parent=43 // pred_fallthru
        _
      // Predicated region
      $region53: #{contract_block.8} parent=43 // pred_check
        %p752 = pneg %p139
      $region54: #{contract_block.8} parent=43 // pred_check_branch
        %754 = sbr.rel (%p752) target = $region56
      $region55: #{contract_block.8} parent=43 // pred_region
        %p755 = scmp.lt.s32.totalorder %s17, 1
        %s756 = scalar_select %p755, %s17, 1
        %s757 = scalar_lea.vmem %s4, %s756
      $region56: #{contract_block.8} parent=43 // pred_fallthru
        _
    $region44: #{contract_block.8} parent=5 // pred_fallthru
      _
  $region6: #{contract_block.8} parent=0 // loop_footer
    %s15 = sadd.s32 1, %s11
  $region7: #{contract_block.8} parent=0 // loop_footer_branch
    %10 = sbr.rel target = $region3
  $region8: #{contract_block.8} parent=0 // loop_exit
    _

// kernel: contract_block.11
$region0: #{contract_block.11}
  #allocation0 [shape = 'u32[]', space=smem, size = 0x4, offset = 0x4, fixed_abs, tag = 'smem constant byte address 0x4 - core index']
  #allocation1 [shape = 'u32[144,128]{1,0:T(1,128)}', space=vmem, size = 0x12000, scoped, tag = 'internal scratch']
  %s0 = inlined_call_operand.vmem [shape: f32[32,16,128], index: 0, kind: input, shape index: {}]
  %s1 = inlined_call_operand.vmem [shape: f32[1,1,128], index: 1, kind: input, shape index: {}]
  %s2 = inlined_call_operand.vmem [shape: f32[1,1,128], index: 2, kind: input, shape index: {}]
  %s3 = inlined_call_operand.vmem [shape: f32[32,16,128], index: 3, kind: output, shape index: {0}]
  %s4 = inlined_call_operand.vmem [shape: f32[16,8,128], index: 4, kind: output, shape index: {1}]
  %5 = xla_tuple %s3, %s4
  %s6 = sld [smem:[#allocation0]]
  $region53: #{contract_block.11} parent=0
    _
  %s8 = ssub.s32 1, %s6
  %s9 = scalar_select 0, %s8, %s6
  loop: start=0, step=1, limit=4
  $region2: #{contract_block.11} parent=0 // loop_pre_header
    _
  $region3: #{contract_block.11} parent=0 // loop_header
    %s11 = sphi 0, %s15
    %p12 = scmp.ge.s32.totalorder %s11, 4
    %s21 = sphi 0, %s23
    %s24 = sphi 0, %s21
    %s25 = sphi 0, %s24
    %s41 = sphi 0, %s25
    %s45 = sphi 0, %s45
    %s47 = sphi 0, %s45
    %s48 = sphi 0, %s47
    %s62 = sphi 0, %s48
    %s66 = sphi 0, %s66
    %s68 = sphi 0, %s66
    %s69 = sphi 0, %s68
    %s83 = sphi 0, %s69
    %s89 = sphi 0, %s91
    %s92 = sphi 0, %s89
    %s93 = sphi 0, %s92
    %s109 = sphi 0, %s93
    %s115 = sphi 0, %s117
    %s118 = sphi 0, %s115
    %s119 = sphi 0, %s118
    %s135 = sphi 0, %s119
  $region4: #{contract_block.11} parent=0 // loop_header_branch
    %14 = sbr.rel (%p12) target = $region8
  $region5: #{contract_block.11} parent=0 // loop_body
    %s16 = ssub.s32 %s11, 1
    %s17 = ssub.s32 %s11, 2
    %s18 = sadd.s32 %s11, 1
    %s19 = ssub.s32 %s11, %s18
    %p20 = scmp.eq.s32.totalorder %s19, 0
    %s22 = sadd.s32 %s21, 1
    %s23 = scalar_select %p20, %s21, %s22
    %p26 = pneg %p20
    %p27 = scmp.eq.s32.totalorder %s11, 1
    %p28 = por %p26, %p27
    %p29 = scmp.ne.s32.totalorder %s21, %s24
    %p30 = scmp.eq.s32.totalorder %s11, 0
    %p31 = por %p29, %p30
    %p32 = scmp.ne.s32.totalorder %s21, %s24
    %p33 = scmp.eq.s32.totalorder %s16, 1
    %p34 = por %p32, %p33
    %p35 = scmp.ne.s32.totalorder %s24, %s25
    %p36 = scmp.eq.s32.totalorder %s16, 0
    %p37 = por %p35, %p36
    %p38 = scmp.ne.s32.totalorder %s24, %s25
    %p39 = scmp.eq.s32.totalorder %s17, 1
    %p40 = por %p38, %p39
    %p42 = scmp.ne.s32.totalorder %s25, %s41
    %p43 = scmp.eq.s32.totalorder %s17, 0
    %p44 = por %p42, %p43
    %s46 = sadd.s32 %s45, 1
    %p49 = scmp.eq.s32.totalorder %s11, 1
    %p50 = scmp.ne.s32.totalorder %s45, %s47
    %p51 = scmp.eq.s32.totalorder %s11, 0
    %p52 = por %p50, %p51
    %p53 = scmp.ne.s32.totalorder %s45, %s47
    %p54 = scmp.eq.s32.totalorder %s16, 1
    %p55 = por %p53, %p54
    %p56 = scmp.ne.s32.totalorder %s47, %s48
    %p57 = scmp.eq.s32.totalorder %s16, 0
    %p58 = por %p56, %p57
    %p59 = scmp.ne.s32.totalorder %s47, %s48
    %p60 = scmp.eq.s32.totalorder %s17, 1
    %p61 = por %p59, %p60
    %p63 = scmp.ne.s32.totalorder %s48, %s62
    %p64 = scmp.eq.s32.totalorder %s17, 0
    %p65 = por %p63, %p64
    %s67 = sadd.s32 %s66, 1
    %p70 = scmp.eq.s32.totalorder %s11, 1
    %p71 = scmp.ne.s32.totalorder %s66, %s68
    %p72 = scmp.eq.s32.totalorder %s11, 0
    %p73 = por %p71, %p72
    %p74 = scmp.ne.s32.totalorder %s66, %s68
    %p75 = scmp.eq.s32.totalorder %s16, 1
    %p76 = por %p74, %p75
    %p77 = scmp.ne.s32.totalorder %s68, %s69
    %p78 = scmp.eq.s32.totalorder %s16, 0
    %p79 = por %p77, %p78
    %p80 = scmp.ne.s32.totalorder %s68, %s69
    %p81 = scmp.eq.s32.totalorder %s17, 1
    %p82 = por %p80, %p81
    %p84 = scmp.ne.s32.totalorder %s69, %s83
    %p85 = scmp.eq.s32.totalorder %s17, 0
    %p86 = por %p84, %p85
    %s87 = ssub.s32 %s11, %s18
    %p88 = scmp.eq.s32.totalorder %s87, 0
    %s90 = sadd.s32 %s89, 1
    %s91 = scalar_select %p88, %s89, %s90
    %p94 = pneg %p88
    %p95 = scmp.eq.s32.totalorder %s11, 1
    %p96 = por %p94, %p95
    %p97 = scmp.ne.s32.totalorder %s89, %s92
    %p98 = scmp.eq.s32.totalorder %s11, 0
    %p99 = por %p97, %p98
    %p100 = scmp.ne.s32.totalorder %s89, %s92
    %p101 = scmp.eq.s32.totalorder %s16, 1
    %p102 = por %p100, %p101
    %p103 = scmp.ne.s32.totalorder %s92, %s93
    %p104 = scmp.eq.s32.totalorder %s16, 0
    %p105 = por %p103, %p104
    %p106 = scmp.ne.s32.totalorder %s92, %s93
    %p107 = scmp.eq.s32.totalorder %s17, 1
    %p108 = por %p106, %p107
    %p110 = scmp.ne.s32.totalorder %s93, %s109
    %p111 = scmp.eq.s32.totalorder %s17, 0
    %p112 = por %p110, %p111
    %s113 = ssub.s32 %s11, %s18
    %p114 = scmp.eq.s32.totalorder %s113, 0
    %s116 = sadd.s32 %s115, 1
    %s117 = scalar_select %p114, %s115, %s116
    %p120 = pneg %p114
    %p121 = scmp.eq.s32.totalorder %s11, 1
    %p122 = por %p120, %p121
    %p123 = scmp.ne.s32.totalorder %s115, %s118
    %p124 = scmp.eq.s32.totalorder %s11, 0
    %p125 = por %p123, %p124
    %p126 = scmp.ne.s32.totalorder %s115, %s118
    %p127 = scmp.eq.s32.totalorder %s16, 1
    %p128 = por %p126, %p127
    %p129 = scmp.ne.s32.totalorder %s118, %s119
    %p130 = scmp.eq.s32.totalorder %s16, 0
    %p131 = por %p129, %p130
    %p132 = scmp.ne.s32.totalorder %s118, %s119
    %p133 = scmp.eq.s32.totalorder %s17, 1
    %p134 = por %p132, %p133
    %p136 = scmp.ne.s32.totalorder %s119, %s135
    %p137 = scmp.eq.s32.totalorder %s17, 0
    %p138 = por %p136, %p137
    %p139 = scmp.le.s32.totalorder 1, %s11
    %p140 = scmp.lt.s32.totalorder %s11, 3
    %p141 = pnand %p139, %p140
    %p142 = pneg %p141
    // Predicated region
    $region9: #{contract_block.11} parent=5 // pred_check
      _
    $region10: #{contract_block.11} parent=5 // pred_check_branch
      %144 = sbr.rel (%p141) target = $region12
    $region11: #{contract_block.11} parent=5 // pred_region
      %s145 = ssub.s32 %s11, 1
      // Predicated region
      $region13: #{contract_block.11} parent=11 // pred_check
        %p146 = pneg %p58
      $region14: #{contract_block.11} parent=11 // pred_check_branch
        %148 = sbr.rel (%p146) target = $region16
      $region15: #{contract_block.11} parent=11 // pred_region
        _
      $region16: #{contract_block.11} parent=11 // pred_fallthru
        _
      // Predicated region
      $region17: #{contract_block.11} parent=11 // pred_check
        %p149 = pneg %p79
      $region18: #{contract_block.11} parent=11 // pred_check_branch
        %151 = sbr.rel (%p149) target = $region20
      $region19: #{contract_block.11} parent=11 // pred_region
        _
      $region20: #{contract_block.11} parent=11 // pred_fallthru
        _
    $region12: #{contract_block.11} parent=5 // pred_fallthru
      _
    %p152 = scmp.lt.s32.totalorder %s11, 2
    // Predicated region
    $region21: #{contract_block.11} parent=5 // pred_check
      %p153 = pneg %p152
    $region22: #{contract_block.11} parent=5 // pred_check_branch
      %155 = sbr.rel (%p153) target = $region24
    $region23: #{contract_block.11} parent=5 // pred_region
      // Predicated region
      $region25: #{contract_block.11} parent=23 // pred_check
        %p156 = pneg %p31
      $region26: #{contract_block.11} parent=23 // pred_check_branch
        %158 = sbr.rel (%p156) target = $region28
      $region27: #{contract_block.11} parent=23 // pred_region
        %s159 = smul.u32 16, %s11
        %p160 = scmp.lt.s32.totalorder %s159, 31
        %s161 = scalar_select %p160, %s159, 31
        %s162 = smul.addr %s161, 2
        %s163 = smul.addr %s162, 8
        %s164 = scalar_lea.vmem %s0, %s163
        %s165 = smul.u32 16, %s11
      $region28: #{contract_block.11} parent=23 // pred_fallthru
        _
    $region24: #{contract_block.11} parent=5 // pred_fallthru
      _
    %p166 = scmp.le.s32.totalorder 1, %s11
    %p167 = scmp.lt.s32.totalorder %s11, 3
    %p168 = pnand %p166, %p167
    %p169 = pneg %p168
    // Predicated region
    $region29: #{contract_block.11} parent=5 // pred_check
      _
    $region30: #{contract_block.11} parent=5 // pred_check_branch
      %171 = sbr.rel (%p168) target = $region32
    $region31: #{contract_block.11} parent=5 // pred_region
      %s172 = ssub.s32 %s11, 1
      %s173 = smul.u32 16, %s16
      %p174 = scmp.lt.s32.totalorder %s173, 31
      %s175 = scalar_select %p174, %s173, 31
      %s176 = smul.addr %s175, 2
      %s177 = smul.addr %s176, 8
      %s178 = scalar_lea.vmem %s0, %s177
      %p179 = pneg %p37
      %p180 = pneg %p34
      %p181 = pneg %p58
      %p182 = pneg %p55
      %p183 = pneg %p79
      %p184 = pneg %p76
      %p185 = pneg %p105
      %p186 = pneg %p102
      %s187 = smul.u32 16, %s16
      %p188 = scmp.lt.s32.totalorder %s187, 31
      %s189 = scalar_select %p188, %s187, 31
      %s190 = smul.addr %s189, 2
      %s191 = smul.addr %s190, 8
      %s192 = scalar_lea.vmem %s3, %s191
      %p193 = pneg %p131
      %p194 = pneg %p128
      %s195 = smul.u32 8, %s16
      %p196 = scmp.lt.s32.totalorder %s195, 15
      %s197 = scalar_select %p196, %s195, 15
      %s198 = smul.addr %s197, 8
      %s199 = scalar_lea.vmem %s4, %s198
      %s200 = smul.u32 16, %s16
      %p201 = scmp.lt.s32.totalorder %s200, 31
      %s202 = scalar_select %p201, %s200, 31
      %s203 = smul.addr %s202, 2
      %s204 = smul.addr %s203, 8
      %s205 = scalar_lea.vmem %s0, %s204
      %s206 = smul.u32 16, %s16
      %s207 = smul.u32 16, %s16
      %p208 = scmp.lt.s32.totalorder %s207, 31
      %s209 = scalar_select %p208, %s207, 31
      %s210 = smul.addr %s209, 2
      %s211 = smul.addr %s210, 8
      %s212 = scalar_lea.vmem %s3, %s211
      %s213 = smul.u32 16, %s16
      %s214 = smul.u32 8, %s16
      %p215 = scmp.lt.s32.totalorder %s214, 15
      %s216 = scalar_select %p215, %s214, 15
      %s217 = smul.addr %s216, 8
      %s218 = scalar_lea.vmem %s4, %s217
      %s219 = smul.u32 8, %s16
      %v220 = vld [vmem:[%s1] sm:$0x1]
      %v221 = vld [vmem:[%s2] sm:$0x1]
      %v222 = vld [vmem:[%s205] sm:$0xff]
      %v223 = vld [vmem:[%s205 + $0x8] sm:$0xff]
      %v224 = vld [vmem:[%s205 + $0x10] sm:$0xff]
      %v225 = vld [vmem:[%s205 + $0x18] sm:$0xff]
      %v226 = vld [vmem:[%s205 + $0x20] sm:$0xff]
      %v227 = vld [vmem:[%s205 + $0x28] sm:$0xff]
      %v228 = vld [vmem:[%s205 + $0x30] sm:$0xff]
      %v229 = vld [vmem:[%s205 + $0x38] sm:$0xff]
      %v230 = vld [vmem:[%s205 + $0x40] sm:$0xff]
      %v231 = vld [vmem:[%s205 + $0x48] sm:$0xff]
      %v232 = vld [vmem:[%s205 + $0x50] sm:$0xff]
      %v233 = vld [vmem:[%s205 + $0x58] sm:$0xff]
      %v234 = vld [vmem:[%s205 + $0x60] sm:$0xff]
      %v235 = vld [vmem:[%s205 + $0x68] sm:$0xff]
      %v236 = vld [vmem:[%s205 + $0x70] sm:$0xff]
      %v237 = vld [vmem:[%s205 + $0x78] sm:$0xff]
      %v238 = vld [vmem:[%s205 + $0x80] sm:$0xff]
      %v239 = vld [vmem:[%s205 + $0x88] sm:$0xff]
      %v240 = vld [vmem:[%s205 + $0x90] sm:$0xff]
      %v241 = vld [vmem:[%s205 + $0x98] sm:$0xff]
      %v242 = vld [vmem:[%s205 + $0xa0] sm:$0xff]
      %v243 = vld [vmem:[%s205 + $0xa8] sm:$0xff]
      %v244 = vld [vmem:[%s205 + $0xb0] sm:$0xff]
      %v245 = vld [vmem:[%s205 + $0xb8] sm:$0xff]
      %v246 = vld [vmem:[%s205 + $0xc0] sm:$0xff]
      %v247 = vld [vmem:[%s205 + $0xc8] sm:$0xff]
      %v248 = vld [vmem:[%s205 + $0xd0] sm:$0xff]
      %v249 = vld [vmem:[%s205 + $0xd8] sm:$0xff]
      %v250 = vld [vmem:[%s205 + $0xe0] sm:$0xff]
      %v251 = vld [vmem:[%s205 + $0xe8] sm:$0xff]
      %v252 = vld [vmem:[%s205 + $0xf0] sm:$0xff]
      %v253 = vld [vmem:[%s205 + $0xf8] sm:$0xff]
      %v255 = vlaneseq
      %v256 = vshrl.u32 %v255, 7
      %v257 = vsub.s32 0, %v256
      %v258 = vrot.slane %v220, %v257
      %v260 = vmul.f32 %v222, %v258
      %v261 = vmul.f32 %v223, %v258
      %v262 = vmul.f32 %v224, %v258
      %v263 = vmul.f32 %v225, %v258
      %v264 = vmul.f32 %v226, %v258
      %v265 = vmul.f32 %v227, %v258
      %v266 = vmul.f32 %v228, %v258
      %v267 = vmul.f32 %v229, %v258
      %v268 = vmul.f32 %v230, %v258
      %v269 = vmul.f32 %v231, %v258
      %v270 = vmul.f32 %v232, %v258
      %v271 = vmul.f32 %v233, %v258
      %v272 = vmul.f32 %v234, %v258
      %v273 = vmul.f32 %v235, %v258
      %v274 = vmul.f32 %v236, %v258
      %v275 = vmul.f32 %v237, %v258
      %v276 = vmul.f32 %v238, %v258
      %v277 = vmul.f32 %v239, %v258
      %v278 = vmul.f32 %v240, %v258
      %v279 = vmul.f32 %v241, %v258
      %v280 = vmul.f32 %v242, %v258
      %v281 = vmul.f32 %v243, %v258
      %v282 = vmul.f32 %v244, %v258
      %v283 = vmul.f32 %v245, %v258
      %v284 = vmul.f32 %v246, %v258
      %v285 = vmul.f32 %v247, %v258
      %v286 = vmul.f32 %v248, %v258
      %v287 = vmul.f32 %v249, %v258
      %v288 = vmul.f32 %v250, %v258
      %v289 = vmul.f32 %v251, %v258
      %v290 = vmul.f32 %v252, %v258
      %v291 = vmul.f32 %v253, %v258
      %v293 = vlaneseq
      %v294 = vshrl.u32 %v293, 7
      %v295 = vsub.s32 0, %v294
      %v296 = vrot.slane %v221, %v295
      %v298 = vadd.f32 %v260, %v296
      %v299 = vadd.f32 %v261, %v296
      %v300 = vadd.f32 %v262, %v296
      %v301 = vadd.f32 %v263, %v296
      %v302 = vadd.f32 %v264, %v296
      %v303 = vadd.f32 %v265, %v296
      %v304 = vadd.f32 %v266, %v296
      %v305 = vadd.f32 %v267, %v296
      %v306 = vadd.f32 %v268, %v296
      %v307 = vadd.f32 %v269, %v296
      %v308 = vadd.f32 %v270, %v296
      %v309 = vadd.f32 %v271, %v296
      %v310 = vadd.f32 %v272, %v296
      %v311 = vadd.f32 %v273, %v296
      %v312 = vadd.f32 %v274, %v296
      %v313 = vadd.f32 %v275, %v296
      %v314 = vadd.f32 %v276, %v296
      %v315 = vadd.f32 %v277, %v296
      %v316 = vadd.f32 %v278, %v296
      %v317 = vadd.f32 %v279, %v296
      %v318 = vadd.f32 %v280, %v296
      %v319 = vadd.f32 %v281, %v296
      %v320 = vadd.f32 %v282, %v296
      %v321 = vadd.f32 %v283, %v296
      %v322 = vadd.f32 %v284, %v296
      %v323 = vadd.f32 %v285, %v296
      %v324 = vadd.f32 %v286, %v296
      %v325 = vadd.f32 %v287, %v296
      %v326 = vadd.f32 %v288, %v296
      %v327 = vadd.f32 %v289, %v296
      %v328 = vadd.f32 %v290, %v296
      %v329 = vadd.f32 %v291, %v296
      %v330 = vmax.f32 %v298, 0.0
      %v331 = vmax.f32 %v299, 0.0
      %v332 = vmax.f32 %v300, 0.0
      %v333 = vmax.f32 %v301, 0.0
      %v334 = vmax.f32 %v302, 0.0
      %v335 = vmax.f32 %v303, 0.0
      %v336 = vmax.f32 %v304, 0.0
      %v337 = vmax.f32 %v305, 0.0
      %v338 = vmax.f32 %v306, 0.0
      %v339 = vmax.f32 %v307, 0.0
      %v340 = vmax.f32 %v308, 0.0
      %v341 = vmax.f32 %v309, 0.0
      %v342 = vmax.f32 %v310, 0.0
      %v343 = vmax.f32 %v311, 0.0
      %v344 = vmax.f32 %v312, 0.0
      %v345 = vmax.f32 %v313, 0.0
      %v346 = vmax.f32 %v314, 0.0
      %v347 = vmax.f32 %v315, 0.0
      %v348 = vmax.f32 %v316, 0.0
      %v349 = vmax.f32 %v317, 0.0
      %v350 = vmax.f32 %v318, 0.0
      %v351 = vmax.f32 %v319, 0.0
      %v352 = vmax.f32 %v320, 0.0
      %v353 = vmax.f32 %v321, 0.0
      %v354 = vmax.f32 %v322, 0.0
      %v355 = vmax.f32 %v323, 0.0
      %v356 = vmax.f32 %v324, 0.0
      %v357 = vmax.f32 %v325, 0.0
      %v358 = vmax.f32 %v326, 0.0
      %v359 = vmax.f32 %v327, 0.0
      %v360 = vmax.f32 %v328, 0.0
      %v361 = vmax.f32 %v329, 0.0
      %362 = vst [vmem:[%s212] sm:$0xff] %v330
      %363 = vst [vmem:[%s212 + $0x8] sm:$0xff] %v331
      %364 = vst [vmem:[%s212 + $0x10] sm:$0xff] %v332
      %365 = vst [vmem:[%s212 + $0x18] sm:$0xff] %v333
      %366 = vst [vmem:[%s212 + $0x20] sm:$0xff] %v334
      %367 = vst [vmem:[%s212 + $0x28] sm:$0xff] %v335
      %368 = vst [vmem:[%s212 + $0x30] sm:$0xff] %v336
      %369 = vst [vmem:[%s212 + $0x38] sm:$0xff] %v337
      %370 = vst [vmem:[%s212 + $0x40] sm:$0xff] %v338
      %371 = vst [vmem:[%s212 + $0x48] sm:$0xff] %v339
      %372 = vst [vmem:[%s212 + $0x50] sm:$0xff] %v340
      %373 = vst [vmem:[%s212 + $0x58] sm:$0xff] %v341
      %374 = vst [vmem:[%s212 + $0x60] sm:$0xff] %v342
      %375 = vst [vmem:[%s212 + $0x68] sm:$0xff] %v343
      %376 = vst [vmem:[%s212 + $0x70] sm:$0xff] %v344
      %377 = vst [vmem:[%s212 + $0x78] sm:$0xff] %v345
      %378 = vst [vmem:[%s212 + $0x80] sm:$0xff] %v346
      %379 = vst [vmem:[%s212 + $0x88] sm:$0xff] %v347
      %380 = vst [vmem:[%s212 + $0x90] sm:$0xff] %v348
      %381 = vst [vmem:[%s212 + $0x98] sm:$0xff] %v349
      %382 = vst [vmem:[%s212 + $0xa0] sm:$0xff] %v350
      %383 = vst [vmem:[%s212 + $0xa8] sm:$0xff] %v351
      %384 = vst [vmem:[%s212 + $0xb0] sm:$0xff] %v352
      %385 = vst [vmem:[%s212 + $0xb8] sm:$0xff] %v353
      %386 = vst [vmem:[%s212 + $0xc0] sm:$0xff] %v354
      %387 = vst [vmem:[%s212 + $0xc8] sm:$0xff] %v355
      %388 = vst [vmem:[%s212 + $0xd0] sm:$0xff] %v356
      %389 = vst [vmem:[%s212 + $0xd8] sm:$0xff] %v357
      %390 = vst [vmem:[%s212 + $0xe0] sm:$0xff] %v358
      %391 = vst [vmem:[%s212 + $0xe8] sm:$0xff] %v359
      %392 = vst [vmem:[%s212 + $0xf0] sm:$0xff] %v360
      %393 = vst [vmem:[%s212 + $0xf8] sm:$0xff] %v361
      %v394 = vld [vmem:[%s205] ss:$2 sm:$0xff]
      %s395 = scalar_lea.vmem %s205, 16
      %v396 = vld [vmem:[%s395] ss:$2 sm:$0xff]
      %s397 = scalar_lea.vmem %s205, 32
      %v398 = vld [vmem:[%s397] ss:$2 sm:$0xff]
      %s399 = scalar_lea.vmem %s205, 48
      %v400 = vld [vmem:[%s399] ss:$2 sm:$0xff]
      %s401 = scalar_lea.vmem %s205, 64
      %v402 = vld [vmem:[%s401] ss:$2 sm:$0xff]
      %s403 = scalar_lea.vmem %s205, 80
      %v404 = vld [vmem:[%s403] ss:$2 sm:$0xff]
      %s405 = scalar_lea.vmem %s205, 96
      %v406 = vld [vmem:[%s405] ss:$2 sm:$0xff]
      %s407 = scalar_lea.vmem %s205, 112
      %v408 = vld [vmem:[%s407] ss:$2 sm:$0xff]
      %s409 = scalar_lea.vmem %s205, 128
      %v410 = vld [vmem:[%s409] ss:$2 sm:$0xff]
      %s411 = scalar_lea.vmem %s205, 144
      %v412 = vld [vmem:[%s411] ss:$2 sm:$0xff]
      %s413 = scalar_lea.vmem %s205, 160
      %v414 = vld [vmem:[%s413] ss:$2 sm:$0xff]
      %s415 = scalar_lea.vmem %s205, 176
      %v416 = vld [vmem:[%s415] ss:$2 sm:$0xff]
      %s417 = scalar_lea.vmem %s205, 192
      %v418 = vld [vmem:[%s417] ss:$2 sm:$0xff]
      %s419 = scalar_lea.vmem %s205, 208
      %v420 = vld [vmem:[%s419] ss:$2 sm:$0xff]
      %s421 = scalar_lea.vmem %s205, 224
      %v422 = vld [vmem:[%s421] ss:$2 sm:$0xff]
      %s423 = scalar_lea.vmem %s205, 240
      %v424 = vld [vmem:[%s423] ss:$2 sm:$0xff]
      %s425 = scalar_lea.vmem %s205, 1
      %v426 = vld [vmem:[%s425] ss:$2 sm:$0xff]
      %s427 = scalar_lea.vmem %s205, 17
      %v428 = vld [vmem:[%s427] ss:$2 sm:$0xff]
      %s429 = scalar_lea.vmem %s205, 33
      %v430 = vld [vmem:[%s429] ss:$2 sm:$0xff]
      %s431 = scalar_lea.vmem %s205, 49
      %v432 = vld [vmem:[%s431] ss:$2 sm:$0xff]
      %s433 = scalar_lea.vmem %s205, 65
      %v434 = vld [vmem:[%s433] ss:$2 sm:$0xff]
      %s435 = scalar_lea.vmem %s205, 81
      %v436 = vld [vmem:[%s435] ss:$2 sm:$0xff]
      %s437 = scalar_lea.vmem %s205, 97
      %v438 = vld [vmem:[%s437] ss:$2 sm:$0xff]
      %s439 = scalar_lea.vmem %s205, 113
      %v440 = vld [vmem:[%s439] ss:$2 sm:$0xff]
      %s441 = scalar_lea.vmem %s205, 129
      %v442 = vld [vmem:[%s441] ss:$2 sm:$0xff]
      %s443 = scalar_lea.vmem %s205, 145
      %v444 = vld [vmem:[%s443] ss:$2 sm:$0xff]
      %s445 = scalar_lea.vmem %s205, 161
      %v446 = vld [vmem:[%s445] ss:$2 sm:$0xff]
      %s447 = scalar_lea.vmem %s205, 177
      %v448 = vld [vmem:[%s447] ss:$2 sm:$0xff]
      %s449 = scalar_lea.vmem %s205, 193
      %v450 = vld [vmem:[%s449] ss:$2 sm:$0xff]
      %s451 = scalar_lea.vmem %s205, 209
      %v452 = vld [vmem:[%s451] ss:$2 sm:$0xff]
      %s453 = scalar_lea.vmem %s205, 225
      %v454 = vld [vmem:[%s453] ss:$2 sm:$0xff]
      %s455 = scalar_lea.vmem %s205, 241
      %v456 = vld [vmem:[%s455] ss:$2 sm:$0xff]
      %v457 = vmul.f32 %v394, %v258
      %v458 = vmul.f32 %v396, %v258
      %v459 = vmul.f32 %v398, %v258
      %v460 = vmul.f32 %v400, %v258
      %v461 = vmul.f32 %v402, %v258
      %v462 = vmul.f32 %v404, %v258
      %v463 = vmul.f32 %v406, %v258
      %v464 = vmul.f32 %v408, %v258
      %v465 = vmul.f32 %v410, %v258
      %v466 = vmul.f32 %v412, %v258
      %v467 = vmul.f32 %v414, %v258
      %v468 = vmul.f32 %v416, %v258
      %v469 = vmul.f32 %v418, %v258
      %v470 = vmul.f32 %v420, %v258
      %v471 = vmul.f32 %v422, %v258
      %v472 = vmul.f32 %v424, %v258
      %v473 = vadd.f32 %v457, %v296
      %v474 = vadd.f32 %v458, %v296
      %v475 = vadd.f32 %v459, %v296
      %v476 = vadd.f32 %v460, %v296
      %v477 = vadd.f32 %v461, %v296
      %v478 = vadd.f32 %v462, %v296
      %v479 = vadd.f32 %v463, %v296
      %v480 = vadd.f32 %v464, %v296
      %v481 = vadd.f32 %v465, %v296
      %v482 = vadd.f32 %v466, %v296
      %v483 = vadd.f32 %v467, %v296
      %v484 = vadd.f32 %v468, %v296
      %v485 = vadd.f32 %v469, %v296
      %v486 = vadd.f32 %v470, %v296
      %v487 = vadd.f32 %v471, %v296
      %v488 = vadd.f32 %v472, %v296
      %v489 = vmax.f32 %v473, 0.0
      %v490 = vmax.f32 %v474, 0.0
      %v491 = vmax.f32 %v475, 0.0
      %v492 = vmax.f32 %v476, 0.0
      %v493 = vmax.f32 %v477, 0.0
      %v494 = vmax.f32 %v478, 0.0
      %v495 = vmax.f32 %v479, 0.0
      %v496 = vmax.f32 %v480, 0.0
      %v497 = vmax.f32 %v481, 0.0
      %v498 = vmax.f32 %v482, 0.0
      %v499 = vmax.f32 %v483, 0.0
      %v500 = vmax.f32 %v484, 0.0
      %v501 = vmax.f32 %v485, 0.0
      %v502 = vmax.f32 %v486, 0.0
      %v503 = vmax.f32 %v487, 0.0
      %v504 = vmax.f32 %v488, 0.0
      %v505 = vmul.f32 %v426, %v258
      %v506 = vmul.f32 %v428, %v258
      %v507 = vmul.f32 %v430, %v258
      %v508 = vmul.f32 %v432, %v258
      %v509 = vmul.f32 %v434, %v258
      %v510 = vmul.f32 %v436, %v258
      %v511 = vmul.f32 %v438, %v258
      %v512 = vmul.f32 %v440, %v258
      %v513 = vmul.f32 %v442, %v258
      %v514 = vmul.f32 %v444, %v258
      %v515 = vmul.f32 %v446, %v258
      %v516 = vmul.f32 %v448, %v258
      %v517 = vmul.f32 %v450, %v258
      %v518 = vmul.f32 %v452, %v258
      %v519 = vmul.f32 %v454, %v258
      %v520 = vmul.f32 %v456, %v258
      %v521 = vadd.f32 %v505, %v296
      %v522 = vadd.f32 %v506, %v296
      %v523 = vadd.f32 %v507, %v296
      %v524 = vadd.f32 %v508, %v296
      %v525 = vadd.f32 %v509, %v296
      %v526 = vadd.f32 %v510, %v296
      %v527 = vadd.f32 %v511, %v296
      %v528 = vadd.f32 %v512, %v296
      %v529 = vadd.f32 %v513, %v296
      %v530 = vadd.f32 %v514, %v296
      %v531 = vadd.f32 %v515, %v296
      %v532 = vadd.f32 %v516, %v296
      %v533 = vadd.f32 %v517, %v296
      %v534 = vadd.f32 %v518, %v296
      %v535 = vadd.f32 %v519, %v296
      %v536 = vadd.f32 %v520, %v296
      %v537 = vmax.f32 %v521, 0.0
      %v538 = vmax.f32 %v522, 0.0
      %v539 = vmax.f32 %v523, 0.0
      %v540 = vmax.f32 %v524, 0.0
      %v541 = vmax.f32 %v525, 0.0
      %v542 = vmax.f32 %v526, 0.0
      %v543 = vmax.f32 %v527, 0.0
      %v544 = vmax.f32 %v528, 0.0
      %v545 = vmax.f32 %v529, 0.0
      %v546 = vmax.f32 %v530, 0.0
      %v547 = vmax.f32 %v531, 0.0
      %v548 = vmax.f32 %v532, 0.0
      %v549 = vmax.f32 %v533, 0.0
      %v550 = vmax.f32 %v534, 0.0
      %v551 = vmax.f32 %v535, 0.0
      %v552 = vmax.f32 %v536, 0.0
      %v553 = vmax.f32 %v489, %v537
      %v554 = vmax.f32 %v490, %v538
      %v555 = vmax.f32 %v491, %v539
      %v556 = vmax.f32 %v492, %v540
      %v557 = vmax.f32 %v493, %v541
      %v558 = vmax.f32 %v494, %v542
      %v559 = vmax.f32 %v495, %v543
      %v560 = vmax.f32 %v496, %v544
      %v561 = vmax.f32 %v497, %v545
      %v562 = vmax.f32 %v498, %v546
      %v563 = vmax.f32 %v499, %v547
      %v564 = vmax.f32 %v500, %v548
      %v565 = vmax.f32 %v501, %v549
      %v566 = vmax.f32 %v502, %v550
      %v567 = vmax.f32 %v503, %v551
      %v568 = vmax.f32 %v504, %v552
      %v569 = vmax.f32 %v553, %v554
      %v570 = vmax.f32 %v555, %v556
      %v571 = vmax.f32 %v557, %v558
      %v572 = vmax.f32 %v559, %v560
      %v573 = vmax.f32 %v561, %v562
      %v574 = vmax.f32 %v563, %v564
      %v575 = vmax.f32 %v565, %v566
      %v576 = vmax.f32 %v567, %v568
      %577 = vst [vmem:[%s218] sm:$0xff] %v569
      %578 = vst [vmem:[%s218 + $0x8] sm:$0xff] %v570
      %579 = vst [vmem:[%s218 + $0x10] sm:$0xff] %v571
      %580 = vst [vmem:[%s218 + $0x18] sm:$0xff] %v572
      %581 = vst [vmem:[%s218 + $0x20] sm:$0xff] %v573
      %582 = vst [vmem:[%s218 + $0x28] sm:$0xff] %v574
      %583 = vst [vmem:[%s218 + $0x30] sm:$0xff] %v575
      %584 = vst [vmem:[%s218 + $0x38] sm:$0xff] %v576
      %s585 = smul.u32 16, %s16
      %p586 = scmp.lt.s32.totalorder %s585, 31
      %s587 = scalar_select %p586, %s585, 31
      %s588 = smul.addr %s587, 2
      %s589 = smul.addr %s588, 8
      %s590 = scalar_lea.vmem %s3, %s589
      %s591 = smul.u32 8, %s16
      %p592 = scmp.lt.s32.totalorder %s591, 15
      %s593 = scalar_select %p592, %s591, 15
      %s594 = smul.addr %s593, 8
      %s595 = scalar_lea.vmem %s4, %s594
      // Predicated region
      $region33: #{contract_block.11} parent=31 // pred_check
        %p596 = pneg %p102
      $region34: #{contract_block.11} parent=31 // pred_check_branch
        %598 = sbr.rel (%p596) target = $region36
      $region35: #{contract_block.11} parent=31 // pred_region
        %s599 = smul.u32 16, %s16
      $region36: #{contract_block.11} parent=31 // pred_fallthru
        _
      // Predicated region
      $region37: #{contract_block.11} parent=31 // pred_check
        %p600 = pneg %p128
      $region38: #{contract_block.11} parent=31 // pred_check_branch
        %602 = sbr.rel (%p600) target = $region40
      $region39: #{contract_block.11} parent=31 // pred_region
        %s603 = smul.u32 8, %s16
      $region40: #{contract_block.11} parent=31 // pred_fallthru
        _
    $region32: #{contract_block.11} parent=5 // pred_fallthru
      _
    %p604 = scmp.le.s32.totalorder 2, %s11
    // Predicated region
    $region41: #{contract_block.11} parent=5 // pred_check
      %p605 = pneg %p604
    $region42: #{contract_block.11} parent=5 // pred_check_branch
      %607 = sbr.rel (%p605) target = $region44
    $region43: #{contract_block.11} parent=5 // pred_region
      %s608 = ssub.s32 %s11, 2
      // Predicated region
      $region45: #{contract_block.11} parent=43 // pred_check
        %p609 = pneg %p108
      $region46: #{contract_block.11} parent=43 // pred_check_branch
        %611 = sbr.rel (%p609) target = $region48
      $region47: #{contract_block.11} parent=43 // pred_region
        %s612 = smul.u32 16, %s17
        %p613 = scmp.lt.s32.totalorder %s612, 31
        %s614 = scalar_select %p613, %s612, 31
        %s615 = smul.addr %s614, 2
        %s616 = smul.addr %s615, 8
        %s617 = scalar_lea.vmem %s3, %s616
      $region48: #{contract_block.11} parent=43 // pred_fallthru
        _
      // Predicated region
      $region49: #{contract_block.11} parent=43 // pred_check
        %p618 = pneg %p134
      $region50: #{contract_block.11} parent=43 // pred_check_branch
        %620 = sbr.rel (%p618) target = $region52
      $region51: #{contract_block.11} parent=43 // pred_region
        %s621 = smul.u32 8, %s17
        %p622 = scmp.lt.s32.totalorder %s621, 15
        %s623 = scalar_select %p622, %s621, 15
        %s624 = smul.addr %s623, 8
        %s625 = scalar_lea.vmem %s4, %s624
      $region52: #{contract_block.11} parent=43 // pred_fallthru
        _
    $region44: #{contract_block.11} parent=5 // pred_fallthru
      _
  $region6: #{contract_block.11} parent=0 // loop_footer
    %s15 = sadd.s32 1, %s11
  $region7: #{contract_block.11} parent=0 // loop_footer_branch
    %10 = sbr.rel target = $region3
  $region8: #{contract_block.11} parent=0 // loop_exit
    _

// kernel: contract_block.12
$region0: #{contract_block.12}
  #allocation0 [shape = 'u32[]', space=smem, size = 0x4, offset = 0x4, fixed_abs, tag = 'smem constant byte address 0x4 - core index']
  #allocation1 [shape = 'u32[144,128]{1,0:T(1,128)}', space=vmem, size = 0x12000, scoped, tag = 'internal scratch']
  %s0 = inlined_call_operand.vmem [shape: bf16[128,128], index: 0, kind: input, shape index: {}]
  %s1 = inlined_call_operand.vmem [shape: bf16[128,128], index: 1, kind: input, shape index: {}]
  %s2 = inlined_call_operand.vmem [shape: f32[128,128], index: 2, kind: output, shape index: {0}]
  %s3 = inlined_call_operand.vmem [shape: f32[2,1,128], index: 3, kind: output, shape index: {1}]
  %s4 = inlined_call_operand.vmem [shape: f32[2,1,128], index: 4, kind: output, shape index: {2}]
  %5 = xla_tuple %s2, %s3, %s4
  %s6 = sld [smem:[#allocation0]]
  $region57: #{contract_block.12} parent=0
    _
  %s8 = ssub.s32 1, %s6
  %s9 = scalar_select 0, %s8, %s6
  loop: start=0, step=1, limit=4
  $region2: #{contract_block.12} parent=0 // loop_pre_header
    _
  $region3: #{contract_block.12} parent=0 // loop_header
    %s11 = sphi 0, %s15
    %p12 = scmp.ge.s32.totalorder %s11, 4
    %s21 = sphi 0, %s23
    %s24 = sphi 0, %s21
    %s25 = sphi 0, %s24
    %s41 = sphi 0, %s25
    %s45 = sphi 0, %s45
    %s47 = sphi 0, %s45
    %s48 = sphi 0, %s47
    %s62 = sphi 0, %s48
    %s68 = sphi 0, %s70
    %s71 = sphi 0, %s68
    %s72 = sphi 0, %s71
    %s88 = sphi 0, %s72
    %s94 = sphi 0, %s96
    %s97 = sphi 0, %s94
    %s98 = sphi 0, %s97
    %s114 = sphi 0, %s98
    %s120 = sphi 0, %s122
    %s123 = sphi 0, %s120
    %s124 = sphi 0, %s123
    %s140 = sphi 0, %s124
  $region4: #{contract_block.12} parent=0 // loop_header_branch
    %14 = sbr.rel (%p12) target = $region8
  $region5: #{contract_block.12} parent=0 // loop_body
    %s16 = ssub.s32 %s11, 1
    %s17 = ssub.s32 %s11, 2
    %s18 = sadd.s32 %s11, 1
    %s19 = ssub.s32 %s11, %s18
    %p20 = scmp.eq.s32.totalorder %s19, 0
    %s22 = sadd.s32 %s21, 1
    %s23 = scalar_select %p20, %s21, %s22
    %p26 = pneg %p20
    %p27 = scmp.eq.s32.totalorder %s11, 1
    %p28 = por %p26, %p27
    %p29 = scmp.ne.s32.totalorder %s21, %s24
    %p30 = scmp.eq.s32.totalorder %s11, 0
    %p31 = por %p29, %p30
    %p32 = scmp.ne.s32.totalorder %s21, %s24
    %p33 = scmp.eq.s32.totalorder %s16, 1
    %p34 = por %p32, %p33
    %p35 = scmp.ne.s32.totalorder %s24, %s25
    %p36 = scmp.eq.s32.totalorder %s16, 0
    %p37 = por %p35, %p36
    %p38 = scmp.ne.s32.totalorder %s24, %s25
    %p39 = scmp.eq.s32.totalorder %s17, 1
    %p40 = por %p38, %p39
    %p42 = scmp.ne.s32.totalorder %s25, %s41
    %p43 = scmp.eq.s32.totalorder %s17, 0
    %p44 = por %p42, %p43
    %s46 = sadd.s32 %s45, 1
    %p49 = scmp.eq.s32.totalorder %s11, 1
    %p50 = scmp.ne.s32.totalorder %s45, %s47
    %p51 = scmp.eq.s32.totalorder %s11, 0
    %p52 = por %p50, %p51
    %p53 = scmp.ne.s32.totalorder %s45, %s47
    %p54 = scmp.eq.s32.totalorder %s16, 1
    %p55 = por %p53, %p54
    %p56 = scmp.ne.s32.totalorder %s47, %s48
    %p57 = scmp.eq.s32.totalorder %s16, 0
    %p58 = por %p56, %p57
    %p59 = scmp.ne.s32.totalorder %s47, %s48
    %p60 = scmp.eq.s32.totalorder %s17, 1
    %p61 = por %p59, %p60
    %p63 = scmp.ne.s32.totalorder %s48, %s62
    %p64 = scmp.eq.s32.totalorder %s17, 0
    %p65 = por %p63, %p64
    %s66 = ssub.s32 %s11, %s18
    %p67 = scmp.eq.s32.totalorder %s66, 0
    %s69 = sadd.s32 %s68, 1
    %s70 = scalar_select %p67, %s68, %s69
    %p73 = pneg %p67
    %p74 = scmp.eq.s32.totalorder %s11, 1
    %p75 = por %p73, %p74
    %p76 = scmp.ne.s32.totalorder %s68, %s71
    %p77 = scmp.eq.s32.totalorder %s11, 0
    %p78 = por %p76, %p77
    %p79 = scmp.ne.s32.totalorder %s68, %s71
    %p80 = scmp.eq.s32.totalorder %s16, 1
    %p81 = por %p79, %p80
    %p82 = scmp.ne.s32.totalorder %s71, %s72
    %p83 = scmp.eq.s32.totalorder %s16, 0
    %p84 = por %p82, %p83
    %p85 = scmp.ne.s32.totalorder %s71, %s72
    %p86 = scmp.eq.s32.totalorder %s17, 1
    %p87 = por %p85, %p86
    %p89 = scmp.ne.s32.totalorder %s72, %s88
    %p90 = scmp.eq.s32.totalorder %s17, 0
    %p91 = por %p89, %p90
    %s92 = ssub.s32 %s11, %s18
    %p93 = scmp.eq.s32.totalorder %s92, 0
    %s95 = sadd.s32 %s94, 1
    %s96 = scalar_select %p93, %s94, %s95
    %p99 = pneg %p93
    %p100 = scmp.eq.s32.totalorder %s11, 1
    %p101 = por %p99, %p100
    %p102 = scmp.ne.s32.totalorder %s94, %s97
    %p103 = scmp.eq.s32.totalorder %s11, 0
    %p104 = por %p102, %p103
    %p105 = scmp.ne.s32.totalorder %s94, %s97
    %p106 = scmp.eq.s32.totalorder %s16, 1
    %p107 = por %p105, %p106
    %p108 = scmp.ne.s32.totalorder %s97, %s98
    %p109 = scmp.eq.s32.totalorder %s16, 0
    %p110 = por %p108, %p109
    %p111 = scmp.ne.s32.totalorder %s97, %s98
    %p112 = scmp.eq.s32.totalorder %s17, 1
    %p113 = por %p111, %p112
    %p115 = scmp.ne.s32.totalorder %s98, %s114
    %p116 = scmp.eq.s32.totalorder %s17, 0
    %p117 = por %p115, %p116
    %s118 = ssub.s32 %s11, %s18
    %p119 = scmp.eq.s32.totalorder %s118, 0
    %s121 = sadd.s32 %s120, 1
    %s122 = scalar_select %p119, %s120, %s121
    %p125 = pneg %p119
    %p126 = scmp.eq.s32.totalorder %s11, 1
    %p127 = por %p125, %p126
    %p128 = scmp.ne.s32.totalorder %s120, %s123
    %p129 = scmp.eq.s32.totalorder %s11, 0
    %p130 = por %p128, %p129
    %p131 = scmp.ne.s32.totalorder %s120, %s123
    %p132 = scmp.eq.s32.totalorder %s16, 1
    %p133 = por %p131, %p132
    %p134 = scmp.ne.s32.totalorder %s123, %s124
    %p135 = scmp.eq.s32.totalorder %s16, 0
    %p136 = por %p134, %p135
    %p137 = scmp.ne.s32.totalorder %s123, %s124
    %p138 = scmp.eq.s32.totalorder %s17, 1
    %p139 = por %p137, %p138
    %p141 = scmp.ne.s32.totalorder %s124, %s140
    %p142 = scmp.eq.s32.totalorder %s17, 0
    %p143 = por %p141, %p142
    %p144 = scmp.le.s32.totalorder 1, %s11
    %p145 = scmp.lt.s32.totalorder %s11, 3
    %p146 = pnand %p144, %p145
    %p147 = pneg %p146
    // Predicated region
    $region9: #{contract_block.12} parent=5 // pred_check
      _
    $region10: #{contract_block.12} parent=5 // pred_check_branch
      %149 = sbr.rel (%p146) target = $region12
    $region11: #{contract_block.12} parent=5 // pred_region
      %s150 = ssub.s32 %s11, 1
      // Predicated region
      $region13: #{contract_block.12} parent=11 // pred_check
        %p151 = pneg %p58
      $region14: #{contract_block.12} parent=11 // pred_check_branch
        %153 = sbr.rel (%p151) target = $region16
      $region15: #{contract_block.12} parent=11 // pred_region
        _
      $region16: #{contract_block.12} parent=11 // pred_fallthru
        _
    $region12: #{contract_block.12} parent=5 // pred_fallthru
      _
    %p154 = scmp.lt.s32.totalorder %s11, 2
    // Predicated region
    $region17: #{contract_block.12} parent=5 // pred_check
      %p155 = pneg %p154
    $region18: #{contract_block.12} parent=5 // pred_check_branch
      %157 = sbr.rel (%p155) target = $region20
    $region19: #{contract_block.12} parent=5 // pred_region
      // Predicated region
      $region21: #{contract_block.12} parent=19 // pred_check
        %p158 = pneg %p31
      $region22: #{contract_block.12} parent=19 // pred_check_branch
        %160 = sbr.rel (%p158) target = $region24
      $region23: #{contract_block.12} parent=19 // pred_region
        %s161 = smul.u32 8, %s11
        %p162 = scmp.lt.s32.totalorder %s161, 15
        %s163 = scalar_select %p162, %s161, 15
        %s164 = smul.addr %s163, 4
        %s165 = scalar_lea.vmem %s0, %s164
        %s166 = smul.u32 8, %s11
      $region24: #{contract_block.12} parent=19 // pred_fallthru
        _
    $region20: #{contract_block.12} parent=5 // pred_fallthru
      _
    %p167 = scmp.le.s32.totalorder 1, %s11
    %p168 = scmp.lt.s32.totalorder %s11, 3
    %p169 = pnand %p167, %p168
    %p170 = pneg %p169
    // Predicated region
    $region25: #{contract_block.12} parent=5 // pred_check
      _
    $region26: #{contract_block.12} parent=5 // pred_check_branch
      %172 = sbr.rel (%p169) target = $region28
    $region27: #{contract_block.12} parent=5 // pred_region
      %s173 = ssub.s32 %s11, 1
      %s174 = smul.u32 8, %s16
      %p175 = scmp.lt.s32.totalorder %s174, 15
      %s176 = scalar_select %p175, %s174, 15
      %s177 = smul.addr %s176, 4
      %s178 = scalar_lea.vmem %s0, %s177
      %p179 = pneg %p37
      %p180 = pneg %p34
      %p181 = pneg %p58
      %p182 = pneg %p55
      %p183 = pneg %p84
      %p184 = pneg %p81
      %s185 = smul.u32 8, %s16
      %p186 = scmp.lt.s32.totalorder %s185, 15
      %s187 = scalar_select %p186, %s185, 15
      %s188 = smul.addr %s187, 8
      %s189 = scalar_lea.vmem %s2, %s188
      %p190 = pneg %p110
      %p191 = pneg %p107
      %p192 = scmp.lt.s32.totalorder %s16, 1
      %s193 = scalar_select %p192, %s16, 1
      %s194 = scalar_lea.vmem %s3, %s193
      %p195 = pneg %p136
      %p196 = pneg %p133
      %p197 = scmp.lt.s32.totalorder %s16, 1
      %s198 = scalar_select %p197, %s16, 1
      %s199 = scalar_lea.vmem %s4, %s198
      %s200 = smul.u32 8, %s16
      %p201 = scmp.lt.s32.totalorder %s200, 15
      %s202 = scalar_select %p201, %s200, 15
      %s203 = smul.addr %s202, 4
      %s204 = scalar_lea.vmem %s0, %s203
      %s205 = smul.u32 8, %s16
      %s206 = smul.u32 8, %s16
      %p207 = scmp.lt.s32.totalorder %s206, 15
      %s208 = scalar_select %p207, %s206, 15
      %s209 = smul.addr %s208, 8
      %s210 = scalar_lea.vmem %s2, %s209
      %s211 = smul.u32 8, %s16
      %p212 = scmp.lt.s32.totalorder %s16, 1
      %s213 = scalar_select %p212, %s16, 1
      %s214 = scalar_lea.vmem %s3, %s213
      %p215 = scmp.lt.s32.totalorder %s16, 1
      %s216 = scalar_select %p215, %s16, 1
      %s217 = scalar_lea.vmem %s4, %s216
      %v219 = vld [vmem:[%s204] sm:$0xf]
      %v220 = vld [vmem:[%s204 + $0x4] sm:$0xf]
      %v221 = vld [vmem:[%s204 + $0x8] sm:$0xf]
      %v222 = vld [vmem:[%s204 + $0xc] sm:$0xf]
      %v223 = vld [vmem:[%s204 + $0x10] sm:$0xf]
      %v224 = vld [vmem:[%s204 + $0x14] sm:$0xf]
      %v225 = vld [vmem:[%s204 + $0x18] sm:$0xf]
      %v226 = vld [vmem:[%s204 + $0x1c] sm:$0xf]
      %v227 = vld [vmem:[%s1] sm:$0xf]
      %v228 = vld [vmem:[%s1 + $0x4] sm:$0xf]
      %v229 = vld [vmem:[%s1 + $0x8] sm:$0xf]
      %v230 = vld [vmem:[%s1 + $0xc] sm:$0xf]
      %v231 = vld [vmem:[%s1 + $0x10] sm:$0xf]
      %v232 = vld [vmem:[%s1 + $0x14] sm:$0xf]
      %v233 = vld [vmem:[%s1 + $0x18] sm:$0xf]
      %v234 = vld [vmem:[%s1 + $0x1c] sm:$0xf]
      %v235 = vld [vmem:[%s1 + $0x20] sm:$0xf]
      %v236 = vld [vmem:[%s1 + $0x24] sm:$0xf]
      %v237 = vld [vmem:[%s1 + $0x28] sm:$0xf]
      %v238 = vld [vmem:[%s1 + $0x2c] sm:$0xf]
      %v239 = vld [vmem:[%s1 + $0x30] sm:$0xf]
      %v240 = vld [vmem:[%s1 + $0x34] sm:$0xf]
      %v241 = vld [vmem:[%s1 + $0x38] sm:$0xf]
      %v242 = vld [vmem:[%s1 + $0x3c] sm:$0xf]
      %v251 = vunpack.c.l.b16 %v219
      %v252 = vunpack.c.l.b16 %v220
      %v253 = vunpack.c.l.b16 %v221
      %v254 = vunpack.c.l.b16 %v222
      %v255 = vunpack.c.l.b16 %v223
      %v256 = vunpack.c.l.b16 %v224
      %v257 = vunpack.c.l.b16 %v225
      %v258 = vunpack.c.l.b16 %v226
      %v259 = vpack.c.b16 %v252, %v251
      %v260 = vpack.c.b16 %v254, %v253
      %v261 = vpack.c.b16 %v256, %v255
      %v262 = vpack.c.b16 %v258, %v257
      %v283 = vunpack.c.l.b16 %v227
      %v284 = vunpack.c.l.b16 %v228
      %v285 = vunpack.c.l.b16 %v229
      %v286 = vunpack.c.l.b16 %v230
      %v287 = vunpack.c.l.b16 %v231
      %v288 = vunpack.c.l.b16 %v232
      %v289 = vunpack.c.l.b16 %v233
      %v290 = vunpack.c.l.b16 %v234
      %v291 = vunpack.c.l.b16 %v235
      %v292 = vunpack.c.l.b16 %v236
      %v293 = vunpack.c.l.b16 %v237
      %v294 = vunpack.c.l.b16 %v238
      %v295 = vunpack.c.l.b16 %v239
      %v296 = vunpack.c.l.b16 %v240
      %v297 = vunpack.c.l.b16 %v241
      %v298 = vunpack.c.l.b16 %v242
      %v299 = vpack.c.b16 %v284, %v283
      %v300 = vpack.c.b16 %v286, %v285
      %v301 = vpack.c.b16 %v288, %v287
      %v302 = vpack.c.b16 %v290, %v289
      %v303 = vpack.c.b16 %v292, %v291
      %v304 = vpack.c.b16 %v294, %v293
      %v305 = vpack.c.b16 %v296, %v295
      %v306 = vpack.c.b16 %v298, %v297
      %315 = vmatprep.subr.bf16.mxu0 0
      %316 = vmatpush1.bf16.msra.mxu0 %v306
      %317 = vmatprep.subr.bf16.mxu0 0
      %318 = vmatpush1.bf16.msra.mxu0 %v305
      %319 = vmatprep.subr.bf16.mxu0 0
      %320 = vmatpush1.bf16.msra.mxu0 %v304
      %321 = vmatprep.subr.bf16.mxu0 0
      %322 = vmatpush1.bf16.msra.mxu0 %v303
      %323 = vmatprep.subr.bf16.mxu0 0
      %324 = vmatpush1.bf16.msra.mxu0 %v302
      %325 = vmatprep.subr.bf16.mxu0 0
      %326 = vmatpush1.bf16.msra.mxu0 %v301
      %327 = vmatprep.subr.bf16.mxu0 0
      %328 = vmatpush1.bf16.msra.mxu0 %v300
      %329 = vmatprep.subr.bf16.mxu0 0
      %330 = vmatpush1.bf16.msra.mxu0 %v299
      %331 = vmatprep.subr.bf16.mxu0 0
      %332 = vmatpush2.bf16.msra.mxu0 0
      %333 = vmatprep.subr.bf16.mxu0 0
      %334 = vmatpush2.bf16.msra.mxu0 0
      %335 = vmatprep.subr.bf16.mxu0 0
      %336 = vmatpush2.bf16.msra.mxu0 0
      %337 = vmatprep.subr.bf16.mxu0 0
      %338 = vmatpush2.bf16.msra.mxu0 0
      %339 = vmatprep.subr.bf16.mxu0 0
      %340 = vmatpush2.bf16.msra.mxu0 0
      %341 = vmatprep.subr.bf16.mxu0 0
      %342 = vmatpush2.bf16.msra.mxu0 0
      %343 = vmatprep.subr.bf16.mxu0 0
      %344 = vmatpush2.bf16.msra.mxu0 0
      %345 = vmatprep.subr.bf16.mxu0 0
      %346 = vmatpush2.bf16.msra.mxu0 0
      %347 = vmatprep.mubr.bf16.mxu0 0
      %348 = vmatmul.mubr.bf16.gmra.mxu0 %v259
      %v349 = vpop.f32.mrf.mxu0
      %v350 = vadd.f32 0.0, %v349
      %v351 = vpop.f32.mrf.mxu0
      %v352 = vpop.f32.mrf.mxu0
      %v353 = vadd.f32 0.0, %v352
      %v354 = vpop.f32.mrf.mxu0
      %355 = vmatprep.mubr.bf16.mxu0 0
      %356 = vmatmul.mubr.bf16.gmra.mxu0 %v260
      %v357 = vpop.f32.mrf.mxu0
      %v358 = vadd.f32 0.0, %v357
      %v359 = vpop.f32.mrf.mxu0
      %v360 = vpop.f32.mrf.mxu0
      %v361 = vadd.f32 0.0, %v360
      %v362 = vpop.f32.mrf.mxu0
      %363 = vmatprep.mubr.bf16.mxu0 0
      %364 = vmatmul.mubr.bf16.gmra.mxu0 %v261
      %v365 = vpop.f32.mrf.mxu0
      %v366 = vadd.f32 0.0, %v365
      %v367 = vpop.f32.mrf.mxu0
      %v368 = vpop.f32.mrf.mxu0
      %v369 = vadd.f32 0.0, %v368
      %v370 = vpop.f32.mrf.mxu0
      %371 = vmatprep.mubr.bf16.mxu0 0
      %372 = vmatmul.mubr.bf16.gmra.mxu0 %v262
      %v373 = vpop.f32.mrf.mxu0
      %v374 = vadd.f32 0.0, %v373
      %v375 = vpop.f32.mrf.mxu0
      %v376 = vpop.f32.mrf.mxu0
      %v377 = vadd.f32 0.0, %v376
      %v378 = vpop.f32.mrf.mxu0
      %379 = vdwg.mxu0
      %380 = vst [vmem:[%s210] sm:$0xff] %v350
      %381 = vst [vmem:[%s210 + $0x8] sm:$0xff] %v353
      %382 = vst [vmem:[%s210 + $0x10] sm:$0xff] %v358
      %383 = vst [vmem:[%s210 + $0x18] sm:$0xff] %v361
      %384 = vst [vmem:[%s210 + $0x20] sm:$0xff] %v366
      %385 = vst [vmem:[%s210 + $0x28] sm:$0xff] %v369
      %386 = vst [vmem:[%s210 + $0x30] sm:$0xff] %v374
      %387 = vst [vmem:[%s210 + $0x38] sm:$0xff] %v377
      %v388 = vadd.f32 %v350, %v353
      %v389 = vadd.f32 %v388, %v358
      %v390 = vadd.f32 %v389, %v361
      %v391 = vadd.f32 %v390, %v366
      %v392 = vadd.f32 %v391, %v369
      %v393 = vadd.f32 %v392, %v374
      %v394 = vadd.f32 %v393, %v377
      %v395 = vrot.slane %v394, 4
      %v396 = vadd.f32 %v394, %v395
      %v397 = vrot.slane %v396, 2
      %v398 = vadd.f32 %v396, %v397
      %v399 = vrot.slane %v398, 1
      %v400 = vadd.f32 %v398, %v399
      %401 = vst [vmem:[%s214] sm:$0x1] %v400
      %v402 = vmul.f32 %v350, %v350
      %v403 = vmul.f32 %v353, %v353
      %v404 = vmul.f32 %v358, %v358
      %v405 = vmul.f32 %v361, %v361
      %v406 = vmul.f32 %v366, %v366
      %v407 = vmul.f32 %v369, %v369
      %v408 = vmul.f32 %v374, %v374
      %v409 = vmul.f32 %v377, %v377
      %v410 = vadd.f32 %v402, %v403
      %v411 = vadd.f32 %v410, %v404
      %v412 = vadd.f32 %v411, %v405
      %v413 = vadd.f32 %v412, %v406
      %v414 = vadd.f32 %v413, %v407
      %v415 = vadd.f32 %v414, %v408
      %v416 = vadd.f32 %v415, %v409
      %v417 = vrot.slane %v416, 4
      %v418 = vadd.f32 %v416, %v417
      %v419 = vrot.slane %v418, 2
      %v420 = vadd.f32 %v418, %v419
      %v421 = vrot.slane %v420, 1
      %v422 = vadd.f32 %v420, %v421
      %423 = vst [vmem:[%s217] sm:$0x1] %v422
      %s424 = smul.u32 8, %s16
      %p425 = scmp.lt.s32.totalorder %s424, 15
      %s426 = scalar_select %p425, %s424, 15
      %s427 = smul.addr %s426, 8
      %s428 = scalar_lea.vmem %s2, %s427
      %p429 = scmp.lt.s32.totalorder %s16, 1
      %s430 = scalar_select %p429, %s16, 1
      %s431 = scalar_lea.vmem %s3, %s430
      %p432 = scmp.lt.s32.totalorder %s16, 1
      %s433 = scalar_select %p432, %s16, 1
      %s434 = scalar_lea.vmem %s4, %s433
      // Predicated region
      $region29: #{contract_block.12} parent=27 // pred_check
        %p435 = pneg %p81
      $region30: #{contract_block.12} parent=27 // pred_check_branch
        %437 = sbr.rel (%p435) target = $region32
      $region31: #{contract_block.12} parent=27 // pred_region
        %s438 = smul.u32 8, %s16
      $region32: #{contract_block.12} parent=27 // pred_fallthru
        _
      // Predicated region
      $region33: #{contract_block.12} parent=27 // pred_check
        %p439 = pneg %p107
      $region34: #{contract_block.12} parent=27 // pred_check_branch
        %441 = sbr.rel (%p439) target = $region36
      $region35: #{contract_block.12} parent=27 // pred_region
        _
      $region36: #{contract_block.12} parent=27 // pred_fallthru
        _
      // Predicated region
      $region37: #{contract_block.12} parent=27 // pred_check
        %p442 = pneg %p133
      $region38: #{contract_block.12} parent=27 // pred_check_branch
        %444 = sbr.rel (%p442) target = $region40
      $region39: #{contract_block.12} parent=27 // pred_region
        _
      $region40: #{contract_block.12} parent=27 // pred_fallthru
        _
    $region28: #{contract_block.12} parent=5 // pred_fallthru
      _
    %p445 = scmp.le.s32.totalorder 2, %s11
    // Predicated region
    $region41: #{contract_block.12} parent=5 // pred_check
      %p446 = pneg %p445
    $region42: #{contract_block.12} parent=5 // pred_check_branch
      %448 = sbr.rel (%p446) target = $region44
    $region43: #{contract_block.12} parent=5 // pred_region
      %s449 = ssub.s32 %s11, 2
      // Predicated region
      $region45: #{contract_block.12} parent=43 // pred_check
        %p450 = pneg %p87
      $region46: #{contract_block.12} parent=43 // pred_check_branch
        %452 = sbr.rel (%p450) target = $region48
      $region47: #{contract_block.12} parent=43 // pred_region
        %s453 = smul.u32 8, %s17
        %p454 = scmp.lt.s32.totalorder %s453, 15
        %s455 = scalar_select %p454, %s453, 15
        %s456 = smul.addr %s455, 8
        %s457 = scalar_lea.vmem %s2, %s456
      $region48: #{contract_block.12} parent=43 // pred_fallthru
        _
      // Predicated region
      $region49: #{contract_block.12} parent=43 // pred_check
        %p458 = pneg %p113
      $region50: #{contract_block.12} parent=43 // pred_check_branch
        %460 = sbr.rel (%p458) target = $region52
      $region51: #{contract_block.12} parent=43 // pred_region
        %p461 = scmp.lt.s32.totalorder %s17, 1
        %s462 = scalar_select %p461, %s17, 1
        %s463 = scalar_lea.vmem %s3, %s462
      $region52: #{contract_block.12} parent=43 // pred_fallthru
        _
      // Predicated region
      $region53: #{contract_block.12} parent=43 // pred_check
        %p464 = pneg %p139
      $region54: #{contract_block.12} parent=43 // pred_check_branch
        %466 = sbr.rel (%p464) target = $region56
      $region55: #{contract_block.12} parent=43 // pred_region
        %p467 = scmp.lt.s32.totalorder %s17, 1
        %s468 = scalar_select %p467, %s17, 1
        %s469 = scalar_lea.vmem %s4, %s468
      $region56: #{contract_block.12} parent=43 // pred_fallthru
        _
    $region44: #{contract_block.12} parent=5 // pred_fallthru
      _
  $region6: #{contract_block.12} parent=0 // loop_footer
    %s15 = sadd.s32 1, %s11
  $region7: #{contract_block.12} parent=0 // loop_footer_branch
    %10 = sbr.rel target = $region3
  $region8: #{contract_block.12} parent=0 // loop_exit
    _

// kernel: contract_block.13
$region0: #{contract_block.13}
  #allocation0 [shape = 'u32[]', space=smem, size = 0x4, offset = 0x4, fixed_abs, tag = 'smem constant byte address 0x4 - core index']
  #allocation1 [shape = 'u32[144,128]{1,0:T(1,128)}', space=vmem, size = 0x12000, scoped, tag = 'internal scratch']
  %s0 = inlined_call_operand.vmem [shape: f32[16,8,128], index: 0, kind: input, shape index: {}]
  %s1 = inlined_call_operand.vmem [shape: f32[1,1,128], index: 1, kind: input, shape index: {}]
  %s2 = inlined_call_operand.vmem [shape: f32[1,1,128], index: 2, kind: input, shape index: {}]
  %s3 = inlined_call_operand.vmem [shape: f32[16,8,128], index: 3, kind: output, shape index: {}]
  %s4 = sld [smem:[#allocation0]]
  $region45: #{contract_block.13} parent=0
    _
  %s6 = ssub.s32 1, %s4
  %s7 = scalar_select 0, %s6, %s4
  loop: start=0, step=1, limit=4
  $region2: #{contract_block.13} parent=0 // loop_pre_header
    _
  $region3: #{contract_block.13} parent=0 // loop_header
    %s9 = sphi 0, %s13
    %p10 = scmp.ge.s32.totalorder %s9, 4
    %s19 = sphi 0, %s21
    %s22 = sphi 0, %s19
    %s23 = sphi 0, %s22
    %s39 = sphi 0, %s23
    %s43 = sphi 0, %s43
    %s45 = sphi 0, %s43
    %s46 = sphi 0, %s45
    %s60 = sphi 0, %s46
    %s64 = sphi 0, %s64
    %s66 = sphi 0, %s64
    %s67 = sphi 0, %s66
    %s81 = sphi 0, %s67
    %s87 = sphi 0, %s89
    %s90 = sphi 0, %s87
    %s91 = sphi 0, %s90
    %s107 = sphi 0, %s91
  $region4: #{contract_block.13} parent=0 // loop_header_branch
    %12 = sbr.rel (%p10) target = $region8
  $region5: #{contract_block.13} parent=0 // loop_body
    %s14 = ssub.s32 %s9, 1
    %s15 = ssub.s32 %s9, 2
    %s16 = sadd.s32 %s9, 1
    %s17 = ssub.s32 %s9, %s16
    %p18 = scmp.eq.s32.totalorder %s17, 0
    %s20 = sadd.s32 %s19, 1
    %s21 = scalar_select %p18, %s19, %s20
    %p24 = pneg %p18
    %p25 = scmp.eq.s32.totalorder %s9, 1
    %p26 = por %p24, %p25
    %p27 = scmp.ne.s32.totalorder %s19, %s22
    %p28 = scmp.eq.s32.totalorder %s9, 0
    %p29 = por %p27, %p28
    %p30 = scmp.ne.s32.totalorder %s19, %s22
    %p31 = scmp.eq.s32.totalorder %s14, 1
    %p32 = por %p30, %p31
    %p33 = scmp.ne.s32.totalorder %s22, %s23
    %p34 = scmp.eq.s32.totalorder %s14, 0
    %p35 = por %p33, %p34
    %p36 = scmp.ne.s32.totalorder %s22, %s23
    %p37 = scmp.eq.s32.totalorder %s15, 1
    %p38 = por %p36, %p37
    %p40 = scmp.ne.s32.totalorder %s23, %s39
    %p41 = scmp.eq.s32.totalorder %s15, 0
    %p42 = por %p40, %p41
    %s44 = sadd.s32 %s43, 1
    %p47 = scmp.eq.s32.totalorder %s9, 1
    %p48 = scmp.ne.s32.totalorder %s43, %s45
    %p49 = scmp.eq.s32.totalorder %s9, 0
    %p50 = por %p48, %p49
    %p51 = scmp.ne.s32.totalorder %s43, %s45
    %p52 = scmp.eq.s32.totalorder %s14, 1
    %p53 = por %p51, %p52
    %p54 = scmp.ne.s32.totalorder %s45, %s46
    %p55 = scmp.eq.s32.totalorder %s14, 0
    %p56 = por %p54, %p55
    %p57 = scmp.ne.s32.totalorder %s45, %s46
    %p58 = scmp.eq.s32.totalorder %s15, 1
    %p59 = por %p57, %p58
    %p61 = scmp.ne.s32.totalorder %s46, %s60
    %p62 = scmp.eq.s32.totalorder %s15, 0
    %p63 = por %p61, %p62
    %s65 = sadd.s32 %s64, 1
    %p68 = scmp.eq.s32.totalorder %s9, 1
    %p69 = scmp.ne.s32.totalorder %s64, %s66
    %p70 = scmp.eq.s32.totalorder %s9, 0
    %p71 = por %p69, %p70
    %p72 = scmp.ne.s32.totalorder %s64, %s66
    %p73 = scmp.eq.s32.totalorder %s14, 1
    %p74 = por %p72, %p73
    %p75 = scmp.ne.s32.totalorder %s66, %s67
    %p76 = scmp.eq.s32.totalorder %s14, 0
    %p77 = por %p75, %p76
    %p78 = scmp.ne.s32.totalorder %s66, %s67
    %p79 = scmp.eq.s32.totalorder %s15, 1
    %p80 = por %p78, %p79
    %p82 = scmp.ne.s32.totalorder %s67, %s81
    %p83 = scmp.eq.s32.totalorder %s15, 0
    %p84 = por %p82, %p83
    %s85 = ssub.s32 %s9, %s16
    %p86 = scmp.eq.s32.totalorder %s85, 0
    %s88 = sadd.s32 %s87, 1
    %s89 = scalar_select %p86, %s87, %s88
    %p92 = pneg %p86
    %p93 = scmp.eq.s32.totalorder %s9, 1
    %p94 = por %p92, %p93
    %p95 = scmp.ne.s32.totalorder %s87, %s90
    %p96 = scmp.eq.s32.totalorder %s9, 0
    %p97 = por %p95, %p96
    %p98 = scmp.ne.s32.totalorder %s87, %s90
    %p99 = scmp.eq.s32.totalorder %s14, 1
    %p100 = por %p98, %p99
    %p101 = scmp.ne.s32.totalorder %s90, %s91
    %p102 = scmp.eq.s32.totalorder %s14, 0
    %p103 = por %p101, %p102
    %p104 = scmp.ne.s32.totalorder %s90, %s91
    %p105 = scmp.eq.s32.totalorder %s15, 1
    %p106 = por %p104, %p105
    %p108 = scmp.ne.s32.totalorder %s91, %s107
    %p109 = scmp.eq.s32.totalorder %s15, 0
    %p110 = por %p108, %p109
    %p111 = scmp.le.s32.totalorder 1, %s9
    %p112 = scmp.lt.s32.totalorder %s9, 3
    %p113 = pnand %p111, %p112
    %p114 = pneg %p113
    // Predicated region
    $region9: #{contract_block.13} parent=5 // pred_check
      _
    $region10: #{contract_block.13} parent=5 // pred_check_branch
      %116 = sbr.rel (%p113) target = $region12
    $region11: #{contract_block.13} parent=5 // pred_region
      %s117 = ssub.s32 %s9, 1
      // Predicated region
      $region13: #{contract_block.13} parent=11 // pred_check
        %p118 = pneg %p56
      $region14: #{contract_block.13} parent=11 // pred_check_branch
        %120 = sbr.rel (%p118) target = $region16
      $region15: #{contract_block.13} parent=11 // pred_region
        _
      $region16: #{contract_block.13} parent=11 // pred_fallthru
        _
      // Predicated region
      $region17: #{contract_block.13} parent=11 // pred_check
        %p121 = pneg %p77
      $region18: #{contract_block.13} parent=11 // pred_check_branch
        %123 = sbr.rel (%p121) target = $region20
      $region19: #{contract_block.13} parent=11 // pred_region
        _
      $region20: #{contract_block.13} parent=11 // pred_fallthru
        _
    $region12: #{contract_block.13} parent=5 // pred_fallthru
      _
    %p124 = scmp.lt.s32.totalorder %s9, 2
    // Predicated region
    $region21: #{contract_block.13} parent=5 // pred_check
      %p125 = pneg %p124
    $region22: #{contract_block.13} parent=5 // pred_check_branch
      %127 = sbr.rel (%p125) target = $region24
    $region23: #{contract_block.13} parent=5 // pred_region
      // Predicated region
      $region25: #{contract_block.13} parent=23 // pred_check
        %p128 = pneg %p29
      $region26: #{contract_block.13} parent=23 // pred_check_branch
        %130 = sbr.rel (%p128) target = $region28
      $region27: #{contract_block.13} parent=23 // pred_region
        %s131 = smul.u32 8, %s9
        %p132 = scmp.lt.s32.totalorder %s131, 15
        %s133 = scalar_select %p132, %s131, 15
        %s134 = smul.addr %s133, 8
        %s135 = scalar_lea.vmem %s0, %s134
        %s136 = smul.u32 8, %s9
      $region28: #{contract_block.13} parent=23 // pred_fallthru
        _
    $region24: #{contract_block.13} parent=5 // pred_fallthru
      _
    %p137 = scmp.le.s32.totalorder 1, %s9
    %p138 = scmp.lt.s32.totalorder %s9, 3
    %p139 = pnand %p137, %p138
    %p140 = pneg %p139
    // Predicated region
    $region29: #{contract_block.13} parent=5 // pred_check
      _
    $region30: #{contract_block.13} parent=5 // pred_check_branch
      %142 = sbr.rel (%p139) target = $region32
    $region31: #{contract_block.13} parent=5 // pred_region
      %s143 = ssub.s32 %s9, 1
      %s144 = smul.u32 8, %s14
      %p145 = scmp.lt.s32.totalorder %s144, 15
      %s146 = scalar_select %p145, %s144, 15
      %s147 = smul.addr %s146, 8
      %s148 = scalar_lea.vmem %s0, %s147
      %p149 = pneg %p35
      %p150 = pneg %p32
      %p151 = pneg %p56
      %p152 = pneg %p53
      %p153 = pneg %p77
      %p154 = pneg %p74
      %p155 = pneg %p103
      %p156 = pneg %p100
      %s157 = smul.u32 8, %s14
      %p158 = scmp.lt.s32.totalorder %s157, 15
      %s159 = scalar_select %p158, %s157, 15
      %s160 = smul.addr %s159, 8
      %s161 = scalar_lea.vmem %s3, %s160
      %s162 = smul.u32 8, %s14
      %p163 = scmp.lt.s32.totalorder %s162, 15
      %s164 = scalar_select %p163, %s162, 15
      %s165 = smul.addr %s164, 8
      %s166 = scalar_lea.vmem %s0, %s165
      %s167 = smul.u32 8, %s14
      %s168 = smul.u32 8, %s14
      %p169 = scmp.lt.s32.totalorder %s168, 15
      %s170 = scalar_select %p169, %s168, 15
      %s171 = smul.addr %s170, 8
      %s172 = scalar_lea.vmem %s3, %s171
      %s173 = smul.u32 8, %s14
      %v174 = vld [vmem:[%s166] sm:$0xff]
      %v175 = vld [vmem:[%s166 + $0x8] sm:$0xff]
      %v176 = vld [vmem:[%s166 + $0x10] sm:$0xff]
      %v177 = vld [vmem:[%s166 + $0x18] sm:$0xff]
      %v178 = vld [vmem:[%s166 + $0x20] sm:$0xff]
      %v179 = vld [vmem:[%s166 + $0x28] sm:$0xff]
      %v180 = vld [vmem:[%s166 + $0x30] sm:$0xff]
      %v181 = vld [vmem:[%s166 + $0x38] sm:$0xff]
      %v182 = vld [vmem:[%s1] sm:$0x1]
      %v184 = vlaneseq
      %v185 = vshrl.u32 %v184, 7
      %v186 = vsub.s32 0, %v185
      %v187 = vrot.slane %v182, %v186
      %v189 = vmul.f32 %v174, %v187
      %v190 = vmul.f32 %v175, %v187
      %v191 = vmul.f32 %v176, %v187
      %v192 = vmul.f32 %v177, %v187
      %v193 = vmul.f32 %v178, %v187
      %v194 = vmul.f32 %v179, %v187
      %v195 = vmul.f32 %v180, %v187
      %v196 = vmul.f32 %v181, %v187
      %v197 = vld [vmem:[%s2] sm:$0x1]
      %v199 = vlaneseq
      %v200 = vshrl.u32 %v199, 7
      %v201 = vsub.s32 0, %v200
      %v202 = vrot.slane %v197, %v201
      %v204 = vadd.f32 %v189, %v202
      %v205 = vadd.f32 %v190, %v202
      %v206 = vadd.f32 %v191, %v202
      %v207 = vadd.f32 %v192, %v202
      %v208 = vadd.f32 %v193, %v202
      %v209 = vadd.f32 %v194, %v202
      %v210 = vadd.f32 %v195, %v202
      %v211 = vadd.f32 %v196, %v202
      %v212 = vmax.f32 %v204, 0.0
      %v213 = vmax.f32 %v205, 0.0
      %v214 = vmax.f32 %v206, 0.0
      %v215 = vmax.f32 %v207, 0.0
      %v216 = vmax.f32 %v208, 0.0
      %v217 = vmax.f32 %v209, 0.0
      %v218 = vmax.f32 %v210, 0.0
      %v219 = vmax.f32 %v211, 0.0
      %220 = vst [vmem:[%s172] sm:$0xff] %v212
      %221 = vst [vmem:[%s172 + $0x8] sm:$0xff] %v213
      %222 = vst [vmem:[%s172 + $0x10] sm:$0xff] %v214
      %223 = vst [vmem:[%s172 + $0x18] sm:$0xff] %v215
      %224 = vst [vmem:[%s172 + $0x20] sm:$0xff] %v216
      %225 = vst [vmem:[%s172 + $0x28] sm:$0xff] %v217
      %226 = vst [vmem:[%s172 + $0x30] sm:$0xff] %v218
      %227 = vst [vmem:[%s172 + $0x38] sm:$0xff] %v219
      %s228 = smul.u32 8, %s14
      %p229 = scmp.lt.s32.totalorder %s228, 15
      %s230 = scalar_select %p229, %s228, 15
      %s231 = smul.addr %s230, 8
      %s232 = scalar_lea.vmem %s3, %s231
      // Predicated region
      $region33: #{contract_block.13} parent=31 // pred_check
        %p233 = pneg %p100
      $region34: #{contract_block.13} parent=31 // pred_check_branch
        %235 = sbr.rel (%p233) target = $region36
      $region35: #{contract_block.13} parent=31 // pred_region
        %s236 = smul.u32 8, %s14
      $region36: #{contract_block.13} parent=31 // pred_fallthru
        _
    $region32: #{contract_block.13} parent=5 // pred_fallthru
      _
    %p237 = scmp.le.s32.totalorder 2, %s9
    // Predicated region
    $region37: #{contract_block.13} parent=5 // pred_check
      %p238 = pneg %p237
    $region38: #{contract_block.13} parent=5 // pred_check_branch
      %240 = sbr.rel (%p238) target = $region40
    $region39: #{contract_block.13} parent=5 // pred_region
      %s241 = ssub.s32 %s9, 2
      // Predicated region
      $region41: #{contract_block.13} parent=39 // pred_check
        %p242 = pneg %p106
      $region42: #{contract_block.13} parent=39 // pred_check_branch
        %244 = sbr.rel (%p242) target = $region44
      $region43: #{contract_block.13} parent=39 // pred_region
        %s245 = smul.u32 8, %s15
        %p246 = scmp.lt.s32.totalorder %s245, 15
        %s247 = scalar_select %p246, %s245, 15
        %s248 = smul.addr %s247, 8
        %s249 = scalar_lea.vmem %s3, %s248
      $region44: #{contract_block.13} parent=39 // pred_fallthru
        _
    $region40: #{contract_block.13} parent=5 // pred_fallthru
      _
  $region6: #{contract_block.13} parent=0 // loop_footer
    %s13 = sadd.s32 1, %s9
  $region7: #{contract_block.13} parent=0 // loop_footer_branch
    %8 = sbr.rel target = $region3
  $region8: #{contract_block.13} parent=0 // loop_exit
    _

// kernel: contract_block.14
$region0: #{contract_block.14}
  #allocation0 [shape = 'u32[]', space=smem, size = 0x4, offset = 0x4, fixed_abs, tag = 'smem constant byte address 0x4 - core index']
  #allocation1 [shape = 'u32[144,128]{1,0:T(1,128)}', space=vmem, size = 0x12000, scoped, tag = 'internal scratch']
  %s0 = inlined_call_operand.vmem [shape: bf16[128,256], index: 0, kind: input, shape index: {}]
  %s1 = inlined_call_operand.vmem [shape: bf16[256,128], index: 1, kind: input, shape index: {}]
  %s2 = inlined_call_operand.vmem [shape: f32[128,128], index: 2, kind: output, shape index: {0}]
  %s3 = inlined_call_operand.vmem [shape: f32[2,1,128], index: 3, kind: output, shape index: {1}]
  %s4 = inlined_call_operand.vmem [shape: f32[2,1,128], index: 4, kind: output, shape index: {2}]
  %5 = xla_tuple %s2, %s3, %s4
  %s6 = sld [smem:[#allocation0]]
  $region57: #{contract_block.14} parent=0
    _
  %s8 = ssub.s32 1, %s6
  %s9 = scalar_select 0, %s8, %s6
  loop: start=0, step=1, limit=4
  $region2: #{contract_block.14} parent=0 // loop_pre_header
    _
  $region3: #{contract_block.14} parent=0 // loop_header
    %s11 = sphi 0, %s15
    %p12 = scmp.ge.s32.totalorder %s11, 4
    %s21 = sphi 0, %s23
    %s24 = sphi 0, %s21
    %s25 = sphi 0, %s24
    %s41 = sphi 0, %s25
    %s45 = sphi 0, %s45
    %s47 = sphi 0, %s45
    %s48 = sphi 0, %s47
    %s62 = sphi 0, %s48
    %s68 = sphi 0, %s70
    %s71 = sphi 0, %s68
    %s72 = sphi 0, %s71
    %s88 = sphi 0, %s72
    %s94 = sphi 0, %s96
    %s97 = sphi 0, %s94
    %s98 = sphi 0, %s97
    %s114 = sphi 0, %s98
    %s120 = sphi 0, %s122
    %s123 = sphi 0, %s120
    %s124 = sphi 0, %s123
    %s140 = sphi 0, %s124
  $region4: #{contract_block.14} parent=0 // loop_header_branch
    %14 = sbr.rel (%p12) target = $region8
  $region5: #{contract_block.14} parent=0 // loop_body
    %s16 = ssub.s32 %s11, 1
    %s17 = ssub.s32 %s11, 2
    %s18 = sadd.s32 %s11, 1
    %s19 = ssub.s32 %s11, %s18
    %p20 = scmp.eq.s32.totalorder %s19, 0
    %s22 = sadd.s32 %s21, 1
    %s23 = scalar_select %p20, %s21, %s22
    %p26 = pneg %p20
    %p27 = scmp.eq.s32.totalorder %s11, 1
    %p28 = por %p26, %p27
    %p29 = scmp.ne.s32.totalorder %s21, %s24
    %p30 = scmp.eq.s32.totalorder %s11, 0
    %p31 = por %p29, %p30
    %p32 = scmp.ne.s32.totalorder %s21, %s24
    %p33 = scmp.eq.s32.totalorder %s16, 1
    %p34 = por %p32, %p33
    %p35 = scmp.ne.s32.totalorder %s24, %s25
    %p36 = scmp.eq.s32.totalorder %s16, 0
    %p37 = por %p35, %p36
    %p38 = scmp.ne.s32.totalorder %s24, %s25
    %p39 = scmp.eq.s32.totalorder %s17, 1
    %p40 = por %p38, %p39
    %p42 = scmp.ne.s32.totalorder %s25, %s41
    %p43 = scmp.eq.s32.totalorder %s17, 0
    %p44 = por %p42, %p43
    %s46 = sadd.s32 %s45, 1
    %p49 = scmp.eq.s32.totalorder %s11, 1
    %p50 = scmp.ne.s32.totalorder %s45, %s47
    %p51 = scmp.eq.s32.totalorder %s11, 0
    %p52 = por %p50, %p51
    %p53 = scmp.ne.s32.totalorder %s45, %s47
    %p54 = scmp.eq.s32.totalorder %s16, 1
    %p55 = por %p53, %p54
    %p56 = scmp.ne.s32.totalorder %s47, %s48
    %p57 = scmp.eq.s32.totalorder %s16, 0
    %p58 = por %p56, %p57
    %p59 = scmp.ne.s32.totalorder %s47, %s48
    %p60 = scmp.eq.s32.totalorder %s17, 1
    %p61 = por %p59, %p60
    %p63 = scmp.ne.s32.totalorder %s48, %s62
    %p64 = scmp.eq.s32.totalorder %s17, 0
    %p65 = por %p63, %p64
    %s66 = ssub.s32 %s11, %s18
    %p67 = scmp.eq.s32.totalorder %s66, 0
    %s69 = sadd.s32 %s68, 1
    %s70 = scalar_select %p67, %s68, %s69
    %p73 = pneg %p67
    %p74 = scmp.eq.s32.totalorder %s11, 1
    %p75 = por %p73, %p74
    %p76 = scmp.ne.s32.totalorder %s68, %s71
    %p77 = scmp.eq.s32.totalorder %s11, 0
    %p78 = por %p76, %p77
    %p79 = scmp.ne.s32.totalorder %s68, %s71
    %p80 = scmp.eq.s32.totalorder %s16, 1
    %p81 = por %p79, %p80
    %p82 = scmp.ne.s32.totalorder %s71, %s72
    %p83 = scmp.eq.s32.totalorder %s16, 0
    %p84 = por %p82, %p83
    %p85 = scmp.ne.s32.totalorder %s71, %s72
    %p86 = scmp.eq.s32.totalorder %s17, 1
    %p87 = por %p85, %p86
    %p89 = scmp.ne.s32.totalorder %s72, %s88
    %p90 = scmp.eq.s32.totalorder %s17, 0
    %p91 = por %p89, %p90
    %s92 = ssub.s32 %s11, %s18
    %p93 = scmp.eq.s32.totalorder %s92, 0
    %s95 = sadd.s32 %s94, 1
    %s96 = scalar_select %p93, %s94, %s95
    %p99 = pneg %p93
    %p100 = scmp.eq.s32.totalorder %s11, 1
    %p101 = por %p99, %p100
    %p102 = scmp.ne.s32.totalorder %s94, %s97
    %p103 = scmp.eq.s32.totalorder %s11, 0
    %p104 = por %p102, %p103
    %p105 = scmp.ne.s32.totalorder %s94, %s97
    %p106 = scmp.eq.s32.totalorder %s16, 1
    %p107 = por %p105, %p106
    %p108 = scmp.ne.s32.totalorder %s97, %s98
    %p109 = scmp.eq.s32.totalorder %s16, 0
    %p110 = por %p108, %p109
    %p111 = scmp.ne.s32.totalorder %s97, %s98
    %p112 = scmp.eq.s32.totalorder %s17, 1
    %p113 = por %p111, %p112
    %p115 = scmp.ne.s32.totalorder %s98, %s114
    %p116 = scmp.eq.s32.totalorder %s17, 0
    %p117 = por %p115, %p116
    %s118 = ssub.s32 %s11, %s18
    %p119 = scmp.eq.s32.totalorder %s118, 0
    %s121 = sadd.s32 %s120, 1
    %s122 = scalar_select %p119, %s120, %s121
    %p125 = pneg %p119
    %p126 = scmp.eq.s32.totalorder %s11, 1
    %p127 = por %p125, %p126
    %p128 = scmp.ne.s32.totalorder %s120, %s123
    %p129 = scmp.eq.s32.totalorder %s11, 0
    %p130 = por %p128, %p129
    %p131 = scmp.ne.s32.totalorder %s120, %s123
    %p132 = scmp.eq.s32.totalorder %s16, 1
    %p133 = por %p131, %p132
    %p134 = scmp.ne.s32.totalorder %s123, %s124
    %p135 = scmp.eq.s32.totalorder %s16, 0
    %p136 = por %p134, %p135
    %p137 = scmp.ne.s32.totalorder %s123, %s124
    %p138 = scmp.eq.s32.totalorder %s17, 1
    %p139 = por %p137, %p138
    %p141 = scmp.ne.s32.totalorder %s124, %s140
    %p142 = scmp.eq.s32.totalorder %s17, 0
    %p143 = por %p141, %p142
    %p144 = scmp.le.s32.totalorder 1, %s11
    %p145 = scmp.lt.s32.totalorder %s11, 3
    %p146 = pnand %p144, %p145
    %p147 = pneg %p146
    // Predicated region
    $region9: #{contract_block.14} parent=5 // pred_check
      _
    $region10: #{contract_block.14} parent=5 // pred_check_branch
      %149 = sbr.rel (%p146) target = $region12
    $region11: #{contract_block.14} parent=5 // pred_region
      %s150 = ssub.s32 %s11, 1
      // Predicated region
      $region13: #{contract_block.14} parent=11 // pred_check
        %p151 = pneg %p58
      $region14: #{contract_block.14} parent=11 // pred_check_branch
        %153 = sbr.rel (%p151) target = $region16
      $region15: #{contract_block.14} parent=11 // pred_region
        _
      $region16: #{contract_block.14} parent=11 // pred_fallthru
        _
    $region12: #{contract_block.14} parent=5 // pred_fallthru
      _
    %p154 = scmp.lt.s32.totalorder %s11, 2
    // Predicated region
    $region17: #{contract_block.14} parent=5 // pred_check
      %p155 = pneg %p154
    $region18: #{contract_block.14} parent=5 // pred_check_branch
      %157 = sbr.rel (%p155) target = $region20
    $region19: #{contract_block.14} parent=5 // pred_region
      // Predicated region
      $region21: #{contract_block.14} parent=19 // pred_check
        %p158 = pneg %p31
      $region22: #{contract_block.14} parent=19 // pred_check_branch
        %160 = sbr.rel (%p158) target = $region24
      $region23: #{contract_block.14} parent=19 // pred_region
        %s161 = smul.u32 8, %s11
        %p162 = scmp.lt.s32.totalorder %s161, 15
        %s163 = scalar_select %p162, %s161, 15
        %s164 = smul.addr %s163, 2
        %s165 = smul.addr %s164, 4
        %s166 = scalar_lea.vmem %s0, %s165
        %s167 = smul.u32 8, %s11
      $region24: #{contract_block.14} parent=19 // pred_fallthru
        _
    $region20: #{contract_block.14} parent=5 // pred_fallthru
      _
    %p168 = scmp.le.s32.totalorder 1, %s11
    %p169 = scmp.lt.s32.totalorder %s11, 3
    %p170 = pnand %p168, %p169
    %p171 = pneg %p170
    // Predicated region
    $region25: #{contract_block.14} parent=5 // pred_check
      _
    $region26: #{contract_block.14} parent=5 // pred_check_branch
      %173 = sbr.rel (%p170) target = $region28
    $region27: #{contract_block.14} parent=5 // pred_region
      %s174 = ssub.s32 %s11, 1
      %s175 = smul.u32 8, %s16
      %p176 = scmp.lt.s32.totalorder %s175, 15
      %s177 = scalar_select %p176, %s175, 15
      %s178 = smul.addr %s177, 2
      %s179 = smul.addr %s178, 4
      %s180 = scalar_lea.vmem %s0, %s179
      %p181 = pneg %p37
      %p182 = pneg %p34
      %p183 = pneg %p58
      %p184 = pneg %p55
      %p185 = pneg %p84
      %p186 = pneg %p81
      %s187 = smul.u32 8, %s16
      %p188 = scmp.lt.s32.totalorder %s187, 15
      %s189 = scalar_select %p188, %s187, 15
      %s190 = smul.addr %s189, 8
      %s191 = scalar_lea.vmem %s2, %s190
      %p192 = pneg %p110
      %p193 = pneg %p107
      %p194 = scmp.lt.s32.totalorder %s16, 1
      %s195 = scalar_select %p194, %s16, 1
      %s196 = scalar_lea.vmem %s3, %s195
      %p197 = pneg %p136
      %p198 = pneg %p133
      %p199 = scmp.lt.s32.totalorder %s16, 1
      %s200 = scalar_select %p199, %s16, 1
      %s201 = scalar_lea.vmem %s4, %s200
      %s202 = smul.u32 8, %s16
      %p203 = scmp.lt.s32.totalorder %s202, 15
      %s204 = scalar_select %p203, %s202, 15
      %s205 = smul.addr %s204, 2
      %s206 = smul.addr %s205, 4
      %s207 = scalar_lea.vmem %s0, %s206
      %s208 = smul.u32 8, %s16
      %s209 = smul.u32 8, %s16
      %p210 = scmp.lt.s32.totalorder %s209, 15
      %s211 = scalar_select %p210, %s209, 15
      %s212 = smul.addr %s211, 8
      %s213 = scalar_lea.vmem %s2, %s212
      %s214 = smul.u32 8, %s16
      %p215 = scmp.lt.s32.totalorder %s16, 1
      %s216 = scalar_select %p215, %s16, 1
      %s217 = scalar_lea.vmem %s3, %s216
      %p218 = scmp.lt.s32.totalorder %s16, 1
      %s219 = scalar_select %p218, %s16, 1
      %s220 = scalar_lea.vmem %s4, %s219
      %v222 = vld [vmem:[%s207] sm:$0xff]
      %v223 = vld [vmem:[%s207 + $0x8] sm:$0xff]
      %v224 = vld [vmem:[%s207 + $0x10] sm:$0xff]
      %v225 = vld [vmem:[%s207 + $0x18] sm:$0xff]
      %v226 = vld [vmem:[%s207 + $0x20] sm:$0xff]
      %v227 = vld [vmem:[%s207 + $0x28] sm:$0xff]
      %v228 = vld [vmem:[%s207 + $0x30] sm:$0xff]
      %v229 = vld [vmem:[%s207 + $0x38] sm:$0xff]
      %v230 = vld [vmem:[%s1] sm:$0xf]
      %v231 = vld [vmem:[%s1 + $0x4] sm:$0xf]
      %v232 = vld [vmem:[%s1 + $0x8] sm:$0xf]
      %v233 = vld [vmem:[%s1 + $0xc] sm:$0xf]
      %v234 = vld [vmem:[%s1 + $0x10] sm:$0xf]
      %v235 = vld [vmem:[%s1 + $0x14] sm:$0xf]
      %v236 = vld [vmem:[%s1 + $0x18] sm:$0xf]
      %v237 = vld [vmem:[%s1 + $0x1c] sm:$0xf]
      %v238 = vld [vmem:[%s1 + $0x20] sm:$0xf]
      %v239 = vld [vmem:[%s1 + $0x24] sm:$0xf]
      %v240 = vld [vmem:[%s1 + $0x28] sm:$0xf]
      %v241 = vld [vmem:[%s1 + $0x2c] sm:$0xf]
      %v242 = vld [vmem:[%s1 + $0x30] sm:$0xf]
      %v243 = vld [vmem:[%s1 + $0x34] sm:$0xf]
      %v244 = vld [vmem:[%s1 + $0x38] sm:$0xf]
      %v245 = vld [vmem:[%s1 + $0x3c] sm:$0xf]
      %v246 = vld [vmem:[%s1 + $0x40] sm:$0xf]
      %v247 = vld [vmem:[%s1 + $0x44] sm:$0xf]
      %v248 = vld [vmem:[%s1 + $0x48] sm:$0xf]
      %v249 = vld [vmem:[%s1 + $0x4c] sm:$0xf]
      %v250 = vld [vmem:[%s1 + $0x50] sm:$0xf]
      %v251 = vld [vmem:[%s1 + $0x54] sm:$0xf]
      %v252 = vld [vmem:[%s1 + $0x58] sm:$0xf]
      %v253 = vld [vmem:[%s1 + $0x5c] sm:$0xf]
      %v254 = vld [vmem:[%s1 + $0x60] sm:$0xf]
      %v255 = vld [vmem:[%s1 + $0x64] sm:$0xf]
      %v256 = vld [vmem:[%s1 + $0x68] sm:$0xf]
      %v257 = vld [vmem:[%s1 + $0x6c] sm:$0xf]
      %v258 = vld [vmem:[%s1 + $0x70] sm:$0xf]
      %v259 = vld [vmem:[%s1 + $0x74] sm:$0xf]
      %v260 = vld [vmem:[%s1 + $0x78] sm:$0xf]
      %v261 = vld [vmem:[%s1 + $0x7c] sm:$0xf]
      %v270 = vunpack.c.l.b16 %v222
      %v271 = vunpack.c.h.b16 %v222
      %v272 = vunpack.c.l.b16 %v223
      %v273 = vunpack.c.h.b16 %v223
      %v274 = vunpack.c.l.b16 %v224
      %v275 = vunpack.c.h.b16 %v224
      %v276 = vunpack.c.l.b16 %v225
      %v277 = vunpack.c.h.b16 %v225
      %v278 = vunpack.c.l.b16 %v226
      %v279 = vunpack.c.h.b16 %v226
      %v280 = vunpack.c.l.b16 %v227
      %v281 = vunpack.c.h.b16 %v227
      %v282 = vunpack.c.l.b16 %v228
      %v283 = vunpack.c.h.b16 %v228
      %v284 = vunpack.c.l.b16 %v229
      %v285 = vunpack.c.h.b16 %v229
      %v286 = vpack.c.b16 %v272, %v270
      %v287 = vpack.c.b16 %v273, %v271
      %v288 = vpack.c.b16 %v276, %v274
      %v289 = vpack.c.b16 %v277, %v275
      %v290 = vpack.c.b16 %v280, %v278
      %v291 = vpack.c.b16 %v281, %v279
      %v292 = vpack.c.b16 %v284, %v282
      %v293 = vpack.c.b16 %v285, %v283
      %v334 = vunpack.c.l.b16 %v230
      %v335 = vunpack.c.l.b16 %v231
      %v336 = vunpack.c.l.b16 %v232
      %v337 = vunpack.c.l.b16 %v233
      %v338 = vunpack.c.l.b16 %v234
      %v339 = vunpack.c.l.b16 %v235
      %v340 = vunpack.c.l.b16 %v236
      %v341 = vunpack.c.l.b16 %v237
      %v342 = vunpack.c.l.b16 %v238
      %v343 = vunpack.c.l.b16 %v239
      %v344 = vunpack.c.l.b16 %v240
      %v345 = vunpack.c.l.b16 %v241
      %v346 = vunpack.c.l.b16 %v242
      %v347 = vunpack.c.l.b16 %v243
      %v348 = vunpack.c.l.b16 %v244
      %v349 = vunpack.c.l.b16 %v245
      %v350 = vunpack.c.l.b16 %v246
      %v351 = vunpack.c.l.b16 %v247
      %v352 = vunpack.c.l.b16 %v248
      %v353 = vunpack.c.l.b16 %v249
      %v354 = vunpack.c.l.b16 %v250
      %v355 = vunpack.c.l.b16 %v251
      %v356 = vunpack.c.l.b16 %v252
      %v357 = vunpack.c.l.b16 %v253
      %v358 = vunpack.c.l.b16 %v254
      %v359 = vunpack.c.l.b16 %v255
      %v360 = vunpack.c.l.b16 %v256
      %v361 = vunpack.c.l.b16 %v257
      %v362 = vunpack.c.l.b16 %v258
      %v363 = vunpack.c.l.b16 %v259
      %v364 = vunpack.c.l.b16 %v260
      %v365 = vunpack.c.l.b16 %v261
      %v366 = vpack.c.b16 %v335, %v334
      %v367 = vpack.c.b16 %v337, %v336
      %v368 = vpack.c.b16 %v339, %v338
      %v369 = vpack.c.b16 %v341, %v340
      %v370 = vpack.c.b16 %v343, %v342
      %v371 = vpack.c.b16 %v345, %v344
      %v372 = vpack.c.b16 %v347, %v346
      %v373 = vpack.c.b16 %v349, %v348
      %v374 = vpack.c.b16 %v351, %v350
      %v375 = vpack.c.b16 %v353, %v352
      %v376 = vpack.c.b16 %v355, %v354
      %v377 = vpack.c.b16 %v357, %v356
      %v378 = vpack.c.b16 %v359, %v358
      %v379 = vpack.c.b16 %v361, %v360
      %v380 = vpack.c.b16 %v363, %v362
      %v381 = vpack.c.b16 %v365, %v364
      %398 = vmatprep.subr.bf16.mxu0 0
      %399 = vmatpush1.bf16.msra.mxu0 %v373
      %400 = vmatprep.subr.bf16.mxu0 0
      %401 = vmatpush1.bf16.msra.mxu0 %v372
      %402 = vmatprep.subr.bf16.mxu0 0
      %403 = vmatpush1.bf16.msra.mxu0 %v371
      %404 = vmatprep.subr.bf16.mxu0 0
      %405 = vmatpush1.bf16.msra.mxu0 %v370
      %406 = vmatprep.subr.bf16.mxu0 0
      %407 = vmatpush1.bf16.msra.mxu0 %v369
      %408 = vmatprep.subr.bf16.mxu0 0
      %409 = vmatpush1.bf16.msra.mxu0 %v368
      %410 = vmatprep.subr.bf16.mxu0 0
      %411 = vmatpush1.bf16.msra.mxu0 %v367
      %412 = vmatprep.subr.bf16.mxu0 0
      %413 = vmatpush1.bf16.msra.mxu0 %v366
      %414 = vmatprep.subr.bf16.mxu0 0
      %415 = vmatpush2.bf16.msra.mxu0 %v381
      %416 = vmatprep.subr.bf16.mxu0 0
      %417 = vmatpush2.bf16.msra.mxu0 %v380
      %418 = vmatprep.subr.bf16.mxu0 0
      %419 = vmatpush2.bf16.msra.mxu0 %v379
      %420 = vmatprep.subr.bf16.mxu0 0
      %421 = vmatpush2.bf16.msra.mxu0 %v378
      %422 = vmatprep.subr.bf16.mxu0 0
      %423 = vmatpush2.bf16.msra.mxu0 %v377
      %424 = vmatprep.subr.bf16.mxu0 0
      %425 = vmatpush2.bf16.msra.mxu0 %v376
      %426 = vmatprep.subr.bf16.mxu0 0
      %427 = vmatpush2.bf16.msra.mxu0 %v375
      %428 = vmatprep.subr.bf16.mxu0 0
      %429 = vmatpush2.bf16.msra.mxu0 %v374
      %430 = vmatprep.mubr.bf16.mxu0 %v287
      %431 = vmatmul.mubr.bf16.gmra.mxu0 %v286
      %v432 = vpop.f32.mrf.mxu0
      %v433 = vadd.f32 0.0, %v432
      %v434 = vpop.f32.mrf.mxu0
      %v435 = vpop.f32.mrf.mxu0
      %v436 = vadd.f32 0.0, %v435
      %v437 = vpop.f32.mrf.mxu0
      %438 = vmatprep.mubr.bf16.mxu0 %v289
      %439 = vmatmul.mubr.bf16.gmra.mxu0 %v288
      %v440 = vpop.f32.mrf.mxu0
      %v441 = vadd.f32 0.0, %v440
      %v442 = vpop.f32.mrf.mxu0
      %v443 = vpop.f32.mrf.mxu0
      %v444 = vadd.f32 0.0, %v443
      %v445 = vpop.f32.mrf.mxu0
      %446 = vmatprep.mubr.bf16.mxu0 %v291
      %447 = vmatmul.mubr.bf16.gmra.mxu0 %v290
      %v448 = vpop.f32.mrf.mxu0
      %v449 = vadd.f32 0.0, %v448
      %v450 = vpop.f32.mrf.mxu0
      %v451 = vpop.f32.mrf.mxu0
      %v452 = vadd.f32 0.0, %v451
      %v453 = vpop.f32.mrf.mxu0
      %454 = vmatprep.mubr.bf16.mxu0 %v293
      %455 = vmatmul.mubr.bf16.gmra.mxu0 %v292
      %v456 = vpop.f32.mrf.mxu0
      %v457 = vadd.f32 0.0, %v456
      %v458 = vpop.f32.mrf.mxu0
      %v459 = vpop.f32.mrf.mxu0
      %v460 = vadd.f32 0.0, %v459
      %v461 = vpop.f32.mrf.mxu0
      %462 = vdwg.mxu0
      %463 = vst [vmem:[%s213] sm:$0xff] %v433
      %464 = vst [vmem:[%s213 + $0x8] sm:$0xff] %v436
      %465 = vst [vmem:[%s213 + $0x10] sm:$0xff] %v441
      %466 = vst [vmem:[%s213 + $0x18] sm:$0xff] %v444
      %467 = vst [vmem:[%s213 + $0x20] sm:$0xff] %v449
      %468 = vst [vmem:[%s213 + $0x28] sm:$0xff] %v452
      %469 = vst [vmem:[%s213 + $0x30] sm:$0xff] %v457
      %470 = vst [vmem:[%s213 + $0x38] sm:$0xff] %v460
      %v471 = vadd.f32 %v433, %v436
      %v472 = vadd.f32 %v471, %v441
      %v473 = vadd.f32 %v472, %v444
      %v474 = vadd.f32 %v473, %v449
      %v475 = vadd.f32 %v474, %v452
      %v476 = vadd.f32 %v475, %v457
      %v477 = vadd.f32 %v476, %v460
      %v478 = vrot.slane %v477, 4
      %v479 = vadd.f32 %v477, %v478
      %v480 = vrot.slane %v479, 2
      %v481 = vadd.f32 %v479, %v480
      %v482 = vrot.slane %v481, 1
      %v483 = vadd.f32 %v481, %v482
      %484 = vst [vmem:[%s217] sm:$0x1] %v483
      %v485 = vmul.f32 %v433, %v433
      %v486 = vmul.f32 %v436, %v436
      %v487 = vmul.f32 %v441, %v441
      %v488 = vmul.f32 %v444, %v444
      %v489 = vmul.f32 %v449, %v449
      %v490 = vmul.f32 %v452, %v452
      %v491 = vmul.f32 %v457, %v457
      %v492 = vmul.f32 %v460, %v460
      %v493 = vadd.f32 %v485, %v486
      %v494 = vadd.f32 %v493, %v487
      %v495 = vadd.f32 %v494, %v488
      %v496 = vadd.f32 %v495, %v489
      %v497 = vadd.f32 %v496, %v490
      %v498 = vadd.f32 %v497, %v491
      %v499 = vadd.f32 %v498, %v492
      %v500 = vrot.slane %v499, 4
      %v501 = vadd.f32 %v499, %v500
      %v502 = vrot.slane %v501, 2
      %v503 = vadd.f32 %v501, %v502
      %v504 = vrot.slane %v503, 1
      %v505 = vadd.f32 %v503, %v504
      %506 = vst [vmem:[%s220] sm:$0x1] %v505
      %s507 = smul.u32 8, %s16
      %p508 = scmp.lt.s32.totalorder %s507, 15
      %s509 = scalar_select %p508, %s507, 15
      %s510 = smul.addr %s509, 8
      %s511 = scalar_lea.vmem %s2, %s510
      %p512 = scmp.lt.s32.totalorder %s16, 1
      %s513 = scalar_select %p512, %s16, 1
      %s514 = scalar_lea.vmem %s3, %s513
      %p515 = scmp.lt.s32.totalorder %s16, 1
      %s516 = scalar_select %p515, %s16, 1
      %s517 = scalar_lea.vmem %s4, %s516
      // Predicated region
      $region29: #{contract_block.14} parent=27 // pred_check
        %p518 = pneg %p81
      $region30: #{contract_block.14} parent=27 // pred_check_branch
        %520 = sbr.rel (%p518) target = $region32
      $region31: #{contract_block.14} parent=27 // pred_region
        %s521 = smul.u32 8, %s16
      $region32: #{contract_block.14} parent=27 // pred_fallthru
        _
      // Predicated region
      $region33: #{contract_block.14} parent=27 // pred_check
        %p522 = pneg %p107
      $region34: #{contract_block.14} parent=27 // pred_check_branch
        %524 = sbr.rel (%p522) target = $region36
      $region35: #{contract_block.14} parent=27 // pred_region
        _
      $region36: #{contract_block.14} parent=27 // pred_fallthru
        _
      // Predicated region
      $region37: #{contract_block.14} parent=27 // pred_check
        %p525 = pneg %p133
      $region38: #{contract_block.14} parent=27 // pred_check_branch
        %527 = sbr.rel (%p525) target = $region40
      $region39: #{contract_block.14} parent=27 // pred_region
        _
      $region40: #{contract_block.14} parent=27 // pred_fallthru
        _
    $region28: #{contract_block.14} parent=5 // pred_fallthru
      _
    %p528 = scmp.le.s32.totalorder 2, %s11
    // Predicated region
    $region41: #{contract_block.14} parent=5 // pred_check
      %p529 = pneg %p528
    $region42: #{contract_block.14} parent=5 // pred_check_branch
      %531 = sbr.rel (%p529) target = $region44
    $region43: #{contract_block.14} parent=5 // pred_region
      %s532 = ssub.s32 %s11, 2
      // Predicated region
      $region45: #{contract_block.14} parent=43 // pred_check
        %p533 = pneg %p87
      $region46: #{contract_block.14} parent=43 // pred_check_branch
        %535 = sbr.rel (%p533) target = $region48
      $region47: #{contract_block.14} parent=43 // pred_region
        %s536 = smul.u32 8, %s17
        %p537 = scmp.lt.s32.totalorder %s536, 15
        %s538 = scalar_select %p537, %s536, 15
        %s539 = smul.addr %s538, 8
        %s540 = scalar_lea.vmem %s2, %s539
      $region48: #{contract_block.14} parent=43 // pred_fallthru
        _
      // Predicated region
      $region49: #{contract_block.14} parent=43 // pred_check
        %p541 = pneg %p113
      $region50: #{contract_block.14} parent=43 // pred_check_branch
        %543 = sbr.rel (%p541) target = $region52
      $region51: #{contract_block.14} parent=43 // pred_region
        %p544 = scmp.lt.s32.totalorder %s17, 1
        %s545 = scalar_select %p544, %s17, 1
        %s546 = scalar_lea.vmem %s3, %s545
      $region52: #{contract_block.14} parent=43 // pred_fallthru
        _
      // Predicated region
      $region53: #{contract_block.14} parent=43 // pred_check
        %p547 = pneg %p139
      $region54: #{contract_block.14} parent=43 // pred_check_branch
        %549 = sbr.rel (%p547) target = $region56
      $region55: #{contract_block.14} parent=43 // pred_region
        %p550 = scmp.lt.s32.totalorder %s17, 1
        %s551 = scalar_select %p550, %s17, 1
        %s552 = scalar_lea.vmem %s4, %s551
      $region56: #{contract_block.14} parent=43 // pred_fallthru
        _
    $region44: #{contract_block.14} parent=5 // pred_fallthru
      _
  $region6: #{contract_block.14} parent=0 // loop_footer
    %s15 = sadd.s32 1, %s11
  $region7: #{contract_block.14} parent=0 // loop_footer_branch
    %10 = sbr.rel target = $region3
  $region8: #{contract_block.14} parent=0 // loop_exit
    _

// kernel: contract_block.15
$region0: #{contract_block.15}
  #allocation0 [shape = 'u32[]', space=smem, size = 0x4, offset = 0x4, fixed_abs, tag = 'smem constant byte address 0x4 - core index']
  #allocation1 [shape = 'u32[144,128]{1,0:T(1,128)}', space=vmem, size = 0x12000, scoped, tag = 'internal scratch']
  %s0 = inlined_call_operand.vmem [shape: f32[16,8,128], index: 0, kind: input, shape index: {}]
  %s1 = inlined_call_operand.vmem [shape: f32[1,1,128], index: 1, kind: input, shape index: {}]
  %s2 = inlined_call_operand.vmem [shape: f32[1,1,128], index: 2, kind: input, shape index: {}]
  %s3 = inlined_call_operand.vmem [shape: f32[16,8,128], index: 3, kind: output, shape index: {0}]
  %s4 = inlined_call_operand.hbm [shape: f32[8,4,128], index: 4, kind: output, shape index: {1}]
  %5 = xla_tuple %s3, %s4
  %s6 = sld [smem:[#allocation0]]
  $region53: #{contract_block.15} parent=0
    _
  %s8 = ssub.s32 1, %s6
  %s9 = scalar_select 0, %s8, %s6
  $region1: #{contract_block.15} parent=0
    #allocation2 [shape = 'u8[16384]{0}', space=vmem, size = 0x4000, scoped, tag = 'output window, operand 1']
    #allocation3 [shape = 's32[2]{0}', space=sflag, size = 0x8, scoped, tag = 'scoped memory for contract_block.15']
    %10 = vsyncpa [#allocation3], 0
    %s11 = scalar_lea.sflag [#allocation3], 1
    %12 = vsyncpa %s11, 0
    loop: start=0, step=1, limit=4
    $region2: #{contract_block.15} parent=1 // loop_pre_header
      _
    $region3: #{contract_block.15} parent=1 // loop_header
      %s14 = sphi 0, %s18
      %p15 = scmp.ge.s32.totalorder %s14, 4
      %s24 = sphi 0, %s26
      %s27 = sphi 0, %s24
      %s28 = sphi 0, %s27
      %s44 = sphi 0, %s28
      %s48 = sphi 0, %s48
      %s50 = sphi 0, %s48
      %s51 = sphi 0, %s50
      %s65 = sphi 0, %s51
      %s69 = sphi 0, %s69
      %s71 = sphi 0, %s69
      %s72 = sphi 0, %s71
      %s86 = sphi 0, %s72
      %s92 = sphi 0, %s94
      %s95 = sphi 0, %s92
      %s96 = sphi 0, %s95
      %s112 = sphi 0, %s96
      %s118 = sphi 0, %s120
      %s121 = sphi 0, %s118
      %s122 = sphi 0, %s121
      %s138 = sphi 0, %s122
    $region4: #{contract_block.15} parent=1 // loop_header_branch
      %17 = sbr.rel (%p15) target = $region8
    $region5: #{contract_block.15} parent=1 // loop_body
      %s19 = ssub.s32 %s14, 1
      %s20 = ssub.s32 %s14, 2
      %s21 = sadd.s32 %s14, 1
      %s22 = ssub.s32 %s14, %s21
      %p23 = scmp.eq.s32.totalorder %s22, 0
      %s25 = sadd.s32 %s24, 1
      %s26 = scalar_select %p23, %s24, %s25
      %p29 = pneg %p23
      %p30 = scmp.eq.s32.totalorder %s14, 1
      %p31 = por %p29, %p30
      %p32 = scmp.ne.s32.totalorder %s24, %s27
      %p33 = scmp.eq.s32.totalorder %s14, 0
      %p34 = por %p32, %p33
      %p35 = scmp.ne.s32.totalorder %s24, %s27
      %p36 = scmp.eq.s32.totalorder %s19, 1
      %p37 = por %p35, %p36
      %p38 = scmp.ne.s32.totalorder %s27, %s28
      %p39 = scmp.eq.s32.totalorder %s19, 0
      %p40 = por %p38, %p39
      %p41 = scmp.ne.s32.totalorder %s27, %s28
      %p42 = scmp.eq.s32.totalorder %s20, 1
      %p43 = por %p41, %p42
      %p45 = scmp.ne.s32.totalorder %s28, %s44
      %p46 = scmp.eq.s32.totalorder %s20, 0
      %p47 = por %p45, %p46
      %s49 = sadd.s32 %s48, 1
      %p52 = scmp.eq.s32.totalorder %s14, 1
      %p53 = scmp.ne.s32.totalorder %s48, %s50
      %p54 = scmp.eq.s32.totalorder %s14, 0
      %p55 = por %p53, %p54
      %p56 = scmp.ne.s32.totalorder %s48, %s50
      %p57 = scmp.eq.s32.totalorder %s19, 1
      %p58 = por %p56, %p57
      %p59 = scmp.ne.s32.totalorder %s50, %s51
      %p60 = scmp.eq.s32.totalorder %s19, 0
      %p61 = por %p59, %p60
      %p62 = scmp.ne.s32.totalorder %s50, %s51
      %p63 = scmp.eq.s32.totalorder %s20, 1
      %p64 = por %p62, %p63
      %p66 = scmp.ne.s32.totalorder %s51, %s65
      %p67 = scmp.eq.s32.totalorder %s20, 0
      %p68 = por %p66, %p67
      %s70 = sadd.s32 %s69, 1
      %p73 = scmp.eq.s32.totalorder %s14, 1
      %p74 = scmp.ne.s32.totalorder %s69, %s71
      %p75 = scmp.eq.s32.totalorder %s14, 0
      %p76 = por %p74, %p75
      %p77 = scmp.ne.s32.totalorder %s69, %s71
      %p78 = scmp.eq.s32.totalorder %s19, 1
      %p79 = por %p77, %p78
      %p80 = scmp.ne.s32.totalorder %s71, %s72
      %p81 = scmp.eq.s32.totalorder %s19, 0
      %p82 = por %p80, %p81
      %p83 = scmp.ne.s32.totalorder %s71, %s72
      %p84 = scmp.eq.s32.totalorder %s20, 1
      %p85 = por %p83, %p84
      %p87 = scmp.ne.s32.totalorder %s72, %s86
      %p88 = scmp.eq.s32.totalorder %s20, 0
      %p89 = por %p87, %p88
      %s90 = ssub.s32 %s14, %s21
      %p91 = scmp.eq.s32.totalorder %s90, 0
      %s93 = sadd.s32 %s92, 1
      %s94 = scalar_select %p91, %s92, %s93
      %p97 = pneg %p91
      %p98 = scmp.eq.s32.totalorder %s14, 1
      %p99 = por %p97, %p98
      %p100 = scmp.ne.s32.totalorder %s92, %s95
      %p101 = scmp.eq.s32.totalorder %s14, 0
      %p102 = por %p100, %p101
      %p103 = scmp.ne.s32.totalorder %s92, %s95
      %p104 = scmp.eq.s32.totalorder %s19, 1
      %p105 = por %p103, %p104
      %p106 = scmp.ne.s32.totalorder %s95, %s96
      %p107 = scmp.eq.s32.totalorder %s19, 0
      %p108 = por %p106, %p107
      %p109 = scmp.ne.s32.totalorder %s95, %s96
      %p110 = scmp.eq.s32.totalorder %s20, 1
      %p111 = por %p109, %p110
      %p113 = scmp.ne.s32.totalorder %s96, %s112
      %p114 = scmp.eq.s32.totalorder %s20, 0
      %p115 = por %p113, %p114
      %s116 = ssub.s32 %s14, %s21
      %p117 = scmp.eq.s32.totalorder %s116, 0
      %s119 = sadd.s32 %s118, 1
      %s120 = scalar_select %p117, %s118, %s119
      %p123 = pneg %p117
      %p124 = scmp.eq.s32.totalorder %s14, 1
      %p125 = por %p123, %p124
      %p126 = scmp.ne.s32.totalorder %s118, %s121
      %p127 = scmp.eq.s32.totalorder %s14, 0
      %p128 = por %p126, %p127
      %p129 = scmp.ne.s32.totalorder %s118, %s121
      %p130 = scmp.eq.s32.totalorder %s19, 1
      %p131 = por %p129, %p130
      %p132 = scmp.ne.s32.totalorder %s121, %s122
      %p133 = scmp.eq.s32.totalorder %s19, 0
      %p134 = por %p132, %p133
      %p135 = scmp.ne.s32.totalorder %s121, %s122
      %p136 = scmp.eq.s32.totalorder %s20, 1
      %p137 = por %p135, %p136
      %p139 = scmp.ne.s32.totalorder %s122, %s138
      %p140 = scmp.eq.s32.totalorder %s20, 0
      %p141 = por %p139, %p140
      %p142 = scmp.le.s32.totalorder 1, %s14
      %p143 = scmp.lt.s32.totalorder %s14, 3
      %p144 = pnand %p142, %p143
      %p145 = pneg %p144
      // Predicated region
      $region9: #{contract_block.15} parent=5 // pred_check
        _
      $region10: #{contract_block.15} parent=5 // pred_check_branch
        %147 = sbr.rel (%p144) target = $region12
      $region11: #{contract_block.15} parent=5 // pred_region
        %s148 = ssub.s32 %s14, 1
        // Predicated region
        $region13: #{contract_block.15} parent=11 // pred_check
          %p149 = pneg %p61
        $region14: #{contract_block.15} parent=11 // pred_check_branch
          %151 = sbr.rel (%p149) target = $region16
        $region15: #{contract_block.15} parent=11 // pred_region
          _
        $region16: #{contract_block.15} parent=11 // pred_fallthru
          _
        // Predicated region
        $region17: #{contract_block.15} parent=11 // pred_check
          %p152 = pneg %p82
        $region18: #{contract_block.15} parent=11 // pred_check_branch
          %154 = sbr.rel (%p152) target = $region20
        $region19: #{contract_block.15} parent=11 // pred_region
          _
        $region20: #{contract_block.15} parent=11 // pred_fallthru
          _
      $region12: #{contract_block.15} parent=5 // pred_fallthru
        _
      %p155 = scmp.lt.s32.totalorder %s14, 2
      // Predicated region
      $region21: #{contract_block.15} parent=5 // pred_check
        %p156 = pneg %p155
      $region22: #{contract_block.15} parent=5 // pred_check_branch
        %158 = sbr.rel (%p156) target = $region24
      $region23: #{contract_block.15} parent=5 // pred_region
        // Predicated region
        $region25: #{contract_block.15} parent=23 // pred_check
          %p159 = pneg %p34
        $region26: #{contract_block.15} parent=23 // pred_check_branch
          %161 = sbr.rel (%p159) target = $region28
        $region27: #{contract_block.15} parent=23 // pred_region
          %s162 = smul.u32 8, %s14
          %p163 = scmp.lt.s32.totalorder %s162, 15
          %s164 = scalar_select %p163, %s162, 15
          %s165 = smul.addr %s164, 8
          %s166 = scalar_lea.vmem %s0, %s165
          %s167 = smul.u32 8, %s14
        $region28: #{contract_block.15} parent=23 // pred_fallthru
          _
      $region24: #{contract_block.15} parent=5 // pred_fallthru
        _
      %p168 = scmp.le.s32.totalorder 1, %s14
      %p169 = scmp.lt.s32.totalorder %s14, 3
      %p170 = pnand %p168, %p169
      %p171 = pneg %p170
      // Predicated region
      $region29: #{contract_block.15} parent=5 // pred_check
        _
      $region30: #{contract_block.15} parent=5 // pred_check_branch
        %173 = sbr.rel (%p170) target = $region32
      $region31: #{contract_block.15} parent=5 // pred_region
        %s174 = ssub.s32 %s14, 1
        %s175 = smul.u32 8, %s19
        %p176 = scmp.lt.s32.totalorder %s175, 15
        %s177 = scalar_select %p176, %s175, 15
        %s178 = smul.addr %s177, 8
        %s179 = scalar_lea.vmem %s0, %s178
        %p180 = pneg %p40
        %p181 = pneg %p37
        %p182 = pneg %p61
        %p183 = pneg %p58
        %p184 = pneg %p82
        %p185 = pneg %p79
        %p186 = pneg %p108
        %p187 = pneg %p105
        %s188 = smul.u32 8, %s19
        %p189 = scmp.lt.s32.totalorder %s188, 15
        %s190 = scalar_select %p189, %s188, 15
        %s191 = smul.addr %s190, 8
        %s192 = scalar_lea.vmem %s3, %s191
        %p193 = pneg %p134
        %p194 = pneg %p131
        %s195 = sand.u32 %s121, 1
        %s196 = scalar_lea.sflag [#allocation3], %s195
        %s197 = sand.u32 %s121, 1
        %s198 = smul.addr %s197, 16
        %s199 = scalar_lea.vmem [#allocation2], %s198
        %s200 = smul.u32 8, %s19
        %p201 = scmp.lt.s32.totalorder %s200, 15
        %s202 = scalar_select %p201, %s200, 15
        %s203 = smul.addr %s202, 8
        %s204 = scalar_lea.vmem %s0, %s203
        %s205 = smul.u32 8, %s19
        %s206 = smul.u32 8, %s19
        %p207 = scmp.lt.s32.totalorder %s206, 15
        %s208 = scalar_select %p207, %s206, 15
        %s209 = smul.addr %s208, 8
        %s210 = scalar_lea.vmem %s3, %s209
        %s211 = smul.u32 8, %s19
        %s212 = smul.u32 4, %s19
        %v213 = vld [vmem:[%s1] sm:$0x1]
        %v214 = vld [vmem:[%s2] sm:$0x1]
        %v215 = vld [vmem:[%s204] sm:$0xff]
        %v216 = vld [vmem:[%s204 + $0x8] sm:$0xff]
        %v217 = vld [vmem:[%s204 + $0x10] sm:$0xff]
        %v218 = vld [vmem:[%s204 + $0x18] sm:$0xff]
        %v219 = vld [vmem:[%s204 + $0x20] sm:$0xff]
        %v220 = vld [vmem:[%s204 + $0x28] sm:$0xff]
        %v221 = vld [vmem:[%s204 + $0x30] sm:$0xff]
        %v222 = vld [vmem:[%s204 + $0x38] sm:$0xff]
        %v224 = vlaneseq
        %v225 = vshrl.u32 %v224, 7
        %v226 = vsub.s32 0, %v225
        %v227 = vrot.slane %v213, %v226
        %v229 = vmul.f32 %v215, %v227
        %v230 = vmul.f32 %v216, %v227
        %v231 = vmul.f32 %v217, %v227
        %v232 = vmul.f32 %v218, %v227
        %v233 = vmul.f32 %v219, %v227
        %v234 = vmul.f32 %v220, %v227
        %v235 = vmul.f32 %v221, %v227
        %v236 = vmul.f32 %v222, %v227
        %v238 = vlaneseq
        %v239 = vshrl.u32 %v238, 7
        %v240 = vsub.s32 0, %v239
        %v241 = vrot.slane %v214, %v240
        %v243 = vadd.f32 %v229, %v241
        %v244 = vadd.f32 %v230, %v241
        %v245 = vadd.f32 %v231, %v241
        %v246 = vadd.f32 %v232, %v241
        %v247 = vadd.f32 %v233, %v241
        %v248 = vadd.f32 %v234, %v241
        %v249 = vadd.f32 %v235, %v241
        %v250 = vadd.f32 %v236, %v241
        %v251 = vmax.f32 %v243, 0.0
        %v252 = vmax.f32 %v244, 0.0
        %v253 = vmax.f32 %v245, 0.0
        %v254 = vmax.f32 %v246, 0.0
        %v255 = vmax.f32 %v247, 0.0
        %v256 = vmax.f32 %v248, 0.0
        %v257 = vmax.f32 %v249, 0.0
        %v258 = vmax.f32 %v250, 0.0
        %259 = vst [vmem:[%s210] sm:$0xff] %v251
        %260 = vst [vmem:[%s210 + $0x8] sm:$0xff] %v252
        %261 = vst [vmem:[%s210 + $0x10] sm:$0xff] %v253
        %262 = vst [vmem:[%s210 + $0x18] sm:$0xff] %v254
        %263 = vst [vmem:[%s210 + $0x20] sm:$0xff] %v255
        %264 = vst [vmem:[%s210 + $0x28] sm:$0xff] %v256
        %265 = vst [vmem:[%s210 + $0x30] sm:$0xff] %v257
        %266 = vst [vmem:[%s210 + $0x38] sm:$0xff] %v258
        %v267 = vld [vmem:[%s204] ss:$2 sm:$0xf]
        %s268 = scalar_lea.vmem %s204, 8
        %v269 = vld [vmem:[%s268] ss:$2 sm:$0xf]
        %s270 = scalar_lea.vmem %s204, 16
        %v271 = vld [vmem:[%s270] ss:$2 sm:$0xf]
        %s272 = scalar_lea.vmem %s204, 24
        %v273 = vld [vmem:[%s272] ss:$2 sm:$0xf]
        %s274 = scalar_lea.vmem %s204, 32
        %v275 = vld [vmem:[%s274] ss:$2 sm:$0xf]
        %s276 = scalar_lea.vmem %s204, 40
        %v277 = vld [vmem:[%s276] ss:$2 sm:$0xf]
        %s278 = scalar_lea.vmem %s204, 48
        %v279 = vld [vmem:[%s278] ss:$2 sm:$0xf]
        %s280 = scalar_lea.vmem %s204, 56
        %v281 = vld [vmem:[%s280] ss:$2 sm:$0xf]
        %s282 = scalar_lea.vmem %s204, 1
        %v283 = vld [vmem:[%s282] ss:$2 sm:$0xf]
        %s284 = scalar_lea.vmem %s204, 9
        %v285 = vld [vmem:[%s284] ss:$2 sm:$0xf]
        %s286 = scalar_lea.vmem %s204, 17
        %v287 = vld [vmem:[%s286] ss:$2 sm:$0xf]
        %s288 = scalar_lea.vmem %s204, 25
        %v289 = vld [vmem:[%s288] ss:$2 sm:$0xf]
        %s290 = scalar_lea.vmem %s204, 33
        %v291 = vld [vmem:[%s290] ss:$2 sm:$0xf]
        %s292 = scalar_lea.vmem %s204, 41
        %v293 = vld [vmem:[%s292] ss:$2 sm:$0xf]
        %s294 = scalar_lea.vmem %s204, 49
        %v295 = vld [vmem:[%s294] ss:$2 sm:$0xf]
        %s296 = scalar_lea.vmem %s204, 57
        %v297 = vld [vmem:[%s296] ss:$2 sm:$0xf]
        %v298 = vmul.f32 %v267, %v227
        %v299 = vmul.f32 %v269, %v227
        %v300 = vmul.f32 %v271, %v227
        %v301 = vmul.f32 %v273, %v227
        %v302 = vmul.f32 %v275, %v227
        %v303 = vmul.f32 %v277, %v227
        %v304 = vmul.f32 %v279, %v227
        %v305 = vmul.f32 %v281, %v227
        %v306 = vadd.f32 %v298, %v241
        %v307 = vadd.f32 %v299, %v241
        %v308 = vadd.f32 %v300, %v241
        %v309 = vadd.f32 %v301, %v241
        %v310 = vadd.f32 %v302, %v241
        %v311 = vadd.f32 %v303, %v241
        %v312 = vadd.f32 %v304, %v241
        %v313 = vadd.f32 %v305, %v241
        %v314 = vmax.f32 %v306, 0.0
        %v315 = vmax.f32 %v307, 0.0
        %v316 = vmax.f32 %v308, 0.0
        %v317 = vmax.f32 %v309, 0.0
        %v318 = vmax.f32 %v310, 0.0
        %v319 = vmax.f32 %v311, 0.0
        %v320 = vmax.f32 %v312, 0.0
        %v321 = vmax.f32 %v313, 0.0
        %v322 = vmul.f32 %v283, %v227
        %v323 = vmul.f32 %v285, %v227
        %v324 = vmul.f32 %v287, %v227
        %v325 = vmul.f32 %v289, %v227
        %v326 = vmul.f32 %v291, %v227
        %v327 = vmul.f32 %v293, %v227
        %v328 = vmul.f32 %v295, %v227
        %v329 = vmul.f32 %v297, %v227
        %v330 = vadd.f32 %v322, %v241
        %v331 = vadd.f32 %v323, %v241
        %v332 = vadd.f32 %v324, %v241
        %v333 = vadd.f32 %v325, %v241
        %v334 = vadd.f32 %v326, %v241
        %v335 = vadd.f32 %v327, %v241
        %v336 = vadd.f32 %v328, %v241
        %v337 = vadd.f32 %v329, %v241
        %v338 = vmax.f32 %v330, 0.0
        %v339 = vmax.f32 %v331, 0.0
        %v340 = vmax.f32 %v332, 0.0
        %v341 = vmax.f32 %v333, 0.0
        %v342 = vmax.f32 %v334, 0.0
        %v343 = vmax.f32 %v335, 0.0
        %v344 = vmax.f32 %v336, 0.0
        %v345 = vmax.f32 %v337, 0.0
        %v346 = vmax.f32 %v314, %v338
        %v347 = vmax.f32 %v315, %v339
        %v348 = vmax.f32 %v316, %v340
        %v349 = vmax.f32 %v317, %v341
        %v350 = vmax.f32 %v318, %v342
        %v351 = vmax.f32 %v319, %v343
        %v352 = vmax.f32 %v320, %v344
        %v353 = vmax.f32 %v321, %v345
        %vm354 = vcmask 1043456
        %v355 = vsel %vm354, %v346, -inf
        %v356 = vsel %vm354, %v347, -inf
        %v357 = vmax.f32 %v355, %v356
        %v358 = vsel %vm354, %v348, -inf
        %v359 = vsel %vm354, %v349, -inf
        %v360 = vmax.f32 %v358, %v359
        %v361 = vsel %vm354, %v350, -inf
        %v362 = vsel %vm354, %v351, -inf
        %v363 = vmax.f32 %v361, %v362
        %v364 = vsel %vm354, %v352, -inf
        %v365 = vsel %vm354, %v353, -inf
        %v366 = vmax.f32 %v364, %v365
        %367 = vst [vmem:[%s199] sm:$0xf] %v357
        %368 = vst [vmem:[%s199 + $0x4] sm:$0xf] %v360
        %369 = vst [vmem:[%s199 + $0x8] sm:$0xf] %v363
        %370 = vst [vmem:[%s199 + $0xc] sm:$0xf] %v366
        %s371 = smul.u32 8, %s19
        %p372 = scmp.lt.s32.totalorder %s371, 15
        %s373 = scalar_select %p372, %s371, 15
        %s374 = smul.addr %s373, 8
        %s375 = scalar_lea.vmem %s3, %s374
        %s376 = sand.u32 %s121, 1
        %s377 = scalar_lea.sflag [#allocation3], %s376
        %s378 = sand.u32 %s121, 1
        %s379 = smul.addr %s378, 16
        %s380 = scalar_lea.vmem [#allocation2], %s379
        // Predicated region
        $region33: #{contract_block.15} parent=31 // pred_check
          %p381 = pneg %p105
        $region34: #{contract_block.15} parent=31 // pred_check_branch
          %383 = sbr.rel (%p381) target = $region36
        $region35: #{contract_block.15} parent=31 // pred_region
          %s384 = smul.u32 8, %s19
        $region36: #{contract_block.15} parent=31 // pred_fallthru
          _
        // Predicated region
        $region37: #{contract_block.15} parent=31 // pred_check
          %p385 = pneg %p131
        $region38: #{contract_block.15} parent=31 // pred_check_branch
          %387 = sbr.rel (%p385) target = $region40
        $region39: #{contract_block.15} parent=31 // pred_region
          %s388 = smul.u32 4, %s19
          %s390 = ssub.s32 256, 256
          %391 = vsyncadd %s377, %s390
          %s392 = smul.addr %s388, 64
          %s393 = scalar_lea.hbm %s4, %s392
          %s394 = sshll.u32 %s380, 4
          %s395 = int_to_ptr.vmem [resolvable:$true] %s394
          %400 = dma.vmem_to_hbm [thread:$0]  %s395, 256, %s393, %s377, 64, 64, 4
        $region40: #{contract_block.15} parent=31 // pred_fallthru
          _
      $region32: #{contract_block.15} parent=5 // pred_fallthru
        _
      %p401 = scmp.le.s32.totalorder 2, %s14
      // Predicated region
      $region41: #{contract_block.15} parent=5 // pred_check
        %p402 = pneg %p401
      $region42: #{contract_block.15} parent=5 // pred_check_branch
        %404 = sbr.rel (%p402) target = $region44
      $region43: #{contract_block.15} parent=5 // pred_region
        %s405 = ssub.s32 %s14, 2
        // Predicated region
        $region45: #{contract_block.15} parent=43 // pred_check
          %p406 = pneg %p111
        $region46: #{contract_block.15} parent=43 // pred_check_branch
          %408 = sbr.rel (%p406) target = $region48
        $region47: #{contract_block.15} parent=43 // pred_region
          %s409 = smul.u32 8, %s20
          %p410 = scmp.lt.s32.totalorder %s409, 15
          %s411 = scalar_select %p410, %s409, 15
          %s412 = smul.addr %s411, 8
          %s413 = scalar_lea.vmem %s3, %s412
        $region48: #{contract_block.15} parent=43 // pred_fallthru
          _
        // Predicated region
        $region49: #{contract_block.15} parent=43 // pred_check
          %p414 = pneg %p137
        $region50: #{contract_block.15} parent=43 // pred_check_branch
          %416 = sbr.rel (%p414) target = $region52
        $region51: #{contract_block.15} parent=43 // pred_region
          %s417 = sand.u32 %s122, 1
          %s418 = scalar_lea.sflag [#allocation3], %s417
          %s419 = sand.u32 %s122, 1
          %s420 = smul.addr %s419, 16
          %s421 = scalar_lea.vmem [#allocation2], %s420
          %422 = dma.done %s418, 256
        $region52: #{contract_block.15} parent=43 // pred_fallthru
          _
      $region44: #{contract_block.15} parent=5 // pred_fallthru
        _
    $region6: #{contract_block.15} parent=1 // loop_footer
      %s18 = sadd.s32 1, %s14
    $region7: #{contract_block.15} parent=1 // loop_footer_branch
      %13 = sbr.rel target = $region3
    $region8: #{contract_block.15} parent=1 // loop_exit
      _
    %423 = vsyncpa [#allocation3], 1
    %s424 = scalar_lea.sflag [#allocation3], 1
    %425 = vsyncpa %s424, 1

</llo_original>
